<compile_context>
chip_gen: v5e
topology: v5e:2x2
jax: 0.10.0
libtpu: 0.0.40
codegen_flags: <defaults>
</compile_context>

<pallas_src>
import jax
import jax.numpy as jnp
from jax import lax
from jax.experimental import pallas as pl
from jax.experimental.pallas import tpu as pltpu

# ---- small config (structure of PointTransformer_8192point_2layer, scaled down)
B     = 2        # batch of point clouds
N     = 64       # points per cloud
C_IN  = 6        # point_dims (xyz + rgb)
G     = 8        # num_group
S     = 16       # group_size
H1    = 32       # encoder first_conv hidden   (real: 128)
H2    = 64       # encoder first_conv out      (real: 256)
H3    = 128      # encoder second_conv hidden  (real: 512) == 2 * H2
E     = 64       # encoder_dims                (real: 256)
D     = 32       # trans_dim                   (real: 384)
NH    = 4        # num_heads
HD    = D // NH
L     = 2        # depth
MLP_H = 4 * D    # transformer MLP hidden
PH    = 128      # pos_embed hidden
T     = G + 1    # tokens = cls + groups
LN_EPS = 1e-5


# =============================================================================
# Fused kernel: mini-PointNet group encoder + reduce_dim + pos_embed +
#               2 transformer blocks + final LayerNorm + cls/max pooling.
# grid=(B,)  -- one batch element per grid step ("parallel" -> megacore on v7x)
# =============================================================================
def point_transformer_kernel(
        nb_ref, ctr_ref,
        w1_ref, b1_ref, w2_ref, b2_ref, w3a_ref, w3b_ref, b3_ref,
        w4_ref, b4_ref, wr_ref, br_ref,
        cls_tok_ref, cls_pos_ref,
        pw1_ref, pb1_ref, pw2_ref, pb2_ref,
        ln1g_ref, ln1b_ref, qkvw_ref, pjw_ref, pjb_ref,
        ln2g_ref, ln2b_ref, fc1w_ref, fc1b_ref, fc2w_ref, fc2b_ref,
        fng_ref, fnb_ref,
        out_ref,
        xbuf, posbuf, qkvbuf, ctxbuf):
    f32 = jnp.float32
    bf16 = jnp.bfloat16

    def gelu(z):
        # TODO(synk): torch nn.GELU defaults to the exact erf form; tanh
        # approximation used here for guaranteed Mosaic lowering (|diff| ~ 1e-3).
        return 0.5 * z * (1.0 + jnp.tanh(0.7978845608028654 *
                                         (z + 0.044715 * z * z * z)))

    def layer_norm(z, g, b):
        mu = jnp.mean(z, axis=-1, keepdims=True)
        var = jnp.mean(jnp.square(z - mu), axis=-1, keepdims=True)
        return (z - mu) * lax.rsqrt(var + LN_EPS) * g + b

    # ------------- per-group mini-PointNet encoder (bf16 matmuls, f32 accum) --
    pts = nb_ref[0].astype(bf16)                                           # (G*S, 6)
    h = jnp.dot(pts, w1_ref[...], preferred_element_type=f32) + b1_ref[...]
    h = jnp.maximum(h, 0.0)
    h = jnp.dot(h.astype(bf16), w2_ref[...],
                preferred_element_type=f32) + b2_ref[...]                  # (G*S, H2)
    gmax = jnp.max(h.reshape(G, S, H2), axis=1)                            # (G, H2)
    # second_conv on concat([global, local]) -> split W3 (no concat needed)
    fa = jnp.dot(gmax.astype(bf16), w3a_ref[...], preferred_element_type=f32)
    fb = jnp.dot(h.astype(bf16), w3b_ref[...],
                 preferred_element_type=f32).reshape(G, S, H3)
    f = jnp.maximum(fa[:, None, :] + fb + b3_ref[...], 0.0)               # BN folded + ReLU
    f = jnp.dot(f.reshape(G * S, H3).astype(bf16), w4_ref[...],
                preferred_element_type=f32) + b4_ref[...]                  # (G*S, E)
    fg = jnp.max(f.reshape(G, S, E), axis=1)                               # (G, E)
    tok = jnp.dot(fg.astype(bf16), wr_ref[...],
                  preferred_element_type=f32) + br_ref[...]                # (G, D)

    # ------------- token sequence + positional embedding (cls prepended here) --
    xbuf[0:1, :] = cls_tok_ref[...]
    xbuf[1:T, :] = tok
    pe = jnp.dot(ctr_ref[0].astype(bf16), pw1_ref[...],
                 preferred_element_type=f32) + pb1_ref[...]
    pe = gelu(pe)
    pe = jnp.dot(pe.astype(bf16), pw2_ref[...],
                 preferred_element_type=f32) + pb2_ref[...]                # (G, D)
    posbuf[0:1, :] = cls_pos_ref[...]
    posbuf[1:T, :] = pe

    x = xbuf[...]                                                          # (T, D)
    pos = posbuf[...]                                                      # (T, D)
    scale = HD ** -0.5

    for l in range(L):                       # TransformerEncoder: x = block(x + pos)
        x = x + pos
        # ---- attention: fused QKV slab, heads split via scratch lane slices ----
        h1 = layer_norm(x, ln1g_ref[l:l + 1], ln1b_ref[l:l + 1])
        qkvbuf[...] = jnp.dot(h1.astype(bf16), qkvw_ref[l],
                              preferred_element_type=f32)                  # (T, 3D)
        for hh in range(NH):
            c = hh * HD
            qh = qkvbuf[:, c:c + HD].astype(bf16)                          # (T, HD)
            kh = qkvbuf[:, D + c:D + c + HD].astype(bf16)
            vh = qkvbuf[:, 2 * D + c:2 * D + c + HD].astype(bf16)
            att = lax.dot_general(qh, kh, (((1,), (1,)), ((), ())),
                                  preferred_element_type=f32) * scale      # (T, T)
            att = att - jnp.max(att, axis=-1, keepdims=True)
            att = jnp.exp(att)
            att = att * pl.reciprocal(jnp.sum(att, axis=-1, keepdims=True),
                                      approx=True)
            oh = jnp.dot(att.astype(bf16), vh, preferred_element_type=f32)  # (T, HD)
            ctxbuf[:, c:c + HD] = oh
        x = x + jnp.dot(ctxbuf[...].astype(bf16), pjw_ref[l],
                        preferred_element_type=f32) + pjb_ref[l:l + 1]
        # ---- MLP ----
        h2 = layer_norm(x, ln2g_ref[l:l + 1], ln2b_ref[l:l + 1])
        m = gelu(jnp.dot(h2.astype(bf16), fc1w_ref[l],
                         preferred_element_type=f32) + fc1b_ref[l:l + 1])
        m = jnp.dot(m.astype(bf16), fc2w_ref[l],
                    preferred_element_type=f32) + fc2b_ref[l:l + 1]
        x = x + m

    x = layer_norm(x, fng_ref[...], fnb_ref[...])                          # final LayerNorm
    # lane-dense single output: [ x[:,0] | x[:,1:].max(dim tokens) ]
    out_ref[0, 0:1, 0:D] = x[0:1, :]
    row = lax.broadcasted_iota(jnp.int32, (T, D), 0)
    masked = jnp.where(row == 0, -jnp.inf, x)
    out_ref[0, 0:1, D:2 * D] = jnp.max(masked, axis=0, keepdims=True)


# =============================================================================
# Glue: Group divider (FPS + KNN) -- data-dependent gather, plain JAX
# =============================================================================
def farthest_point_sample(xyz, n_samples):
    # xyz: (B, N, 3) -> indices (B, n_samples); starts at index 0 like pointnet2_ops.
    Bn, Nn, _ = xyz.shape
    idxs0 = jnp.zeros((Bn, n_samples), dtype=jnp.int32)
    dist0 = jnp.full((Bn, Nn), jnp.inf, dtype=xyz.dtype)

    def body(i, carry):
        idxs, dists = carry
        last = idxs[:, i - 1]
        last_pt = jnp.take_along_axis(
            xyz, jnp.broadcast_to(last[:, None, None], (Bn, 1, 3)), axis=1)
        d = jnp.sum(jnp.square(xyz - last_pt), axis=-1)
        dists = jnp.minimum(dists, d)
        nxt = jnp.argmax(dists, axis=-1).astype(jnp.int32)
        idxs = idxs.at[:, i].set(nxt)
        return idxs, dists

    idxs, _ = lax.fori_loop(1, n_samples, body, (idxs0, dist0))
    return idxs


def group_points(points, num_group, group_size):
    # points: (B, N, 6) -> neighborhood (B, G, S, 6) (xyz centered), centers (B, G, 3)
    xyz = points[..., :3]
    fps_idx = farthest_point_sample(xyz, num_group)                       # (B, G)
    center = jnp.take_along_axis(
        xyz, jnp.broadcast_to(fps_idx[..., None], (B, num_group, 3)), axis=1)
    d2 = jnp.sum(jnp.square(center[:, :, None, :] - xyz[:, None, :, :]), axis=-1)
    _, knn_idx = lax.top_k(-d2, group_size)                               # (B, G, S)
    pts_b = jnp.broadcast_to(points[:, None, :, :], (B, num_group, N, C_IN))
    idx_b = jnp.broadcast_to(knn_idx[..., None], (B, num_group, group_size, C_IN))
    nb = jnp.take_along_axis(pts_b, idx_b, axis=2)                        # (B, G, S, 6)
    nb_xyz = nb[..., :3] - center[:, :, None, :]
    nb = jnp.concatenate([nb_xyz, nb[..., 3:]], axis=-1)
    return nb, center


# =============================================================================
# Deterministic parameter init (synthetic); matmul weights stored in bf16
# =============================================================================
def init_params(key):
    keys = iter(jax.random.split(key, 64))

    def nrm(shape, scale=0.05):
        return (scale * jax.random.normal(next(keys), shape)).astype(jnp.float32)

    def bn_fold(w, b, cdim):   # eval-mode BatchNorm folded into the 1x1 conv (exact)
        gamma = 1.0 + nrm((cdim,), 0.05)
        beta = nrm((cdim,), 0.05)
        mean = nrm((cdim,), 0.05)
        var = 1.0 + jnp.abs(nrm((cdim,), 0.05))
        sc = gamma / jnp.sqrt(var + 1e-5)
        return w * sc[None, :], (b - mean) * sc + beta

    bf = lambda a: a.astype(jnp.bfloat16)

    p = {}
    # ----- Encoder (Conv1d k=1 == per-point linear) -----
    w1 = nrm((C_IN, H1)); b1 = nrm((H1,)); w1, b1 = bn_fold(w1, b1, H1)
    w2 = nrm((H1, H2));   b2 = nrm((H2,))
    w3 = nrm((2 * H2, H3)); b3 = nrm((H3,)); w3, b3 = bn_fold(w3, b3, H3)
    w4 = nrm((H3, E));    b4 = nrm((E,))
    wr = nrm((E, D));     br = nrm((D,))
    p.update(enc_w1=bf(w1), enc_b1=b1.reshape(1, H1),
             enc_w2=bf(w2), enc_b2=b2.reshape(1, H2),
             enc_w3a=bf(w3[:H2]), enc_w3b=bf(w3[H2:]), enc_b3=b3.reshape(1, 1, H3),
             enc_w4=bf(w4), enc_b4=b4.reshape(1, E),
             red_w=bf(wr), red_b=br.reshape(1, D))
    # ----- cls token / pos_embed -----
    p['cls_token'] = nrm((1, D), 0.02)
    p['cls_pos'] = nrm((1, D), 0.02)
    p['pos_w1'] = bf(nrm((3, PH))); p['pos_b1'] = nrm((PH,)).reshape(1, PH)
    p['pos_w2'] = bf(nrm((PH, D))); p['pos_b2'] = nrm((D,)).reshape(1, D)
    # ----- transformer blocks (stacked over depth); qkv_bias=False as in Point-BERT
    qw = nrm((L, D, D)); kw = nrm((L, D, D)); vw = nrm((L, D, D))
    p['qkv_w'] = bf(jnp.concatenate([qw, kw, vw], axis=-1))   # fused (L, D, 3*D)
    p['proj_w'] = bf(nrm((L, D, D)))
    p['proj_b'] = nrm((L, D))
    p['ln1_g'] = 1.0 + nrm((L, D), 0.02); p['ln1_b'] = nrm((L, D), 0.02)
    p['ln2_g'] = 1.0 + nrm((L, D), 0.02); p['ln2_b'] = nrm((L, D), 0.02)
    p['fc1_w'] = bf(nrm((L, D, MLP_H))); p['fc1_b'] = nrm((L, MLP_H))
    p['fc2_w'] = bf(nrm((L, MLP_H, D))); p['fc2_b'] = nrm((L, D))
    p['fn_g'] = (1.0 + nrm((D,), 0.02)).reshape(1, D)
    p['fn_b'] = nrm((D,), 0.02).reshape(1, D)
    return p


# =============================================================================
# Forward (PointEncoder.forward -> PointTransformer forward, use_max_pool=True)
# =============================================================================
def point_encoder_forward(points, p):
    assert T > 1  # masked token-max needs at least one group token
    # Group divider (FPS + KNN gather): plain-JAX glue (data-dependent gather).
    nb, center = group_points(points, G, S)                    # (B,G,S,6), (B,G,3)
    nb_flat = nb.reshape(B, G * S, C_IN)

    def full_spec(arr):
        shp = tuple(arr.shape)
        return pl.BlockSpec(shp, lambda b, _n=len(shp): (0,) * _n)

    weights = (p['enc_w1'], p['enc_b1'], p['enc_w2'], p['enc_b2'],
               p['enc_w3a'], p['enc_w3b'], p['enc_b3'], p['enc_w4'], p['enc_b4'],
               p['red_w'], p['red_b'],
               p['cls_token'], p['cls_pos'],
               p['pos_w1'], p['pos_b1'], p['pos_w2'], p['pos_b2'],
               p['ln1_g'], p['ln1_b'], p['qkv_w'], p['proj_w'], p['proj_b'],
               p['ln2_g'], p['ln2_b'], p['fc1_w'], p['fc1_b'], p['fc2_w'], p['fc2_b'],
               p['fn_g'], p['fn_b'])

    out = pl.pallas_call(
        point_transformer_kernel,
        out_shape=jax.ShapeDtypeStruct((B, 1, 2 * D), jnp.float32),
        grid=(B,),
        in_specs=[pl.BlockSpec((1, G * S, C_IN), lambda b: (b, 0, 0)),
                  pl.BlockSpec((1, G, 3), lambda b: (b, 0, 0))]
                 + [full_spec(w) for w in weights],
        out_specs=pl.BlockSpec((1, 1, 2 * D), lambda b: (b, 0, 0)),
        scratch_shapes=[pltpu.VMEM((T, D), jnp.float32),       # token buffer
                        pltpu.VMEM((T, D), jnp.float32),       # pos-embed buffer
                        pltpu.VMEM((T, 3 * D), jnp.float32),   # fused QKV
                        pltpu.VMEM((T, D), jnp.float32)],      # attention context
        compiler_params=pltpu.CompilerParams(
            dimension_semantics=("parallel",),                 # megacore on v7x
            vmem_limit_bytes=32 * 1024 * 1024),
    )(nb_flat, center, *weights)

    # hidden_size = trans_dim * 2 (use_max_pool=True); already [cls | max] packed.
    return out


if __name__ == "__main__":
    key = jax.random.PRNGKey(0)
    k_pts, k_par = jax.random.split(key)
    # synthetic point clouds (what PointCloudProcessor would produce from .npy files)
    point_clouds = jax.random.normal(k_pts, (B, N, C_IN), dtype=jnp.float32)
    params = init_params(k_par)

    out = point_encoder_forward(point_clouds, params)
    out = jax.block_until_ready(out)
    assert out.shape == (B, 1, 2 * D), out.shape
    assert bool(jnp.all(jnp.isfinite(out)))
    print("KERNEL_OK")
</pallas_src>

<mosaic_0001>
module attributes {stable_mosaic.version = 11 : i64} {
  func.func @point_transformer_kernel(%arg0: i32, %arg1: memref<1x128x6xf32, #tpu.memory_space<vmem>>, %arg2: memref<1x8x3xf32, #tpu.memory_space<vmem>>, %arg3: memref<6x32xbf16, #tpu.memory_space<vmem>>, %arg4: memref<1x32xf32, #tpu.memory_space<vmem>>, %arg5: memref<32x64xbf16, #tpu.memory_space<vmem>>, %arg6: memref<1x64xf32, #tpu.memory_space<vmem>>, %arg7: memref<64x128xbf16, #tpu.memory_space<vmem>>, %arg8: memref<64x128xbf16, #tpu.memory_space<vmem>>, %arg9: memref<1x1x128xf32, #tpu.memory_space<vmem>>, %arg10: memref<128x64xbf16, #tpu.memory_space<vmem>>, %arg11: memref<1x64xf32, #tpu.memory_space<vmem>>, %arg12: memref<64x32xbf16, #tpu.memory_space<vmem>>, %arg13: memref<1x32xf32, #tpu.memory_space<vmem>>, %arg14: memref<1x32xf32, #tpu.memory_space<vmem>>, %arg15: memref<1x32xf32, #tpu.memory_space<vmem>>, %arg16: memref<3x128xbf16, #tpu.memory_space<vmem>>, %arg17: memref<1x128xf32, #tpu.memory_space<vmem>>, %arg18: memref<128x32xbf16, #tpu.memory_space<vmem>>, %arg19: memref<1x32xf32, #tpu.memory_space<vmem>>, %arg20: memref<2x32xf32, #tpu.memory_space<vmem>>, %arg21: memref<2x32xf32, #tpu.memory_space<vmem>>, %arg22: memref<2x32x96xbf16, #tpu.memory_space<vmem>>, %arg23: memref<2x32x32xbf16, #tpu.memory_space<vmem>>, %arg24: memref<2x32xf32, #tpu.memory_space<vmem>>, %arg25: memref<2x32xf32, #tpu.memory_space<vmem>>, %arg26: memref<2x32xf32, #tpu.memory_space<vmem>>, %arg27: memref<2x32x128xbf16, #tpu.memory_space<vmem>>, %arg28: memref<2x128xf32, #tpu.memory_space<vmem>>, %arg29: memref<2x128x32xbf16, #tpu.memory_space<vmem>>, %arg30: memref<2x32xf32, #tpu.memory_space<vmem>>, %arg31: memref<1x32xf32, #tpu.memory_space<vmem>>, %arg32: memref<1x32xf32, #tpu.memory_space<vmem>>, %arg33: memref<1x1x64xf32, #tpu.memory_space<vmem>>, %arg34: memref<9x32xf32, #tpu.memory_space<vmem>>, %arg35: memref<9x32xf32, #tpu.memory_space<vmem>>, %arg36: memref<9x96xf32, #tpu.memory_space<vmem>>, %arg37: memref<9x32xf32, #tpu.memory_space<vmem>>) attributes {dimension_semantics = [#tpu.dimension_semantics<parallel>], iteration_bounds = array<i64: 2>, scalar_prefetch = 0 : i64, scratch_operands = 4 : i64, tpu.core_type = #tpu.core_type<tc>, window_params = [{transform_indices = @transform_0, window_bounds = array<i64: 1, 128, 6>}, {transform_indices = @transform_1, window_bounds = array<i64: 1, 8, 3>}, {pipeline_mode = #tpu.pipeline_mode<synchronous>, transform_indices = @transform_2, window_bounds = array<i64: 6, 32>}, {pipeline_mode = #tpu.pipeline_mode<synchronous>, transform_indices = @transform_3, window_bounds = array<i64: 1, 32>}, {pipeline_mode = #tpu.pipeline_mode<synchronous>, transform_indices = @transform_4, window_bounds = array<i64: 32, 64>}, {pipeline_mode = #tpu.pipeline_mode<synchronous>, transform_indices = @transform_5, window_bounds = array<i64: 1, 64>}, {pipeline_mode = #tpu.pipeline_mode<synchronous>, transform_indices = @transform_6, window_bounds = array<i64: 64, 128>}, {pipeline_mode = #tpu.pipeline_mode<synchronous>, transform_indices = @transform_7, window_bounds = array<i64: 64, 128>}, {pipeline_mode = #tpu.pipeline_mode<synchronous>, transform_indices = @transform_8, window_bounds = array<i64: 1, 1, 128>}, {pipeline_mode = #tpu.pipeline_mode<synchronous>, transform_indices = @transform_9, window_bounds = array<i64: 128, 64>}, {pipeline_mode = #tpu.pipeline_mode<synchronous>, transform_indices = @transform_10, window_bounds = array<i64: 1, 64>}, {pipeline_mode = #tpu.pipeline_mode<synchronous>, transform_indices = @transform_11, window_bounds = array<i64: 64, 32>}, {pipeline_mode = #tpu.pipeline_mode<synchronous>, transform_indices = @transform_12, window_bounds = array<i64: 1, 32>}, {pipeline_mode = #tpu.pipeline_mode<synchronous>, transform_indices = @transform_13, window_bounds = array<i64: 1, 32>}, {pipeline_mode = #tpu.pipeline_mode<synchronous>, transform_indices = @transform_14, window_bounds = array<i64: 1, 32>}, {pipeline_mode = #tpu.pipeline_mode<synchronous>, transform_indices = @transform_15, window_bounds = array<i64: 3, 128>}, {pipeline_mode = #tpu.pipeline_mode<synchronous>, transform_indices = @transform_16, window_bounds = array<i64: 1, 128>}, {pipeline_mode = #tpu.pipeline_mode<synchronous>, transform_indices = @transform_17, window_bounds = array<i64: 128, 32>}, {pipeline_mode = #tpu.pipeline_mode<synchronous>, transform_indices = @transform_18, window_bounds = array<i64: 1, 32>}, {pipeline_mode = #tpu.pipeline_mode<synchronous>, transform_indices = @transform_19, window_bounds = array<i64: 2, 32>}, {pipeline_mode = #tpu.pipeline_mode<synchronous>, transform_indices = @transform_20, window_bounds = array<i64: 2, 32>}, {pipeline_mode = #tpu.pipeline_mode<synchronous>, transform_indices = @transform_21, window_bounds = array<i64: 2, 32, 96>}, {pipeline_mode = #tpu.pipeline_mode<synchronous>, transform_indices = @transform_22, window_bounds = array<i64: 2, 32, 32>}, {pipeline_mode = #tpu.pipeline_mode<synchronous>, transform_indices = @transform_23, window_bounds = array<i64: 2, 32>}, {pipeline_mode = #tpu.pipeline_mode<synchronous>, transform_indices = @transform_24, window_bounds = array<i64: 2, 32>}, {pipeline_mode = #tpu.pipeline_mode<synchronous>, transform_indices = @transform_25, window_bounds = array<i64: 2, 32>}, {pipeline_mode = #tpu.pipeline_mode<synchronous>, transform_indices = @transform_26, window_bounds = array<i64: 2, 32, 128>}, {pipeline_mode = #tpu.pipeline_mode<synchronous>, transform_indices = @transform_27, window_bounds = array<i64: 2, 128>}, {pipeline_mode = #tpu.pipeline_mode<synchronous>, transform_indices = @transform_28, window_bounds = array<i64: 2, 128, 32>}, {pipeline_mode = #tpu.pipeline_mode<synchronous>, transform_indices = @transform_29, window_bounds = array<i64: 2, 32>}, {pipeline_mode = #tpu.pipeline_mode<synchronous>, transform_indices = @transform_30, window_bounds = array<i64: 1, 32>}, {pipeline_mode = #tpu.pipeline_mode<synchronous>, transform_indices = @transform_31, window_bounds = array<i64: 1, 32>}, {transform_indices = @transform_32, window_bounds = array<i64: 1, 1, 64>}]} {
    %c0 = arith.constant 0 : index
    %c0_0 = arith.constant 0 : index
    %c0_1 = arith.constant 0 : index
    %0 = vector.load %arg1[%c0, %c0_0, %c0_1] : memref<1x128x6xf32, #tpu.memory_space<vmem>>, vector<1x128x6xf32>
    %1 = vector.shape_cast %0 : vector<1x128x6xf32> to vector<128x6xf32>
    %2 = arith.truncf %1 : vector<128x6xf32> to vector<128x6xbf16>
    %c0_2 = arith.constant 0 : index
    %c0_3 = arith.constant 0 : index
    %3 = vector.load %arg3[%c0_2, %c0_3] : memref<6x32xbf16, #tpu.memory_space<vmem>>, vector<6x32xbf16>
    %cst = arith.constant dense<0.000000e+00> : vector<128x32xf32>
    %4 = tpu.matmul %2, %3, %cst {dimension_numbers = #tpu.dot_dimension_numbers<[1], [0], [0], [1], [0, 0, 1, 1], [], []>} : vector<128x6xbf16>, vector<6x32xbf16>, vector<128x32xf32> -> vector<128x32xf32>
    %c0_4 = arith.constant 0 : index
    %c0_5 = arith.constant 0 : index
    %5 = vector.load %arg4[%c0_4, %c0_5] : memref<1x32xf32, #tpu.memory_space<vmem>>, vector<1x32xf32>
    %6 = vector.broadcast %5 : vector<1x32xf32> to vector<128x32xf32>
    %7 = arith.addf %4, %6 : vector<128x32xf32>
    %cst_6 = arith.constant 0.000000e+00 : f32
    %8 = vector.broadcast %cst_6 : f32 to vector<128x32xf32>
    %9 = arith.maximumf %7, %8 : vector<128x32xf32>
    %10 = arith.truncf %9 : vector<128x32xf32> to vector<128x32xbf16>
    %c0_7 = arith.constant 0 : index
    %c0_8 = arith.constant 0 : index
    %11 = vector.load %arg5[%c0_7, %c0_8] : memref<32x64xbf16, #tpu.memory_space<vmem>>, vector<32x64xbf16>
    %cst_9 = arith.constant dense<0.000000e+00> : vector<128x64xf32>
    %12 = tpu.matmul %10, %11, %cst_9 {dimension_numbers = #tpu.dot_dimension_numbers<[1], [0], [0], [1], [0, 0, 1, 1], [], []>} : vector<128x32xbf16>, vector<32x64xbf16>, vector<128x64xf32> -> vector<128x64xf32>
    %c0_10 = arith.constant 0 : index
    %c0_11 = arith.constant 0 : index
    %13 = vector.load %arg6[%c0_10, %c0_11] : memref<1x64xf32, #tpu.memory_space<vmem>>, vector<1x64xf32>
    %14 = vector.broadcast %13 : vector<1x64xf32> to vector<128x64xf32>
    %15 = arith.addf %12, %14 : vector<128x64xf32>
    %16 = vector.shape_cast %15 : vector<128x64xf32> to vector<8x16x64xf32>
    %cst_12 = arith.constant dense<0xFF800000> : vector<8x64xf32>
    %17 = vector.multi_reduction <maximumf>, %16, %cst_12 [1] : vector<8x16x64xf32> to vector<8x64xf32>
    %18 = arith.truncf %17 : vector<8x64xf32> to vector<8x64xbf16>
    %c0_13 = arith.constant 0 : index
    %c0_14 = arith.constant 0 : index
    %19 = vector.load %arg7[%c0_13, %c0_14] : memref<64x128xbf16, #tpu.memory_space<vmem>>, vector<64x128xbf16>
    %cst_15 = arith.constant dense<0.000000e+00> : vector<8x128xf32>
    %20 = tpu.matmul %18, %19, %cst_15 {dimension_numbers = #tpu.dot_dimension_numbers<[1], [0], [0], [1], [0, 0, 1, 1], [], []>} : vector<8x64xbf16>, vector<64x128xbf16>, vector<8x128xf32> -> vector<8x128xf32>
    %21 = arith.truncf %15 : vector<128x64xf32> to vector<128x64xbf16>
    %c0_16 = arith.constant 0 : index
    %c0_17 = arith.constant 0 : index
    %22 = vector.load %arg8[%c0_16, %c0_17] : memref<64x128xbf16, #tpu.memory_space<vmem>>, vector<64x128xbf16>
    %cst_18 = arith.constant dense<0.000000e+00> : vector<128x128xf32>
    %23 = tpu.matmul %21, %22, %cst_18 {dimension_numbers = #tpu.dot_dimension_numbers<[1], [0], [0], [1], [0, 0, 1, 1], [], []>} : vector<128x64xbf16>, vector<64x128xbf16>, vector<128x128xf32> -> vector<128x128xf32>
    %24 = vector.shape_cast %23 : vector<128x128xf32> to vector<8x16x128xf32>
    %25 = vector.shape_cast %20 : vector<8x128xf32> to vector<8x1x128xf32>
    %26 = vector.broadcast %25 : vector<8x1x128xf32> to vector<8x16x128xf32>
    %27 = arith.addf %26, %24 : vector<8x16x128xf32>
    %c0_19 = arith.constant 0 : index
    %c0_20 = arith.constant 0 : index
    %c0_21 = arith.constant 0 : index
    %28 = vector.load %arg9[%c0_19, %c0_20, %c0_21] : memref<1x1x128xf32, #tpu.memory_space<vmem>>, vector<1x1x128xf32>
    %29 = vector.broadcast %28 : vector<1x1x128xf32> to vector<8x16x128xf32>
    %30 = arith.addf %27, %29 : vector<8x16x128xf32>
    %cst_22 = arith.constant 0.000000e+00 : f32
    %31 = vector.broadcast %cst_22 : f32 to vector<8x16x128xf32>
    %32 = arith.maximumf %30, %31 : vector<8x16x128xf32>
    %33 = vector.shape_cast %32 : vector<8x16x128xf32> to vector<128x128xf32>
    %34 = arith.truncf %33 : vector<128x128xf32> to vector<128x128xbf16>
    %c0_23 = arith.constant 0 : index
    %c0_24 = arith.constant 0 : index
    %35 = vector.load %arg10[%c0_23, %c0_24] : memref<128x64xbf16, #tpu.memory_space<vmem>>, vector<128x64xbf16>
    %cst_25 = arith.constant dense<0.000000e+00> : vector<128x64xf32>
    %36 = tpu.matmul %34, %35, %cst_25 {dimension_numbers = #tpu.dot_dimension_numbers<[1], [0], [0], [1], [0, 0, 1, 1], [], []>} : vector<128x128xbf16>, vector<128x64xbf16>, vector<128x64xf32> -> vector<128x64xf32>
    %c0_26 = arith.constant 0 : index
    %c0_27 = arith.constant 0 : index
    %37 = vector.load %arg11[%c0_26, %c0_27] : memref<1x64xf32, #tpu.memory_space<vmem>>, vector<1x64xf32>
    %38 = vector.broadcast %37 : vector<1x64xf32> to vector<128x64xf32>
    %39 = arith.addf %36, %38 : vector<128x64xf32>
    %40 = vector.shape_cast %39 : vector<128x64xf32> to vector<8x16x64xf32>
    %cst_28 = arith.constant dense<0xFF800000> : vector<8x64xf32>
    %41 = vector.multi_reduction <maximumf>, %40, %cst_28 [1] : vector<8x16x64xf32> to vector<8x64xf32>
    %42 = arith.truncf %41 : vector<8x64xf32> to vector<8x64xbf16>
    %c0_29 = arith.constant 0 : index
    %c0_30 = arith.constant 0 : index
    %43 = vector.load %arg12[%c0_29, %c0_30] : memref<64x32xbf16, #tpu.memory_space<vmem>>, vector<64x32xbf16>
    %cst_31 = arith.constant dense<0.000000e+00> : vector<8x32xf32>
    %44 = tpu.matmul %42, %43, %cst_31 {dimension_numbers = #tpu.dot_dimension_numbers<[1], [0], [0], [1], [0, 0, 1, 1], [], []>} : vector<8x64xbf16>, vector<64x32xbf16>, vector<8x32xf32> -> vector<8x32xf32>
    %c0_32 = arith.constant 0 : index
    %c0_33 = arith.constant 0 : index
    %45 = vector.load %arg13[%c0_32, %c0_33] : memref<1x32xf32, #tpu.memory_space<vmem>>, vector<1x32xf32>
    %46 = vector.broadcast %45 : vector<1x32xf32> to vector<8x32xf32>
    %47 = arith.addf %44, %46 : vector<8x32xf32>
    %c0_34 = arith.constant 0 : index
    %c0_35 = arith.constant 0 : index
    %48 = vector.load %arg14[%c0_34, %c0_35] : memref<1x32xf32, #tpu.memory_space<vmem>>, vector<1x32xf32>
    %c0_36 = arith.constant 0 : index
    %c0_37 = arith.constant 0 : index
    %49 = vector.load %arg34[%c0_36, %c0_37] : memref<9x32xf32, #tpu.memory_space<vmem>>, vector<1x32xf32>
    tpu.vector_store %arg34[%c0_36, %c0_37], %48 {strides = array<i32>} : memref<9x32xf32, #tpu.memory_space<vmem>>, vector<1x32xf32>,
    %c1 = arith.constant 1 : index
    %c0_38 = arith.constant 0 : index
    %50 = vector.load %arg34[%c1, %c0_38] : memref<9x32xf32, #tpu.memory_space<vmem>>, vector<8x32xf32>
    tpu.vector_store %arg34[%c1, %c0_38], %47 {strides = array<i32>} : memref<9x32xf32, #tpu.memory_space<vmem>>, vector<8x32xf32>,
    %c0_39 = arith.constant 0 : index
    %c0_40 = arith.constant 0 : index
    %c0_41 = arith.constant 0 : index
    %51 = vector.load %arg2[%c0_39, %c0_40, %c0_41] : memref<1x8x3xf32, #tpu.memory_space<vmem>>, vector<1x8x3xf32>
    %52 = vector.shape_cast %51 : vector<1x8x3xf32> to vector<8x3xf32>
    %53 = arith.truncf %52 : vector<8x3xf32> to vector<8x3xbf16>
    %c0_42 = arith.constant 0 : index
    %c0_43 = arith.constant 0 : index
    %54 = vector.load %arg16[%c0_42, %c0_43] : memref<3x128xbf16, #tpu.memory_space<vmem>>, vector<3x128xbf16>
    %cst_44 = arith.constant dense<0.000000e+00> : vector<8x128xf32>
    %55 = tpu.matmul %53, %54, %cst_44 {dimension_numbers = #tpu.dot_dimension_numbers<[1], [0], [0], [1], [0, 0, 1, 1], [], []>} : vector<8x3xbf16>, vector<3x128xbf16>, vector<8x128xf32> -> vector<8x128xf32>
    %c0_45 = arith.constant 0 : index
    %c0_46 = arith.constant 0 : index
    %56 = vector.load %arg17[%c0_45, %c0_46] : memref<1x128xf32, #tpu.memory_space<vmem>>, vector<1x128xf32>
    %57 = vector.broadcast %56 : vector<1x128xf32> to vector<8x128xf32>
    %58 = arith.addf %55, %57 : vector<8x128xf32>
    %cst_47 = arith.constant 5.000000e-01 : f32
    %59 = vector.broadcast %cst_47 : f32 to vector<8x128xf32>
    %60 = arith.mulf %59, %58 : vector<8x128xf32>
    %cst_48 = arith.constant 4.471500e-02 : f32
    %61 = vector.broadcast %cst_48 : f32 to vector<8x128xf32>
    %62 = arith.mulf %61, %58 : vector<8x128xf32>
    %63 = arith.mulf %62, %58 : vector<8x128xf32>
    %64 = arith.mulf %63, %58 : vector<8x128xf32>
    %65 = arith.addf %58, %64 : vector<8x128xf32>
    %cst_49 = arith.constant 0.797884583 : f32
    %66 = vector.broadcast %cst_49 : f32 to vector<8x128xf32>
    %67 = arith.mulf %66, %65 : vector<8x128xf32>
    %68 = math.tanh %67 : vector<8x128xf32>
    %cst_50 = arith.constant 1.000000e+00 : f32
    %69 = vector.broadcast %cst_50 : f32 to vector<8x128xf32>
    %70 = arith.addf %69, %68 : vector<8x128xf32>
    %71 = arith.mulf %60, %70 : vector<8x128xf32>
    %72 = arith.truncf %71 : vector<8x128xf32> to vector<8x128xbf16>
    %c0_51 = arith.constant 0 : index
    %c0_52 = arith.constant 0 : index
    %73 = vector.load %arg18[%c0_51, %c0_52] : memref<128x32xbf16, #tpu.memory_space<vmem>>, vector<128x32xbf16>
    %cst_53 = arith.constant dense<0.000000e+00> : vector<8x32xf32>
    %74 = tpu.matmul %72, %73, %cst_53 {dimension_numbers = #tpu.dot_dimension_numbers<[1], [0], [0], [1], [0, 0, 1, 1], [], []>} : vector<8x128xbf16>, vector<128x32xbf16>, vector<8x32xf32> -> vector<8x32xf32>
    %c0_54 = arith.constant 0 : index
    %c0_55 = arith.constant 0 : index
    %75 = vector.load %arg19[%c0_54, %c0_55] : memref<1x32xf32, #tpu.memory_space<vmem>>, vector<1x32xf32>
    %76 = vector.broadcast %75 : vector<1x32xf32> to vector<8x32xf32>
    %77 = arith.addf %74, %76 : vector<8x32xf32>
    %c0_56 = arith.constant 0 : index
    %c0_57 = arith.constant 0 : index
    %78 = vector.load %arg15[%c0_56, %c0_57] : memref<1x32xf32, #tpu.memory_space<vmem>>, vector<1x32xf32>
    %c0_58 = arith.constant 0 : index
    %c0_59 = arith.constant 0 : index
    %79 = vector.load %arg35[%c0_58, %c0_59] : memref<9x32xf32, #tpu.memory_space<vmem>>, vector<1x32xf32>
    tpu.vector_store %arg35[%c0_58, %c0_59], %78 {strides = array<i32>} : memref<9x32xf32, #tpu.memory_space<vmem>>, vector<1x32xf32>,
    %c1_60 = arith.constant 1 : index
    %c0_61 = arith.constant 0 : index
    %80 = vector.load %arg35[%c1_60, %c0_61] : memref<9x32xf32, #tpu.memory_space<vmem>>, vector<8x32xf32>
    tpu.vector_store %arg35[%c1_60, %c0_61], %77 {strides = array<i32>} : memref<9x32xf32, #tpu.memory_space<vmem>>, vector<8x32xf32>,
    %c0_62 = arith.constant 0 : index
    %c0_63 = arith.constant 0 : index
    %81 = vector.load %arg34[%c0_62, %c0_63] : memref<9x32xf32, #tpu.memory_space<vmem>>, vector<9x32xf32>
    %c0_64 = arith.constant 0 : index
    %c0_65 = arith.constant 0 : index
    %82 = vector.load %arg35[%c0_64, %c0_65] : memref<9x32xf32, #tpu.memory_space<vmem>>, vector<9x32xf32>
    %83 = arith.addf %81, %82 : vector<9x32xf32>
    %c0_66 = arith.constant 0 : index
    %c0_67 = arith.constant 0 : index
    %84 = vector.load %arg20[%c0_66, %c0_67] : memref<2x32xf32, #tpu.memory_space<vmem>>, vector<1x32xf32>
    %c0_68 = arith.constant 0 : index
    %c0_69 = arith.constant 0 : index
    %85 = vector.load %arg21[%c0_68, %c0_69] : memref<2x32xf32, #tpu.memory_space<vmem>>, vector<1x32xf32>
    %cst_70 = arith.constant dense<0.000000e+00> : vector<9xf32>
    %86 = vector.multi_reduction <add>, %83, %cst_70 [1] : vector<9x32xf32> to vector<9xf32>
    %87 = vector.shape_cast %86 : vector<9xf32> to vector<9x1xf32>
    %cst_71 = arith.constant 3.200000e+01 : f32
    %88 = vector.broadcast %cst_71 : f32 to vector<9x1xf32>
    %89 = arith.divf %87, %88 : vector<9x1xf32>
    %90 = vector.broadcast %89 : vector<9x1xf32> to vector<9x32xf32>
    %91 = arith.subf %83, %90 : vector<9x32xf32>
    %92 = arith.mulf %91, %91 : vector<9x32xf32>
    %cst_72 = arith.constant dense<0.000000e+00> : vector<9xf32>
    %93 = vector.multi_reduction <add>, %92, %cst_72 [1] : vector<9x32xf32> to vector<9xf32>
    %94 = vector.shape_cast %93 : vector<9xf32> to vector<9x1xf32>
    %cst_73 = arith.constant 3.200000e+01 : f32
    %95 = vector.broadcast %cst_73 : f32 to vector<9x1xf32>
    %96 = arith.divf %94, %95 : vector<9x1xf32>
    %97 = vector.broadcast %89 : vector<9x1xf32> to vector<9x32xf32>
    %98 = arith.subf %83, %97 : vector<9x32xf32>
    %cst_74 = arith.constant 9.99999974E-6 : f32
    %99 = vector.broadcast %cst_74 : f32 to vector<9x1xf32>
    %100 = arith.addf %96, %99 : vector<9x1xf32>
    %101 = math.rsqrt %100 : vector<9x1xf32>
    %102 = vector.broadcast %101 : vector<9x1xf32> to vector<9x32xf32>
    %103 = arith.mulf %98, %102 : vector<9x32xf32>
    %104 = vector.broadcast %84 : vector<1x32xf32> to vector<9x32xf32>
    %105 = arith.mulf %103, %104 : vector<9x32xf32>
    %106 = vector.broadcast %85 : vector<1x32xf32> to vector<9x32xf32>
    %107 = arith.addf %105, %106 : vector<9x32xf32>
    %108 = arith.truncf %107 : vector<9x32xf32> to vector<9x32xbf16>
    %c0_75 = arith.constant 0 : index
    %c0_76 = arith.constant 0 : index
    %c0_77 = arith.constant 0 : index
    %109 = vector.load %arg22[%c0_75, %c0_76, %c0_77] : memref<2x32x96xbf16, #tpu.memory_space<vmem>>, vector<1x32x96xbf16>
    %110 = vector.shape_cast %109 : vector<1x32x96xbf16> to vector<32x96xbf16>
    %cst_78 = arith.constant dense<0.000000e+00> : vector<9x96xf32>
    %111 = tpu.matmul %108, %110, %cst_78 {dimension_numbers = #tpu.dot_dimension_numbers<[1], [0], [0], [1], [0, 0, 1, 1], [], []>} : vector<9x32xbf16>, vector<32x96xbf16>, vector<9x96xf32> -> vector<9x96xf32>
    %c0_79 = arith.constant 0 : index
    %c0_80 = arith.constant 0 : index
    %112 = vector.load %arg36[%c0_79, %c0_80] : memref<9x96xf32, #tpu.memory_space<vmem>>, vector<9x96xf32>
    tpu.vector_store %arg36[%c0_79, %c0_80], %111 {strides = array<i32>} : memref<9x96xf32, #tpu.memory_space<vmem>>, vector<9x96xf32>,
    %c0_81 = arith.constant 0 : index
    %c0_82 = arith.constant 0 : index
    %113 = vector.load %arg36[%c0_81, %c0_82] : memref<9x96xf32, #tpu.memory_space<vmem>>, vector<9x8xf32>
    %114 = arith.truncf %113 : vector<9x8xf32> to vector<9x8xbf16>
    %c0_83 = arith.constant 0 : index
    %c32 = arith.constant 32 : index
    %115 = vector.load %arg36[%c0_83, %c32] : memref<9x96xf32, #tpu.memory_space<vmem>>, vector<9x8xf32>
    %116 = arith.truncf %115 : vector<9x8xf32> to vector<9x8xbf16>
    %c0_84 = arith.constant 0 : index
    %c64 = arith.constant 64 : index
    %117 = vector.load %arg36[%c0_84, %c64] : memref<9x96xf32, #tpu.memory_space<vmem>>, vector<9x8xf32>
    %118 = arith.truncf %117 : vector<9x8xf32> to vector<9x8xbf16>
    %cst_85 = arith.constant dense<0.000000e+00> : vector<9x9xf32>
    %119 = tpu.matmul %114, %116, %cst_85 {dimension_numbers = #tpu.dot_dimension_numbers<[1], [1], [0], [0], [0, 0, 1, 0], [], []>} : vector<9x8xbf16>, vector<9x8xbf16>, vector<9x9xf32> -> vector<9x9xf32>
    %cst_86 = arith.constant 0.353553385 : f32
    %120 = vector.broadcast %cst_86 : f32 to vector<9x9xf32>
    %121 = arith.mulf %119, %120 : vector<9x9xf32>
    %cst_87 = arith.constant dense<0xFF800000> : vector<9xf32>
    %122 = vector.multi_reduction <maximumf>, %121, %cst_87 [1] : vector<9x9xf32> to vector<9xf32>
    %123 = vector.shape_cast %122 : vector<9xf32> to vector<9x1xf32>
    %124 = vector.broadcast %123 : vector<9x1xf32> to vector<9x9xf32>
    %125 = arith.subf %121, %124 : vector<9x9xf32>
    %126 = math.exp %125 : vector<9x9xf32>
    %cst_88 = arith.constant dense<0.000000e+00> : vector<9xf32>
    %127 = vector.multi_reduction <add>, %126, %cst_88 [1] : vector<9x9xf32> to vector<9xf32>
    %128 = vector.shape_cast %127 : vector<9xf32> to vector<9x1xf32>
    %129 = tpu.reciprocal %128 {approx = true} : vector<9x1xf32> -> vector<9x1xf32>
    %130 = vector.broadcast %129 : vector<9x1xf32> to vector<9x9xf32>
    %131 = arith.mulf %126, %130 : vector<9x9xf32>
    %132 = arith.truncf %131 : vector<9x9xf32> to vector<9x9xbf16>
    %cst_89 = arith.constant dense<0.000000e+00> : vector<9x8xf32>
    %133 = tpu.matmul %132, %118, %cst_89 {dimension_numbers = #tpu.dot_dimension_numbers<[1], [0], [0], [1], [0, 0, 1, 1], [], []>} : vector<9x9xbf16>, vector<9x8xbf16>, vector<9x8xf32> -> vector<9x8xf32>
    %c0_90 = arith.constant 0 : index
    %c0_91 = arith.constant 0 : index
    %134 = vector.load %arg37[%c0_90, %c0_91] : memref<9x32xf32, #tpu.memory_space<vmem>>, vector<9x8xf32>
    tpu.vector_store %arg37[%c0_90, %c0_91], %133 {strides = array<i32>} : memref<9x32xf32, #tpu.memory_space<vmem>>, vector<9x8xf32>,
    %c0_92 = arith.constant 0 : index
    %c8 = arith.constant 8 : index
    %135 = vector.load %arg36[%c0_92, %c8] : memref<9x96xf32, #tpu.memory_space<vmem>>, vector<9x8xf32>
    %136 = arith.truncf %135 : vector<9x8xf32> to vector<9x8xbf16>
    %c0_93 = arith.constant 0 : index
    %c40 = arith.constant 40 : index
    %137 = vector.load %arg36[%c0_93, %c40] : memref<9x96xf32, #tpu.memory_space<vmem>>, vector<9x8xf32>
    %138 = arith.truncf %137 : vector<9x8xf32> to vector<9x8xbf16>
    %c0_94 = arith.constant 0 : index
    %c72 = arith.constant 72 : index
    %139 = vector.load %arg36[%c0_94, %c72] : memref<9x96xf32, #tpu.memory_space<vmem>>, vector<9x8xf32>
    %140 = arith.truncf %139 : vector<9x8xf32> to vector<9x8xbf16>
    %cst_95 = arith.constant dense<0.000000e+00> : vector<9x9xf32>
    %141 = tpu.matmul %136, %138, %cst_95 {dimension_numbers = #tpu.dot_dimension_numbers<[1], [1], [0], [0], [0, 0, 1, 0], [], []>} : vector<9x8xbf16>, vector<9x8xbf16>, vector<9x9xf32> -> vector<9x9xf32>
    %cst_96 = arith.constant 0.353553385 : f32
    %142 = vector.broadcast %cst_96 : f32 to vector<9x9xf32>
    %143 = arith.mulf %141, %142 : vector<9x9xf32>
    %cst_97 = arith.constant dense<0xFF800000> : vector<9xf32>
    %144 = vector.multi_reduction <maximumf>, %143, %cst_97 [1] : vector<9x9xf32> to vector<9xf32>
    %145 = vector.shape_cast %144 : vector<9xf32> to vector<9x1xf32>
    %146 = vector.broadcast %145 : vector<9x1xf32> to vector<9x9xf32>
    %147 = arith.subf %143, %146 : vector<9x9xf32>
    %148 = math.exp %147 : vector<9x9xf32>
    %cst_98 = arith.constant dense<0.000000e+00> : vector<9xf32>
    %149 = vector.multi_reduction <add>, %148, %cst_98 [1] : vector<9x9xf32> to vector<9xf32>
    %150 = vector.shape_cast %149 : vector<9xf32> to vector<9x1xf32>
    %151 = tpu.reciprocal %150 {approx = true} : vector<9x1xf32> -> vector<9x1xf32>
    %152 = vector.broadcast %151 : vector<9x1xf32> to vector<9x9xf32>
    %153 = arith.mulf %148, %152 : vector<9x9xf32>
    %154 = arith.truncf %153 : vector<9x9xf32> to vector<9x9xbf16>
    %cst_99 = arith.constant dense<0.000000e+00> : vector<9x8xf32>
    %155 = tpu.matmul %154, %140, %cst_99 {dimension_numbers = #tpu.dot_dimension_numbers<[1], [0], [0], [1], [0, 0, 1, 1], [], []>} : vector<9x9xbf16>, vector<9x8xbf16>, vector<9x8xf32> -> vector<9x8xf32>
    %c0_100 = arith.constant 0 : index
    %c8_101 = arith.constant 8 : index
    %156 = vector.load %arg37[%c0_100, %c8_101] : memref<9x32xf32, #tpu.memory_space<vmem>>, vector<9x8xf32>
    tpu.vector_store %arg37[%c0_100, %c8_101], %155 {strides = array<i32>} : memref<9x32xf32, #tpu.memory_space<vmem>>, vector<9x8xf32>,
    %c0_102 = arith.constant 0 : index
    %c16 = arith.constant 16 : index
    %157 = vector.load %arg36[%c0_102, %c16] : memref<9x96xf32, #tpu.memory_space<vmem>>, vector<9x8xf32>
    %158 = arith.truncf %157 : vector<9x8xf32> to vector<9x8xbf16>
    %c0_103 = arith.constant 0 : index
    %c48 = arith.constant 48 : index
    %159 = vector.load %arg36[%c0_103, %c48] : memref<9x96xf32, #tpu.memory_space<vmem>>, vector<9x8xf32>
    %160 = arith.truncf %159 : vector<9x8xf32> to vector<9x8xbf16>
    %c0_104 = arith.constant 0 : index
    %c80 = arith.constant 80 : index
    %161 = vector.load %arg36[%c0_104, %c80] : memref<9x96xf32, #tpu.memory_space<vmem>>, vector<9x8xf32>
    %162 = arith.truncf %161 : vector<9x8xf32> to vector<9x8xbf16>
    %cst_105 = arith.constant dense<0.000000e+00> : vector<9x9xf32>
    %163 = tpu.matmul %158, %160, %cst_105 {dimension_numbers = #tpu.dot_dimension_numbers<[1], [1], [0], [0], [0, 0, 1, 0], [], []>} : vector<9x8xbf16>, vector<9x8xbf16>, vector<9x9xf32> -> vector<9x9xf32>
    %cst_106 = arith.constant 0.353553385 : f32
    %164 = vector.broadcast %cst_106 : f32 to vector<9x9xf32>
    %165 = arith.mulf %163, %164 : vector<9x9xf32>
    %cst_107 = arith.constant dense<0xFF800000> : vector<9xf32>
    %166 = vector.multi_reduction <maximumf>, %165, %cst_107 [1] : vector<9x9xf32> to vector<9xf32>
    %167 = vector.shape_cast %166 : vector<9xf32> to vector<9x1xf32>
    %168 = vector.broadcast %167 : vector<9x1xf32> to vector<9x9xf32>
    %169 = arith.subf %165, %168 : vector<9x9xf32>
    %170 = math.exp %169 : vector<9x9xf32>
    %cst_108 = arith.constant dense<0.000000e+00> : vector<9xf32>
    %171 = vector.multi_reduction <add>, %170, %cst_108 [1] : vector<9x9xf32> to vector<9xf32>
    %172 = vector.shape_cast %171 : vector<9xf32> to vector<9x1xf32>
    %173 = tpu.reciprocal %172 {approx = true} : vector<9x1xf32> -> vector<9x1xf32>
    %174 = vector.broadcast %173 : vector<9x1xf32> to vector<9x9xf32>
    %175 = arith.mulf %170, %174 : vector<9x9xf32>
    %176 = arith.truncf %175 : vector<9x9xf32> to vector<9x9xbf16>
    %cst_109 = arith.constant dense<0.000000e+00> : vector<9x8xf32>
    %177 = tpu.matmul %176, %162, %cst_109 {dimension_numbers = #tpu.dot_dimension_numbers<[1], [0], [0], [1], [0, 0, 1, 1], [], []>} : vector<9x9xbf16>, vector<9x8xbf16>, vector<9x8xf32> -> vector<9x8xf32>
    %c0_110 = arith.constant 0 : index
    %c16_111 = arith.constant 16 : index
    %178 = vector.load %arg37[%c0_110, %c16_111] : memref<9x32xf32, #tpu.memory_space<vmem>>, vector<9x8xf32>
    tpu.vector_store %arg37[%c0_110, %c16_111], %177 {strides = array<i32>} : memref<9x32xf32, #tpu.memory_space<vmem>>, vector<9x8xf32>,
    %c0_112 = arith.constant 0 : index
    %c24 = arith.constant 24 : index
    %179 = vector.load %arg36[%c0_112, %c24] : memref<9x96xf32, #tpu.memory_space<vmem>>, vector<9x8xf32>
    %180 = arith.truncf %179 : vector<9x8xf32> to vector<9x8xbf16>
    %c0_113 = arith.constant 0 : index
    %c56 = arith.constant 56 : index
    %181 = vector.load %arg36[%c0_113, %c56] : memref<9x96xf32, #tpu.memory_space<vmem>>, vector<9x8xf32>
    %182 = arith.truncf %181 : vector<9x8xf32> to vector<9x8xbf16>
    %c0_114 = arith.constant 0 : index
    %c88 = arith.constant 88 : index
    %183 = vector.load %arg36[%c0_114, %c88] : memref<9x96xf32, #tpu.memory_space<vmem>>, vector<9x8xf32>
    %184 = arith.truncf %183 : vector<9x8xf32> to vector<9x8xbf16>
    %cst_115 = arith.constant dense<0.000000e+00> : vector<9x9xf32>
    %185 = tpu.matmul %180, %182, %cst_115 {dimension_numbers = #tpu.dot_dimension_numbers<[1], [1], [0], [0], [0, 0, 1, 0], [], []>} : vector<9x8xbf16>, vector<9x8xbf16>, vector<9x9xf32> -> vector<9x9xf32>
    %cst_116 = arith.constant 0.353553385 : f32
    %186 = vector.broadcast %cst_116 : f32 to vector<9x9xf32>
    %187 = arith.mulf %185, %186 : vector<9x9xf32>
    %cst_117 = arith.constant dense<0xFF800000> : vector<9xf32>
    %188 = vector.multi_reduction <maximumf>, %187, %cst_117 [1] : vector<9x9xf32> to vector<9xf32>
    %189 = vector.shape_cast %188 : vector<9xf32> to vector<9x1xf32>
    %190 = vector.broadcast %189 : vector<9x1xf32> to vector<9x9xf32>
    %191 = arith.subf %187, %190 : vector<9x9xf32>
    %192 = math.exp %191 : vector<9x9xf32>
    %cst_118 = arith.constant dense<0.000000e+00> : vector<9xf32>
    %193 = vector.multi_reduction <add>, %192, %cst_118 [1] : vector<9x9xf32> to vector<9xf32>
    %194 = vector.shape_cast %193 : vector<9xf32> to vector<9x1xf32>
    %195 = tpu.reciprocal %194 {approx = true} : vector<9x1xf32> -> vector<9x1xf32>
    %196 = vector.broadcast %195 : vector<9x1xf32> to vector<9x9xf32>
    %197 = arith.mulf %192, %196 : vector<9x9xf32>
    %198 = arith.truncf %197 : vector<9x9xf32> to vector<9x9xbf16>
    %cst_119 = arith.constant dense<0.000000e+00> : vector<9x8xf32>
    %199 = tpu.matmul %198, %184, %cst_119 {dimension_numbers = #tpu.dot_dimension_numbers<[1], [0], [0], [1], [0, 0, 1, 1], [], []>} : vector<9x9xbf16>, vector<9x8xbf16>, vector<9x8xf32> -> vector<9x8xf32>
    %c0_120 = arith.constant 0 : index
    %c24_121 = arith.constant 24 : index
    %200 = vector.load %arg37[%c0_120, %c24_121] : memref<9x32xf32, #tpu.memory_space<vmem>>, vector<9x8xf32>
    tpu.vector_store %arg37[%c0_120, %c24_121], %199 {strides = array<i32>} : memref<9x32xf32, #tpu.memory_space<vmem>>, vector<9x8xf32>,
    %c0_122 = arith.constant 0 : index
    %c0_123 = arith.constant 0 : index
    %201 = vector.load %arg37[%c0_122, %c0_123] : memref<9x32xf32, #tpu.memory_space<vmem>>, vector<9x32xf32>
    %202 = arith.truncf %201 : vector<9x32xf32> to vector<9x32xbf16>
    %c0_124 = arith.constant 0 : index
    %c0_125 = arith.constant 0 : index
    %c0_126 = arith.constant 0 : index
    %203 = vector.load %arg23[%c0_124, %c0_125, %c0_126] : memref<2x32x32xbf16, #tpu.memory_space<vmem>>, vector<1x32x32xbf16>
    %204 = vector.shape_cast %203 : vector<1x32x32xbf16> to vector<32x32xbf16>
    %cst_127 = arith.constant dense<0.000000e+00> : vector<9x32xf32>
    %205 = tpu.matmul %202, %204, %cst_127 {dimension_numbers = #tpu.dot_dimension_numbers<[1], [0], [0], [1], [0, 0, 1, 1], [], []>} : vector<9x32xbf16>, vector<32x32xbf16>, vector<9x32xf32> -> vector<9x32xf32>
    %206 = arith.addf %83, %205 : vector<9x32xf32>
    %c0_128 = arith.constant 0 : index
    %c0_129 = arith.constant 0 : index
    %207 = vector.load %arg24[%c0_128, %c0_129] : memref<2x32xf32, #tpu.memory_space<vmem>>, vector<1x32xf32>
    %208 = vector.broadcast %207 : vector<1x32xf32> to vector<9x32xf32>
    %209 = arith.addf %206, %208 : vector<9x32xf32>
    %c0_130 = arith.constant 0 : index
    %c0_131 = arith.constant 0 : index
    %210 = vector.load %arg25[%c0_130, %c0_131] : memref<2x32xf32, #tpu.memory_space<vmem>>, vector<1x32xf32>
    %c0_132 = arith.constant 0 : index
    %c0_133 = arith.constant 0 : index
    %211 = vector.load %arg26[%c0_132, %c0_133] : memref<2x32xf32, #tpu.memory_space<vmem>>, vector<1x32xf32>
    %cst_134 = arith.constant dense<0.000000e+00> : vector<9xf32>
    %212 = vector.multi_reduction <add>, %209, %cst_134 [1] : vector<9x32xf32> to vector<9xf32>
    %213 = vector.shape_cast %212 : vector<9xf32> to vector<9x1xf32>
    %cst_135 = arith.constant 3.200000e+01 : f32
    %214 = vector.broadcast %cst_135 : f32 to vector<9x1xf32>
    %215 = arith.divf %213, %214 : vector<9x1xf32>
    %216 = vector.broadcast %215 : vector<9x1xf32> to vector<9x32xf32>
    %217 = arith.subf %209, %216 : vector<9x32xf32>
    %218 = arith.mulf %217, %217 : vector<9x32xf32>
    %cst_136 = arith.constant dense<0.000000e+00> : vector<9xf32>
    %219 = vector.multi_reduction <add>, %218, %cst_136 [1] : vector<9x32xf32> to vector<9xf32>
    %220 = vector.shape_cast %219 : vector<9xf32> to vector<9x1xf32>
    %cst_137 = arith.constant 3.200000e+01 : f32
    %221 = vector.broadcast %cst_137 : f32 to vector<9x1xf32>
    %222 = arith.divf %220, %221 : vector<9x1xf32>
    %223 = vector.broadcast %215 : vector<9x1xf32> to vector<9x32xf32>
    %224 = arith.subf %209, %223 : vector<9x32xf32>
    %cst_138 = arith.constant 9.99999974E-6 : f32
    %225 = vector.broadcast %cst_138 : f32 to vector<9x1xf32>
    %226 = arith.addf %222, %225 : vector<9x1xf32>
    %227 = math.rsqrt %226 : vector<9x1xf32>
    %228 = vector.broadcast %227 : vector<9x1xf32> to vector<9x32xf32>
    %229 = arith.mulf %224, %228 : vector<9x32xf32>
    %230 = vector.broadcast %210 : vector<1x32xf32> to vector<9x32xf32>
    %231 = arith.mulf %229, %230 : vector<9x32xf32>
    %232 = vector.broadcast %211 : vector<1x32xf32> to vector<9x32xf32>
    %233 = arith.addf %231, %232 : vector<9x32xf32>
    %234 = arith.truncf %233 : vector<9x32xf32> to vector<9x32xbf16>
    %c0_139 = arith.constant 0 : index
    %c0_140 = arith.constant 0 : index
    %c0_141 = arith.constant 0 : index
    %235 = vector.load %arg27[%c0_139, %c0_140, %c0_141] : memref<2x32x128xbf16, #tpu.memory_space<vmem>>, vector<1x32x128xbf16>
    %236 = vector.shape_cast %235 : vector<1x32x128xbf16> to vector<32x128xbf16>
    %cst_142 = arith.constant dense<0.000000e+00> : vector<9x128xf32>
    %237 = tpu.matmul %234, %236, %cst_142 {dimension_numbers = #tpu.dot_dimension_numbers<[1], [0], [0], [1], [0, 0, 1, 1], [], []>} : vector<9x32xbf16>, vector<32x128xbf16>, vector<9x128xf32> -> vector<9x128xf32>
    %c0_143 = arith.constant 0 : index
    %c0_144 = arith.constant 0 : index
    %238 = vector.load %arg28[%c0_143, %c0_144] : memref<2x128xf32, #tpu.memory_space<vmem>>, vector<1x128xf32>
    %239 = vector.broadcast %238 : vector<1x128xf32> to vector<9x128xf32>
    %240 = arith.addf %237, %239 : vector<9x128xf32>
    %cst_145 = arith.constant 5.000000e-01 : f32
    %241 = vector.broadcast %cst_145 : f32 to vector<9x128xf32>
    %242 = arith.mulf %241, %240 : vector<9x128xf32>
    %cst_146 = arith.constant 4.471500e-02 : f32
    %243 = vector.broadcast %cst_146 : f32 to vector<9x128xf32>
    %244 = arith.mulf %243, %240 : vector<9x128xf32>
    %245 = arith.mulf %244, %240 : vector<9x128xf32>
    %246 = arith.mulf %245, %240 : vector<9x128xf32>
    %247 = arith.addf %240, %246 : vector<9x128xf32>
    %cst_147 = arith.constant 0.797884583 : f32
    %248 = vector.broadcast %cst_147 : f32 to vector<9x128xf32>
    %249 = arith.mulf %248, %247 : vector<9x128xf32>
    %250 = math.tanh %249 : vector<9x128xf32>
    %cst_148 = arith.constant 1.000000e+00 : f32
    %251 = vector.broadcast %cst_148 : f32 to vector<9x128xf32>
    %252 = arith.addf %251, %250 : vector<9x128xf32>
    %253 = arith.mulf %242, %252 : vector<9x128xf32>
    %254 = arith.truncf %253 : vector<9x128xf32> to vector<9x128xbf16>
    %c0_149 = arith.constant 0 : index
    %c0_150 = arith.constant 0 : index
    %c0_151 = arith.constant 0 : index
    %255 = vector.load %arg29[%c0_149, %c0_150, %c0_151] : memref<2x128x32xbf16, #tpu.memory_space<vmem>>, vector<1x128x32xbf16>
    %256 = vector.shape_cast %255 : vector<1x128x32xbf16> to vector<128x32xbf16>
    %cst_152 = arith.constant dense<0.000000e+00> : vector<9x32xf32>
    %257 = tpu.matmul %254, %256, %cst_152 {dimension_numbers = #tpu.dot_dimension_numbers<[1], [0], [0], [1], [0, 0, 1, 1], [], []>} : vector<9x128xbf16>, vector<128x32xbf16>, vector<9x32xf32> -> vector<9x32xf32>
    %c0_153 = arith.constant 0 : index
    %c0_154 = arith.constant 0 : index
    %258 = vector.load %arg30[%c0_153, %c0_154] : memref<2x32xf32, #tpu.memory_space<vmem>>, vector<1x32xf32>
    %259 = vector.broadcast %258 : vector<1x32xf32> to vector<9x32xf32>
    %260 = arith.addf %257, %259 : vector<9x32xf32>
    %261 = arith.addf %209, %260 : vector<9x32xf32>
    %262 = arith.addf %261, %82 : vector<9x32xf32>
    %c1_155 = arith.constant 1 : index
    %c0_156 = arith.constant 0 : index
    %263 = vector.load %arg20[%c1_155, %c0_156] : memref<2x32xf32, #tpu.memory_space<vmem>>, vector<1x32xf32>
    %c1_157 = arith.constant 1 : index
    %c0_158 = arith.constant 0 : index
    %264 = vector.load %arg21[%c1_157, %c0_158] : memref<2x32xf32, #tpu.memory_space<vmem>>, vector<1x32xf32>
    %cst_159 = arith.constant dense<0.000000e+00> : vector<9xf32>
    %265 = vector.multi_reduction <add>, %262, %cst_159 [1] : vector<9x32xf32> to vector<9xf32>
    %266 = vector.shape_cast %265 : vector<9xf32> to vector<9x1xf32>
    %cst_160 = arith.constant 3.200000e+01 : f32
    %267 = vector.broadcast %cst_160 : f32 to vector<9x1xf32>
    %268 = arith.divf %266, %267 : vector<9x1xf32>
    %269 = vector.broadcast %268 : vector<9x1xf32> to vector<9x32xf32>
    %270 = arith.subf %262, %269 : vector<9x32xf32>
    %271 = arith.mulf %270, %270 : vector<9x32xf32>
    %cst_161 = arith.constant dense<0.000000e+00> : vector<9xf32>
    %272 = vector.multi_reduction <add>, %271, %cst_161 [1] : vector<9x32xf32> to vector<9xf32>
    %273 = vector.shape_cast %272 : vector<9xf32> to vector<9x1xf32>
    %cst_162 = arith.constant 3.200000e+01 : f32
    %274 = vector.broadcast %cst_162 : f32 to vector<9x1xf32>
    %275 = arith.divf %273, %274 : vector<9x1xf32>
    %276 = vector.broadcast %268 : vector<9x1xf32> to vector<9x32xf32>
    %277 = arith.subf %262, %276 : vector<9x32xf32>
    %cst_163 = arith.constant 9.99999974E-6 : f32
    %278 = vector.broadcast %cst_163 : f32 to vector<9x1xf32>
    %279 = arith.addf %275, %278 : vector<9x1xf32>
    %280 = math.rsqrt %279 : vector<9x1xf32>
    %281 = vector.broadcast %280 : vector<9x1xf32> to vector<9x32xf32>
    %282 = arith.mulf %277, %281 : vector<9x32xf32>
    %283 = vector.broadcast %263 : vector<1x32xf32> to vector<9x32xf32>
    %284 = arith.mulf %282, %283 : vector<9x32xf32>
    %285 = vector.broadcast %264 : vector<1x32xf32> to vector<9x32xf32>
    %286 = arith.addf %284, %285 : vector<9x32xf32>
    %287 = arith.truncf %286 : vector<9x32xf32> to vector<9x32xbf16>
    %c1_164 = arith.constant 1 : index
    %c0_165 = arith.constant 0 : index
    %c0_166 = arith.constant 0 : index
    %288 = vector.load %arg22[%c1_164, %c0_165, %c0_166] : memref<2x32x96xbf16, #tpu.memory_space<vmem>>, vector<1x32x96xbf16>
    %289 = vector.shape_cast %288 : vector<1x32x96xbf16> to vector<32x96xbf16>
    %cst_167 = arith.constant dense<0.000000e+00> : vector<9x96xf32>
    %290 = tpu.matmul %287, %289, %cst_167 {dimension_numbers = #tpu.dot_dimension_numbers<[1], [0], [0], [1], [0, 0, 1, 1], [], []>} : vector<9x32xbf16>, vector<32x96xbf16>, vector<9x96xf32> -> vector<9x96xf32>
    %c0_168 = arith.constant 0 : index
    %c0_169 = arith.constant 0 : index
    %291 = vector.load %arg36[%c0_168, %c0_169] : memref<9x96xf32, #tpu.memory_space<vmem>>, vector<9x96xf32>
    tpu.vector_store %arg36[%c0_168, %c0_169], %290 {strides = array<i32>} : memref<9x96xf32, #tpu.memory_space<vmem>>, vector<9x96xf32>,
    %c0_170 = arith.constant 0 : index
    %c0_171 = arith.constant 0 : index
    %292 = vector.load %arg36[%c0_170, %c0_171] : memref<9x96xf32, #tpu.memory_space<vmem>>, vector<9x8xf32>
    %293 = arith.truncf %292 : vector<9x8xf32> to vector<9x8xbf16>
    %c0_172 = arith.constant 0 : index
    %c32_173 = arith.constant 32 : index
    %294 = vector.load %arg36[%c0_172, %c32_173] : memref<9x96xf32, #tpu.memory_space<vmem>>, vector<9x8xf32>
    %295 = arith.truncf %294 : vector<9x8xf32> to vector<9x8xbf16>
    %c0_174 = arith.constant 0 : index
    %c64_175 = arith.constant 64 : index
    %296 = vector.load %arg36[%c0_174, %c64_175] : memref<9x96xf32, #tpu.memory_space<vmem>>, vector<9x8xf32>
    %297 = arith.truncf %296 : vector<9x8xf32> to vector<9x8xbf16>
    %cst_176 = arith.constant dense<0.000000e+00> : vector<9x9xf32>
    %298 = tpu.matmul %293, %295, %cst_176 {dimension_numbers = #tpu.dot_dimension_numbers<[1], [1], [0], [0], [0, 0, 1, 0], [], []>} : vector<9x8xbf16>, vector<9x8xbf16>, vector<9x9xf32> -> vector<9x9xf32>
    %cst_177 = arith.constant 0.353553385 : f32
    %299 = vector.broadcast %cst_177 : f32 to vector<9x9xf32>
    %300 = arith.mulf %298, %299 : vector<9x9xf32>
    %cst_178 = arith.constant dense<0xFF800000> : vector<9xf32>
    %301 = vector.multi_reduction <maximumf>, %300, %cst_178 [1] : vector<9x9xf32> to vector<9xf32>
    %302 = vector.shape_cast %301 : vector<9xf32> to vector<9x1xf32>
    %303 = vector.broadcast %302 : vector<9x1xf32> to vector<9x9xf32>
    %304 = arith.subf %300, %303 : vector<9x9xf32>
    %305 = math.exp %304 : vector<9x9xf32>
    %cst_179 = arith.constant dense<0.000000e+00> : vector<9xf32>
    %306 = vector.multi_reduction <add>, %305, %cst_179 [1] : vector<9x9xf32> to vector<9xf32>
    %307 = vector.shape_cast %306 : vector<9xf32> to vector<9x1xf32>
    %308 = tpu.reciprocal %307 {approx = true} : vector<9x1xf32> -> vector<9x1xf32>
    %309 = vector.broadcast %308 : vector<9x1xf32> to vector<9x9xf32>
    %310 = arith.mulf %305, %309 : vector<9x9xf32>
    %311 = arith.truncf %310 : vector<9x9xf32> to vector<9x9xbf16>
    %cst_180 = arith.constant dense<0.000000e+00> : vector<9x8xf32>
    %312 = tpu.matmul %311, %297, %cst_180 {dimension_numbers = #tpu.dot_dimension_numbers<[1], [0], [0], [1], [0, 0, 1, 1], [], []>} : vector<9x9xbf16>, vector<9x8xbf16>, vector<9x8xf32> -> vector<9x8xf32>
    %c0_181 = arith.constant 0 : index
    %c0_182 = arith.constant 0 : index
    %313 = vector.load %arg37[%c0_181, %c0_182] : memref<9x32xf32, #tpu.memory_space<vmem>>, vector<9x8xf32>
    tpu.vector_store %arg37[%c0_181, %c0_182], %312 {strides = array<i32>} : memref<9x32xf32, #tpu.memory_space<vmem>>, vector<9x8xf32>,
    %c0_183 = arith.constant 0 : index
    %c8_184 = arith.constant 8 : index
    %314 = vector.load %arg36[%c0_183, %c8_184] : memref<9x96xf32, #tpu.memory_space<vmem>>, vector<9x8xf32>
    %315 = arith.truncf %314 : vector<9x8xf32> to vector<9x8xbf16>
    %c0_185 = arith.constant 0 : index
    %c40_186 = arith.constant 40 : index
    %316 = vector.load %arg36[%c0_185, %c40_186] : memref<9x96xf32, #tpu.memory_space<vmem>>, vector<9x8xf32>
    %317 = arith.truncf %316 : vector<9x8xf32> to vector<9x8xbf16>
    %c0_187 = arith.constant 0 : index
    %c72_188 = arith.constant 72 : index
    %318 = vector.load %arg36[%c0_187, %c72_188] : memref<9x96xf32, #tpu.memory_space<vmem>>, vector<9x8xf32>
    %319 = arith.truncf %318 : vector<9x8xf32> to vector<9x8xbf16>
    %cst_189 = arith.constant dense<0.000000e+00> : vector<9x9xf32>
    %320 = tpu.matmul %315, %317, %cst_189 {dimension_numbers = #tpu.dot_dimension_numbers<[1], [1], [0], [0], [0, 0, 1, 0], [], []>} : vector<9x8xbf16>, vector<9x8xbf16>, vector<9x9xf32> -> vector<9x9xf32>
    %cst_190 = arith.constant 0.353553385 : f32
    %321 = vector.broadcast %cst_190 : f32 to vector<9x9xf32>
    %322 = arith.mulf %320, %321 : vector<9x9xf32>
    %cst_191 = arith.constant dense<0xFF800000> : vector<9xf32>
    %323 = vector.multi_reduction <maximumf>, %322, %cst_191 [1] : vector<9x9xf32> to vector<9xf32>
    %324 = vector.shape_cast %323 : vector<9xf32> to vector<9x1xf32>
    %325 = vector.broadcast %324 : vector<9x1xf32> to vector<9x9xf32>
    %326 = arith.subf %322, %325 : vector<9x9xf32>
    %327 = math.exp %326 : vector<9x9xf32>
    %cst_192 = arith.constant dense<0.000000e+00> : vector<9xf32>
    %328 = vector.multi_reduction <add>, %327, %cst_192 [1] : vector<9x9xf32> to vector<9xf32>
    %329 = vector.shape_cast %328 : vector<9xf32> to vector<9x1xf32>
    %330 = tpu.reciprocal %329 {approx = true} : vector<9x1xf32> -> vector<9x1xf32>
    %331 = vector.broadcast %330 : vector<9x1xf32> to vector<9x9xf32>
    %332 = arith.mulf %327, %331 : vector<9x9xf32>
    %333 = arith.truncf %332 : vector<9x9xf32> to vector<9x9xbf16>
    %cst_193 = arith.constant dense<0.000000e+00> : vector<9x8xf32>
    %334 = tpu.matmul %333, %319, %cst_193 {dimension_numbers = #tpu.dot_dimension_numbers<[1], [0], [0], [1], [0, 0, 1, 1], [], []>} : vector<9x9xbf16>, vector<9x8xbf16>, vector<9x8xf32> -> vector<9x8xf32>
    %c0_194 = arith.constant 0 : index
    %c8_195 = arith.constant 8 : index
    %335 = vector.load %arg37[%c0_194, %c8_195] : memref<9x32xf32, #tpu.memory_space<vmem>>, vector<9x8xf32>
    tpu.vector_store %arg37[%c0_194, %c8_195], %334 {strides = array<i32>} : memref<9x32xf32, #tpu.memory_space<vmem>>, vector<9x8xf32>,
    %c0_196 = arith.constant 0 : index
    %c16_197 = arith.constant 16 : index
    %336 = vector.load %arg36[%c0_196, %c16_197] : memref<9x96xf32, #tpu.memory_space<vmem>>, vector<9x8xf32>
    %337 = arith.truncf %336 : vector<9x8xf32> to vector<9x8xbf16>
    %c0_198 = arith.constant 0 : index
    %c48_199 = arith.constant 48 : index
    %338 = vector.load %arg36[%c0_198, %c48_199] : memref<9x96xf32, #tpu.memory_space<vmem>>, vector<9x8xf32>
    %339 = arith.truncf %338 : vector<9x8xf32> to vector<9x8xbf16>
    %c0_200 = arith.constant 0 : index
    %c80_201 = arith.constant 80 : index
    %340 = vector.load %arg36[%c0_200, %c80_201] : memref<9x96xf32, #tpu.memory_space<vmem>>, vector<9x8xf32>
    %341 = arith.truncf %340 : vector<9x8xf32> to vector<9x8xbf16>
    %cst_202 = arith.constant dense<0.000000e+00> : vector<9x9xf32>
    %342 = tpu.matmul %337, %339, %cst_202 {dimension_numbers = #tpu.dot_dimension_numbers<[1], [1], [0], [0], [0, 0, 1, 0], [], []>} : vector<9x8xbf16>, vector<9x8xbf16>, vector<9x9xf32> -> vector<9x9xf32>
    %cst_203 = arith.constant 0.353553385 : f32
    %343 = vector.broadcast %cst_203 : f32 to vector<9x9xf32>
    %344 = arith.mulf %342, %343 : vector<9x9xf32>
    %cst_204 = arith.constant dense<0xFF800000> : vector<9xf32>
    %345 = vector.multi_reduction <maximumf>, %344, %cst_204 [1] : vector<9x9xf32> to vector<9xf32>
    %346 = vector.shape_cast %345 : vector<9xf32> to vector<9x1xf32>
    %347 = vector.broadcast %346 : vector<9x1xf32> to vector<9x9xf32>
    %348 = arith.subf %344, %347 : vector<9x9xf32>
    %349 = math.exp %348 : vector<9x9xf32>
    %cst_205 = arith.constant dense<0.000000e+00> : vector<9xf32>
    %350 = vector.multi_reduction <add>, %349, %cst_205 [1] : vector<9x9xf32> to vector<9xf32>
    %351 = vector.shape_cast %350 : vector<9xf32> to vector<9x1xf32>
    %352 = tpu.reciprocal %351 {approx = true} : vector<9x1xf32> -> vector<9x1xf32>
    %353 = vector.broadcast %352 : vector<9x1xf32> to vector<9x9xf32>
    %354 = arith.mulf %349, %353 : vector<9x9xf32>
    %355 = arith.truncf %354 : vector<9x9xf32> to vector<9x9xbf16>
    %cst_206 = arith.constant dense<0.000000e+00> : vector<9x8xf32>
    %356 = tpu.matmul %355, %341, %cst_206 {dimension_numbers = #tpu.dot_dimension_numbers<[1], [0], [0], [1], [0, 0, 1, 1], [], []>} : vector<9x9xbf16>, vector<9x8xbf16>, vector<9x8xf32> -> vector<9x8xf32>
    %c0_207 = arith.constant 0 : index
    %c16_208 = arith.constant 16 : index
    %357 = vector.load %arg37[%c0_207, %c16_208] : memref<9x32xf32, #tpu.memory_space<vmem>>, vector<9x8xf32>
    tpu.vector_store %arg37[%c0_207, %c16_208], %356 {strides = array<i32>} : memref<9x32xf32, #tpu.memory_space<vmem>>, vector<9x8xf32>,
    %c0_209 = arith.constant 0 : index
    %c24_210 = arith.constant 24 : index
    %358 = vector.load %arg36[%c0_209, %c24_210] : memref<9x96xf32, #tpu.memory_space<vmem>>, vector<9x8xf32>
    %359 = arith.truncf %358 : vector<9x8xf32> to vector<9x8xbf16>
    %c0_211 = arith.constant 0 : index
    %c56_212 = arith.constant 56 : index
    %360 = vector.load %arg36[%c0_211, %c56_212] : memref<9x96xf32, #tpu.memory_space<vmem>>, vector<9x8xf32>
    %361 = arith.truncf %360 : vector<9x8xf32> to vector<9x8xbf16>
    %c0_213 = arith.constant 0 : index
    %c88_214 = arith.constant 88 : index
    %362 = vector.load %arg36[%c0_213, %c88_214] : memref<9x96xf32, #tpu.memory_space<vmem>>, vector<9x8xf32>
    %363 = arith.truncf %362 : vector<9x8xf32> to vector<9x8xbf16>
    %cst_215 = arith.constant dense<0.000000e+00> : vector<9x9xf32>
    %364 = tpu.matmul %359, %361, %cst_215 {dimension_numbers = #tpu.dot_dimension_numbers<[1], [1], [0], [0], [0, 0, 1, 0], [], []>} : vector<9x8xbf16>, vector<9x8xbf16>, vector<9x9xf32> -> vector<9x9xf32>
    %cst_216 = arith.constant 0.353553385 : f32
    %365 = vector.broadcast %cst_216 : f32 to vector<9x9xf32>
    %366 = arith.mulf %364, %365 : vector<9x9xf32>
    %cst_217 = arith.constant dense<0xFF800000> : vector<9xf32>
    %367 = vector.multi_reduction <maximumf>, %366, %cst_217 [1] : vector<9x9xf32> to vector<9xf32>
    %368 = vector.shape_cast %367 : vector<9xf32> to vector<9x1xf32>
    %369 = vector.broadcast %368 : vector<9x1xf32> to vector<9x9xf32>
    %370 = arith.subf %366, %369 : vector<9x9xf32>
    %371 = math.exp %370 : vector<9x9xf32>
    %cst_218 = arith.constant dense<0.000000e+00> : vector<9xf32>
    %372 = vector.multi_reduction <add>, %371, %cst_218 [1] : vector<9x9xf32> to vector<9xf32>
    %373 = vector.shape_cast %372 : vector<9xf32> to vector<9x1xf32>
    %374 = tpu.reciprocal %373 {approx = true} : vector<9x1xf32> -> vector<9x1xf32>
    %375 = vector.broadcast %374 : vector<9x1xf32> to vector<9x9xf32>
    %376 = arith.mulf %371, %375 : vector<9x9xf32>
    %377 = arith.truncf %376 : vector<9x9xf32> to vector<9x9xbf16>
    %cst_219 = arith.constant dense<0.000000e+00> : vector<9x8xf32>
    %378 = tpu.matmul %377, %363, %cst_219 {dimension_numbers = #tpu.dot_dimension_numbers<[1], [0], [0], [1], [0, 0, 1, 1], [], []>} : vector<9x9xbf16>, vector<9x8xbf16>, vector<9x8xf32> -> vector<9x8xf32>
    %c0_220 = arith.constant 0 : index
    %c24_221 = arith.constant 24 : index
    %379 = vector.load %arg37[%c0_220, %c24_221] : memref<9x32xf32, #tpu.memory_space<vmem>>, vector<9x8xf32>
    tpu.vector_store %arg37[%c0_220, %c24_221], %378 {strides = array<i32>} : memref<9x32xf32, #tpu.memory_space<vmem>>, vector<9x8xf32>,
    %c0_222 = arith.constant 0 : index
    %c0_223 = arith.constant 0 : index
    %380 = vector.load %arg37[%c0_222, %c0_223] : memref<9x32xf32, #tpu.memory_space<vmem>>, vector<9x32xf32>
    %381 = arith.truncf %380 : vector<9x32xf32> to vector<9x32xbf16>
    %c1_224 = arith.constant 1 : index
    %c0_225 = arith.constant 0 : index
    %c0_226 = arith.constant 0 : index
    %382 = vector.load %arg23[%c1_224, %c0_225, %c0_226] : memref<2x32x32xbf16, #tpu.memory_space<vmem>>, vector<1x32x32xbf16>
    %383 = vector.shape_cast %382 : vector<1x32x32xbf16> to vector<32x32xbf16>
    %cst_227 = arith.constant dense<0.000000e+00> : vector<9x32xf32>
    %384 = tpu.matmul %381, %383, %cst_227 {dimension_numbers = #tpu.dot_dimension_numbers<[1], [0], [0], [1], [0, 0, 1, 1], [], []>} : vector<9x32xbf16>, vector<32x32xbf16>, vector<9x32xf32> -> vector<9x32xf32>
    %385 = arith.addf %262, %384 : vector<9x32xf32>
    %c1_228 = arith.constant 1 : index
    %c0_229 = arith.constant 0 : index
    %386 = vector.load %arg24[%c1_228, %c0_229] : memref<2x32xf32, #tpu.memory_space<vmem>>, vector<1x32xf32>
    %387 = vector.broadcast %386 : vector<1x32xf32> to vector<9x32xf32>
    %388 = arith.addf %385, %387 : vector<9x32xf32>
    %c1_230 = arith.constant 1 : index
    %c0_231 = arith.constant 0 : index
    %389 = vector.load %arg25[%c1_230, %c0_231] : memref<2x32xf32, #tpu.memory_space<vmem>>, vector<1x32xf32>
    %c1_232 = arith.constant 1 : index
    %c0_233 = arith.constant 0 : index
    %390 = vector.load %arg26[%c1_232, %c0_233] : memref<2x32xf32, #tpu.memory_space<vmem>>, vector<1x32xf32>
    %cst_234 = arith.constant dense<0.000000e+00> : vector<9xf32>
    %391 = vector.multi_reduction <add>, %388, %cst_234 [1] : vector<9x32xf32> to vector<9xf32>
    %392 = vector.shape_cast %391 : vector<9xf32> to vector<9x1xf32>
    %cst_235 = arith.constant 3.200000e+01 : f32
    %393 = vector.broadcast %cst_235 : f32 to vector<9x1xf32>
    %394 = arith.divf %392, %393 : vector<9x1xf32>
    %395 = vector.broadcast %394 : vector<9x1xf32> to vector<9x32xf32>
    %396 = arith.subf %388, %395 : vector<9x32xf32>
    %397 = arith.mulf %396, %396 : vector<9x32xf32>
    %cst_236 = arith.constant dense<0.000000e+00> : vector<9xf32>
    %398 = vector.multi_reduction <add>, %397, %cst_236 [1] : vector<9x32xf32> to vector<9xf32>
    %399 = vector.shape_cast %398 : vector<9xf32> to vector<9x1xf32>
    %cst_237 = arith.constant 3.200000e+01 : f32
    %400 = vector.broadcast %cst_237 : f32 to vector<9x1xf32>
    %401 = arith.divf %399, %400 : vector<9x1xf32>
    %402 = vector.broadcast %394 : vector<9x1xf32> to vector<9x32xf32>
    %403 = arith.subf %388, %402 : vector<9x32xf32>
    %cst_238 = arith.constant 9.99999974E-6 : f32
    %404 = vector.broadcast %cst_238 : f32 to vector<9x1xf32>
    %405 = arith.addf %401, %404 : vector<9x1xf32>
    %406 = math.rsqrt %405 : vector<9x1xf32>
    %407 = vector.broadcast %406 : vector<9x1xf32> to vector<9x32xf32>
    %408 = arith.mulf %403, %407 : vector<9x32xf32>
    %409 = vector.broadcast %389 : vector<1x32xf32> to vector<9x32xf32>
    %410 = arith.mulf %408, %409 : vector<9x32xf32>
    %411 = vector.broadcast %390 : vector<1x32xf32> to vector<9x32xf32>
    %412 = arith.addf %410, %411 : vector<9x32xf32>
    %413 = arith.truncf %412 : vector<9x32xf32> to vector<9x32xbf16>
    %c1_239 = arith.constant 1 : index
    %c0_240 = arith.constant 0 : index
    %c0_241 = arith.constant 0 : index
    %414 = vector.load %arg27[%c1_239, %c0_240, %c0_241] : memref<2x32x128xbf16, #tpu.memory_space<vmem>>, vector<1x32x128xbf16>
    %415 = vector.shape_cast %414 : vector<1x32x128xbf16> to vector<32x128xbf16>
    %cst_242 = arith.constant dense<0.000000e+00> : vector<9x128xf32>
    %416 = tpu.matmul %413, %415, %cst_242 {dimension_numbers = #tpu.dot_dimension_numbers<[1], [0], [0], [1], [0, 0, 1, 1], [], []>} : vector<9x32xbf16>, vector<32x128xbf16>, vector<9x128xf32> -> vector<9x128xf32>
    %c1_243 = arith.constant 1 : index
    %c0_244 = arith.constant 0 : index
    %417 = vector.load %arg28[%c1_243, %c0_244] : memref<2x128xf32, #tpu.memory_space<vmem>>, vector<1x128xf32>
    %418 = vector.broadcast %417 : vector<1x128xf32> to vector<9x128xf32>
    %419 = arith.addf %416, %418 : vector<9x128xf32>
    %cst_245 = arith.constant 5.000000e-01 : f32
    %420 = vector.broadcast %cst_245 : f32 to vector<9x128xf32>
    %421 = arith.mulf %420, %419 : vector<9x128xf32>
    %cst_246 = arith.constant 4.471500e-02 : f32
    %422 = vector.broadcast %cst_246 : f32 to vector<9x128xf32>
    %423 = arith.mulf %422, %419 : vector<9x128xf32>
    %424 = arith.mulf %423, %419 : vector<9x128xf32>
    %425 = arith.mulf %424, %419 : vector<9x128xf32>
    %426 = arith.addf %419, %425 : vector<9x128xf32>
    %cst_247 = arith.constant 0.797884583 : f32
    %427 = vector.broadcast %cst_247 : f32 to vector<9x128xf32>
    %428 = arith.mulf %427, %426 : vector<9x128xf32>
    %429 = math.tanh %428 : vector<9x128xf32>
    %cst_248 = arith.constant 1.000000e+00 : f32
    %430 = vector.broadcast %cst_248 : f32 to vector<9x128xf32>
    %431 = arith.addf %430, %429 : vector<9x128xf32>
    %432 = arith.mulf %421, %431 : vector<9x128xf32>
    %433 = arith.truncf %432 : vector<9x128xf32> to vector<9x128xbf16>
    %c1_249 = arith.constant 1 : index
    %c0_250 = arith.constant 0 : index
    %c0_251 = arith.constant 0 : index
    %434 = vector.load %arg29[%c1_249, %c0_250, %c0_251] : memref<2x128x32xbf16, #tpu.memory_space<vmem>>, vector<1x128x32xbf16>
    %435 = vector.shape_cast %434 : vector<1x128x32xbf16> to vector<128x32xbf16>
    %cst_252 = arith.constant dense<0.000000e+00> : vector<9x32xf32>
    %436 = tpu.matmul %433, %435, %cst_252 {dimension_numbers = #tpu.dot_dimension_numbers<[1], [0], [0], [1], [0, 0, 1, 1], [], []>} : vector<9x128xbf16>, vector<128x32xbf16>, vector<9x32xf32> -> vector<9x32xf32>
    %c1_253 = arith.constant 1 : index
    %c0_254 = arith.constant 0 : index
    %437 = vector.load %arg30[%c1_253, %c0_254] : memref<2x32xf32, #tpu.memory_space<vmem>>, vector<1x32xf32>
    %438 = vector.broadcast %437 : vector<1x32xf32> to vector<9x32xf32>
    %439 = arith.addf %436, %438 : vector<9x32xf32>
    %440 = arith.addf %388, %439 : vector<9x32xf32>
    %c0_255 = arith.constant 0 : index
    %c0_256 = arith.constant 0 : index
    %441 = vector.load %arg31[%c0_255, %c0_256] : memref<1x32xf32, #tpu.memory_space<vmem>>, vector<1x32xf32>
    %c0_257 = arith.constant 0 : index
    %c0_258 = arith.constant 0 : index
    %442 = vector.load %arg32[%c0_257, %c0_258] : memref<1x32xf32, #tpu.memory_space<vmem>>, vector<1x32xf32>
    %cst_259 = arith.constant dense<0.000000e+00> : vector<9xf32>
    %443 = vector.multi_reduction <add>, %440, %cst_259 [1] : vector<9x32xf32> to vector<9xf32>
    %444 = vector.shape_cast %443 : vector<9xf32> to vector<9x1xf32>
    %cst_260 = arith.constant 3.200000e+01 : f32
    %445 = vector.broadcast %cst_260 : f32 to vector<9x1xf32>
    %446 = arith.divf %444, %445 : vector<9x1xf32>
    %447 = vector.broadcast %446 : vector<9x1xf32> to vector<9x32xf32>
    %448 = arith.subf %440, %447 : vector<9x32xf32>
    %449 = arith.mulf %448, %448 : vector<9x32xf32>
    %cst_261 = arith.constant dense<0.000000e+00> : vector<9xf32>
    %450 = vector.multi_reduction <add>, %449, %cst_261 [1] : vector<9x32xf32> to vector<9xf32>
    %451 = vector.shape_cast %450 : vector<9xf32> to vector<9x1xf32>
    %cst_262 = arith.constant 3.200000e+01 : f32
    %452 = vector.broadcast %cst_262 : f32 to vector<9x1xf32>
    %453 = arith.divf %451, %452 : vector<9x1xf32>
    %454 = vector.broadcast %446 : vector<9x1xf32> to vector<9x32xf32>
    %455 = arith.subf %440, %454 : vector<9x32xf32>
    %cst_263 = arith.constant 9.99999974E-6 : f32
    %456 = vector.broadcast %cst_263 : f32 to vector<9x1xf32>
    %457 = arith.addf %453, %456 : vector<9x1xf32>
    %458 = math.rsqrt %457 : vector<9x1xf32>
    %459 = vector.broadcast %458 : vector<9x1xf32> to vector<9x32xf32>
    %460 = arith.mulf %455, %459 : vector<9x32xf32>
    %461 = vector.broadcast %441 : vector<1x32xf32> to vector<9x32xf32>
    %462 = arith.mulf %460, %461 : vector<9x32xf32>
    %463 = vector.broadcast %442 : vector<1x32xf32> to vector<9x32xf32>
    %464 = arith.addf %462, %463 : vector<9x32xf32>
    %465 = vector.extract_strided_slice %464 {offsets = [0, 0], sizes = [1, 32], strides = [1, 1]} : vector<9x32xf32> to vector<1x32xf32>
    %c0_264 = arith.constant 0 : index
    %c0_265 = arith.constant 0 : index
    %c0_266 = arith.constant 0 : index
    %466 = vector.load %arg33[%c0_264, %c0_265, %c0_266] : memref<1x1x64xf32, #tpu.memory_space<vmem>>, vector<1x1x32xf32>
    %467 = vector.shape_cast %466 : vector<1x1x32xf32> to vector<1x32xf32>
    %468 = vector.shape_cast %465 : vector<1x32xf32> to vector<1x1x32xf32>
    tpu.vector_store %arg33[%c0_264, %c0_265, %c0_266], %468 {strides = array<i32>} : memref<1x1x64xf32, #tpu.memory_space<vmem>>, vector<1x1x32xf32>,
    %469 = tpu.iota {dimensions = array<i32: 0>} : vector<9x32xi32>
    %c0_i32 = arith.constant 0 : i32
    %470 = vector.broadcast %c0_i32 : i32 to vector<9x32xi32>
    %471 = arith.cmpi eq, %469, %470 : vector<9x32xi32>
    %cst_267 = arith.constant 0xFF800000 : f32
    %472 = vector.broadcast %cst_267 : f32 to vector<9x32xf32>
    %473 = arith.select %471, %472, %464 : vector<9x32xi1>, vector<9x32xf32>
    %cst_268 = arith.constant dense<0xFF800000> : vector<32xf32>
    %474 = vector.multi_reduction <maximumf>, %473, %cst_268 [0] : vector<9x32xf32> to vector<32xf32>
    %475 = vector.shape_cast %474 : vector<32xf32> to vector<1x32xf32>
    %c0_269 = arith.constant 0 : index
    %c0_270 = arith.constant 0 : index
    %c32_271 = arith.constant 32 : index
    %476 = vector.load %arg33[%c0_269, %c0_270, %c32_271] : memref<1x1x64xf32, #tpu.memory_space<vmem>>, vector<1x1x32xf32>
    %477 = vector.shape_cast %476 : vector<1x1x32xf32> to vector<1x32xf32>
    %478 = vector.shape_cast %475 : vector<1x32xf32> to vector<1x1x32xf32>
    tpu.vector_store %arg33[%c0_269, %c0_270, %c32_271], %478 {strides = array<i32>} : memref<1x1x64xf32, #tpu.memory_space<vmem>>, vector<1x1x32xf32>,
    return
  }
  func.func @transform_0(%arg0: i32) -> (i32, i32, i32) {
    %c0_i32 = arith.constant 0 : i32
    %c0_i32_0 = arith.constant 0 : i32
    %c0_i32_1 = arith.constant 0 : i32
    return %arg0, %c0_i32, %c0_i32_0 : i32, i32, i32
  }
  func.func @transform_1(%arg0: i32) -> (i32, i32, i32) {
    %c0_i32 = arith.constant 0 : i32
    %c0_i32_0 = arith.constant 0 : i32
    %c0_i32_1 = arith.constant 0 : i32
    return %arg0, %c0_i32, %c0_i32_0 : i32, i32, i32
  }
  func.func @transform_2(%arg0: i32) -> (i32, i32) {
    %c0_i32 = arith.constant 0 : i32
    %c0_i32_0 = arith.constant 0 : i32
    %c0_i32_1 = arith.constant 0 : i32
    return %c0_i32, %c0_i32_0 : i32, i32
  }
  func.func @transform_3(%arg0: i32) -> (i32, i32) {
    %c0_i32 = arith.constant 0 : i32
    %c0_i32_0 = arith.constant 0 : i32
    %c0_i32_1 = arith.constant 0 : i32
    return %c0_i32, %c0_i32_0 : i32, i32
  }
  func.func @transform_4(%arg0: i32) -> (i32, i32) {
    %c0_i32 = arith.constant 0 : i32
    %c0_i32_0 = arith.constant 0 : i32
    %c0_i32_1 = arith.constant 0 : i32
    return %c0_i32, %c0_i32_0 : i32, i32
  }
  func.func @transform_5(%arg0: i32) -> (i32, i32) {
    %c0_i32 = arith.constant 0 : i32
    %c0_i32_0 = arith.constant 0 : i32
    %c0_i32_1 = arith.constant 0 : i32
    return %c0_i32, %c0_i32_0 : i32, i32
  }
  func.func @transform_6(%arg0: i32) -> (i32, i32) {
    %c0_i32 = arith.constant 0 : i32
    %c0_i32_0 = arith.constant 0 : i32
    %c0_i32_1 = arith.constant 0 : i32
    return %c0_i32, %c0_i32_0 : i32, i32
  }
  func.func @transform_7(%arg0: i32) -> (i32, i32) {
    %c0_i32 = arith.constant 0 : i32
    %c0_i32_0 = arith.constant 0 : i32
    %c0_i32_1 = arith.constant 0 : i32
    return %c0_i32, %c0_i32_0 : i32, i32
  }
  func.func @transform_8(%arg0: i32) -> (i32, i32, i32) {
    %c0_i32 = arith.constant 0 : i32
    %c0_i32_0 = arith.constant 0 : i32
    %c0_i32_1 = arith.constant 0 : i32
    %c0_i32_2 = arith.constant 0 : i32
    return %c0_i32, %c0_i32_0, %c0_i32_1 : i32, i32, i32
  }
  func.func @transform_9(%arg0: i32) -> (i32, i32) {
    %c0_i32 = arith.constant 0 : i32
    %c0_i32_0 = arith.constant 0 : i32
    %c0_i32_1 = arith.constant 0 : i32
    return %c0_i32, %c0_i32_0 : i32, i32
  }
  func.func @transform_10(%arg0: i32) -> (i32, i32) {
    %c0_i32 = arith.constant 0 : i32
    %c0_i32_0 = arith.constant 0 : i32
    %c0_i32_1 = arith.constant 0 : i32
    return %c0_i32, %c0_i32_0 : i32, i32
  }
  func.func @transform_11(%arg0: i32) -> (i32, i32) {
    %c0_i32 = arith.constant 0 : i32
    %c0_i32_0 = arith.constant 0 : i32
    %c0_i32_1 = arith.constant 0 : i32
    return %c0_i32, %c0_i32_0 : i32, i32
  }
  func.func @transform_12(%arg0: i32) -> (i32, i32) {
    %c0_i32 = arith.constant 0 : i32
    %c0_i32_0 = arith.constant 0 : i32
    %c0_i32_1 = arith.constant 0 : i32
    return %c0_i32, %c0_i32_0 : i32, i32
  }
  func.func @transform_13(%arg0: i32) -> (i32, i32) {
    %c0_i32 = arith.constant 0 : i32
    %c0_i32_0 = arith.constant 0 : i32
    %c0_i32_1 = arith.constant 0 : i32
    return %c0_i32, %c0_i32_0 : i32, i32
  }
  func.func @transform_14(%arg0: i32) -> (i32, i32) {
    %c0_i32 = arith.constant 0 : i32
    %c0_i32_0 = arith.constant 0 : i32
    %c0_i32_1 = arith.constant 0 : i32
    return %c0_i32, %c0_i32_0 : i32, i32
  }
  func.func @transform_15(%arg0: i32) -> (i32, i32) {
    %c0_i32 = arith.constant 0 : i32
    %c0_i32_0 = arith.constant 0 : i32
    %c0_i32_1 = arith.constant 0 : i32
    return %c0_i32, %c0_i32_0 : i32, i32
  }
  func.func @transform_16(%arg0: i32) -> (i32, i32) {
    %c0_i32 = arith.constant 0 : i32
    %c0_i32_0 = arith.constant 0 : i32
    %c0_i32_1 = arith.constant 0 : i32
    return %c0_i32, %c0_i32_0 : i32, i32
  }
  func.func @transform_17(%arg0: i32) -> (i32, i32) {
    %c0_i32 = arith.constant 0 : i32
    %c0_i32_0 = arith.constant 0 : i32
    %c0_i32_1 = arith.constant 0 : i32
    return %c0_i32, %c0_i32_0 : i32, i32
  }
  func.func @transform_18(%arg0: i32) -> (i32, i32) {
    %c0_i32 = arith.constant 0 : i32
    %c0_i32_0 = arith.constant 0 : i32
    %c0_i32_1 = arith.constant 0 : i32
    return %c0_i32, %c0_i32_0 : i32, i32
  }
  func.func @transform_19(%arg0: i32) -> (i32, i32) {
    %c0_i32 = arith.constant 0 : i32
    %c0_i32_0 = arith.constant 0 : i32
    %c0_i32_1 = arith.constant 0 : i32
    return %c0_i32, %c0_i32_0 : i32, i32
  }
  func.func @transform_20(%arg0: i32) -> (i32, i32) {
    %c0_i32 = arith.constant 0 : i32
    %c0_i32_0 = arith.constant 0 : i32
    %c0_i32_1 = arith.constant 0 : i32
    return %c0_i32, %c0_i32_0 : i32, i32
  }
  func.func @transform_21(%arg0: i32) -> (i32, i32, i32) {
    %c0_i32 = arith.constant 0 : i32
    %c0_i32_0 = arith.constant 0 : i32
    %c0_i32_1 = arith.constant 0 : i32
    %c0_i32_2 = arith.constant 0 : i32
    return %c0_i32, %c0_i32_0, %c0_i32_1 : i32, i32, i32
  }
  func.func @transform_22(%arg0: i32) -> (i32, i32, i32) {
    %c0_i32 = arith.constant 0 : i32
    %c0_i32_0 = arith.constant 0 : i32
    %c0_i32_1 = arith.constant 0 : i32
    %c0_i32_2 = arith.constant 0 : i32
    return %c0_i32, %c0_i32_0, %c0_i32_1 : i32, i32, i32
  }
  func.func @transform_23(%arg0: i32) -> (i32, i32) {
    %c0_i32 = arith.constant 0 : i32
    %c0_i32_0 = arith.constant 0 : i32
    %c0_i32_1 = arith.constant 0 : i32
    return %c0_i32, %c0_i32_0 : i32, i32
  }
  func.func @transform_24(%arg0: i32) -> (i32, i32) {
    %c0_i32 = arith.constant 0 : i32
    %c0_i32_0 = arith.constant 0 : i32
    %c0_i32_1 = arith.constant 0 : i32
    return %c0_i32, %c0_i32_0 : i32, i32
  }
  func.func @transform_25(%arg0: i32) -> (i32, i32) {
    %c0_i32 = arith.constant 0 : i32
    %c0_i32_0 = arith.constant 0 : i32
    %c0_i32_1 = arith.constant 0 : i32
    return %c0_i32, %c0_i32_0 : i32, i32
  }
  func.func @transform_26(%arg0: i32) -> (i32, i32, i32) {
    %c0_i32 = arith.constant 0 : i32
    %c0_i32_0 = arith.constant 0 : i32
    %c0_i32_1 = arith.constant 0 : i32
    %c0_i32_2 = arith.constant 0 : i32
    return %c0_i32, %c0_i32_0, %c0_i32_1 : i32, i32, i32
  }
  func.func @transform_27(%arg0: i32) -> (i32, i32) {
    %c0_i32 = arith.constant 0 : i32
    %c0_i32_0 = arith.constant 0 : i32
    %c0_i32_1 = arith.constant 0 : i32
    return %c0_i32, %c0_i32_0 : i32, i32
  }
  func.func @transform_28(%arg0: i32) -> (i32, i32, i32) {
    %c0_i32 = arith.constant 0 : i32
    %c0_i32_0 = arith.constant 0 : i32
    %c0_i32_1 = arith.constant 0 : i32
    %c0_i32_2 = arith.constant 0 : i32
    return %c0_i32, %c0_i32_0, %c0_i32_1 : i32, i32, i32
  }
  func.func @transform_29(%arg0: i32) -> (i32, i32) {
    %c0_i32 = arith.constant 0 : i32
    %c0_i32_0 = arith.constant 0 : i32
    %c0_i32_1 = arith.constant 0 : i32
    return %c0_i32, %c0_i32_0 : i32, i32
  }
  func.func @transform_30(%arg0: i32) -> (i32, i32) {
    %c0_i32 = arith.constant 0 : i32
    %c0_i32_0 = arith.constant 0 : i32
    %c0_i32_1 = arith.constant 0 : i32
    return %c0_i32, %c0_i32_0 : i32, i32
  }
  func.func @transform_31(%arg0: i32) -> (i32, i32) {
    %c0_i32 = arith.constant 0 : i32
    %c0_i32_0 = arith.constant 0 : i32
    %c0_i32_1 = arith.constant 0 : i32
    return %c0_i32, %c0_i32_0 : i32, i32
  }
  func.func @transform_32(%arg0: i32) -> (i32, i32, i32) {
    %c0_i32 = arith.constant 0 : i32
    %c0_i32_0 = arith.constant 0 : i32
    %c0_i32_1 = arith.constant 0 : i32
    return %arg0, %c0_i32, %c0_i32_0 : i32, i32, i32
  }
}

</mosaic_0001>

<llo_original>
// kernel: tpu_custom_call.1
$region0: #{tpu_custom_call.1}
  #allocation0 [shape = 'u32[]', space=smem, size = 0x4, offset = 0x4, fixed_abs, tag = 'smem constant byte address 0x4 - core index']
  #allocation1 [shape = 'u32[72,128]{1,0:T(1,128)}', space=vmem, size = 0x9000, scoped, tag = 'internal scratch']
  #allocation2 [shape = 'f32[9,32]{1,0:T(8,128)}', space=vmem, size = 0x2000, scoped, tag = 'scratch operand']
  #allocation3 [shape = 'f32[9,32]{1,0:T(8,128)}', space=vmem, size = 0x2000, scoped, tag = 'scratch operand']
  #allocation4 [shape = 'f32[9,96]{1,0:T(8,128)}', space=vmem, size = 0x2000, scoped, tag = 'scratch operand']
  #allocation5 [shape = 'f32[9,32]{1,0:T(8,128)}', space=vmem, size = 0x2000, scoped, tag = 'scratch operand']
  %s0 = inlined_call_operand.smem [shape: u32[33], index: -1, kind: input, shape index: {}]
  %s1 = sld [smem:[%s0]]
  %s2 = scalar_lea.smem %s0, 1
  %s3 = sld [smem:[%s2]]
  %s4 = scalar_lea.smem %s0, 2
  %s5 = sld [smem:[%s4]]
  %s6 = scalar_lea.smem %s0, 3
  %s7 = sld [smem:[%s6]]
  %s8 = scalar_lea.smem %s0, 4
  %s9 = sld [smem:[%s8]]
  %s10 = scalar_lea.smem %s0, 5
  %s11 = sld [smem:[%s10]]
  %s12 = scalar_lea.smem %s0, 6
  %s13 = sld [smem:[%s12]]
  %s14 = scalar_lea.smem %s0, 7
  %s15 = sld [smem:[%s14]]
  %s16 = scalar_lea.smem %s0, 8
  %s17 = sld [smem:[%s16]]
  %s18 = scalar_lea.smem %s0, 9
  %s19 = sld [smem:[%s18]]
  %s20 = scalar_lea.smem %s0, 10
  %s21 = sld [smem:[%s20]]
  %s22 = scalar_lea.smem %s0, 11
  %s23 = sld [smem:[%s22]]
  %s24 = scalar_lea.smem %s0, 12
  %s25 = sld [smem:[%s24]]
  %s26 = scalar_lea.smem %s0, 13
  %s27 = sld [smem:[%s26]]
  %s28 = scalar_lea.smem %s0, 14
  %s29 = sld [smem:[%s28]]
  %s30 = scalar_lea.smem %s0, 15
  %s31 = sld [smem:[%s30]]
  %s32 = scalar_lea.smem %s0, 16
  %s33 = sld [smem:[%s32]]
  %s34 = scalar_lea.smem %s0, 17
  %s35 = sld [smem:[%s34]]
  %s36 = scalar_lea.smem %s0, 18
  %s37 = sld [smem:[%s36]]
  %s38 = scalar_lea.smem %s0, 19
  %s39 = sld [smem:[%s38]]
  %s40 = scalar_lea.smem %s0, 20
  %s41 = sld [smem:[%s40]]
  %s42 = scalar_lea.smem %s0, 21
  %s43 = sld [smem:[%s42]]
  %s44 = scalar_lea.smem %s0, 22
  %s45 = sld [smem:[%s44]]
  %s46 = scalar_lea.smem %s0, 23
  %s47 = sld [smem:[%s46]]
  %s48 = scalar_lea.smem %s0, 24
  %s49 = sld [smem:[%s48]]
  %s50 = scalar_lea.smem %s0, 25
  %s51 = sld [smem:[%s50]]
  %s52 = scalar_lea.smem %s0, 26
  %s53 = sld [smem:[%s52]]
  %s54 = scalar_lea.smem %s0, 27
  %s55 = sld [smem:[%s54]]
  %s56 = scalar_lea.smem %s0, 28
  %s57 = sld [smem:[%s56]]
  %s58 = scalar_lea.smem %s0, 29
  %s59 = sld [smem:[%s58]]
  %s60 = scalar_lea.smem %s0, 30
  %s61 = sld [smem:[%s60]]
  %s62 = scalar_lea.smem %s0, 31
  %s63 = sld [smem:[%s62]]
  %s64 = scalar_lea.smem %s0, 32
  %s65 = sld [smem:[%s64]]
  %s66 = sld [smem:[#allocation0]]
  $region161: #{tpu_custom_call.1} parent=0
    _
  %s68 = ssub.s32 1, %s66
  %s69 = scalar_select 0, %s68, %s66
  $region1: #{tpu_custom_call.1} parent=0
    #allocation6 [shape = 'u8[1024]{0}', space=vmem, size = 0x400, scoped, tag = 'output window, operand 0']
    #allocation7 [shape = 's32[2]{0}', space=sflag, size = 0x8, scoped, tag = 'scoped memory for tpu_custom_call.1']
    %70 = vsyncpa [#allocation7], 0
    %s71 = scalar_lea.sflag [#allocation7], 1
    %72 = vsyncpa %s71, 0
    loop: start=0, step=1, limit=4
    $region2: #{tpu_custom_call.1} parent=1 // loop_pre_header
      _
    $region3: #{tpu_custom_call.1} parent=1 // loop_header
      %s74 = sphi 0, %s78
      %p75 = scmp.ge.s32.totalorder %s74, 4
      %s84 = sphi 0, %s86
      %s87 = sphi 0, %s84
      %s88 = sphi 0, %s87
      %s104 = sphi 0, %s88
      %s110 = sphi 0, %s112
      %s113 = sphi 0, %s110
      %s114 = sphi 0, %s113
      %s130 = sphi 0, %s114
      %s134 = sphi 0, %s134
      %s136 = sphi 0, %s134
      %s137 = sphi 0, %s136
      %s151 = sphi 0, %s137
      %s155 = sphi 0, %s155
      %s157 = sphi 0, %s155
      %s158 = sphi 0, %s157
      %s172 = sphi 0, %s158
      %s176 = sphi 0, %s176
      %s178 = sphi 0, %s176
      %s179 = sphi 0, %s178
      %s193 = sphi 0, %s179
      %s197 = sphi 0, %s197
      %s199 = sphi 0, %s197
      %s200 = sphi 0, %s199
      %s214 = sphi 0, %s200
      %s218 = sphi 0, %s218
      %s220 = sphi 0, %s218
      %s221 = sphi 0, %s220
      %s235 = sphi 0, %s221
      %s239 = sphi 0, %s239
      %s241 = sphi 0, %s239
      %s242 = sphi 0, %s241
      %s256 = sphi 0, %s242
      %s260 = sphi 0, %s260
      %s262 = sphi 0, %s260
      %s263 = sphi 0, %s262
      %s277 = sphi 0, %s263
      %s281 = sphi 0, %s281
      %s283 = sphi 0, %s281
      %s284 = sphi 0, %s283
      %s298 = sphi 0, %s284
      %s302 = sphi 0, %s302
      %s304 = sphi 0, %s302
      %s305 = sphi 0, %s304
      %s319 = sphi 0, %s305
      %s323 = sphi 0, %s323
      %s325 = sphi 0, %s323
      %s326 = sphi 0, %s325
      %s340 = sphi 0, %s326
      %s344 = sphi 0, %s344
      %s346 = sphi 0, %s344
      %s347 = sphi 0, %s346
      %s361 = sphi 0, %s347
      %s365 = sphi 0, %s365
      %s367 = sphi 0, %s365
      %s368 = sphi 0, %s367
      %s382 = sphi 0, %s368
      %s386 = sphi 0, %s386
      %s388 = sphi 0, %s386
      %s389 = sphi 0, %s388
      %s403 = sphi 0, %s389
      %s407 = sphi 0, %s407
      %s409 = sphi 0, %s407
      %s410 = sphi 0, %s409
      %s424 = sphi 0, %s410
      %s428 = sphi 0, %s428
      %s430 = sphi 0, %s428
      %s431 = sphi 0, %s430
      %s445 = sphi 0, %s431
      %s449 = sphi 0, %s449
      %s451 = sphi 0, %s449
      %s452 = sphi 0, %s451
      %s466 = sphi 0, %s452
      %s470 = sphi 0, %s470
      %s472 = sphi 0, %s470
      %s473 = sphi 0, %s472
      %s487 = sphi 0, %s473
      %s491 = sphi 0, %s491
      %s493 = sphi 0, %s491
      %s494 = sphi 0, %s493
      %s508 = sphi 0, %s494
      %s512 = sphi 0, %s512
      %s514 = sphi 0, %s512
      %s515 = sphi 0, %s514
      %s529 = sphi 0, %s515
      %s533 = sphi 0, %s533
      %s535 = sphi 0, %s533
      %s536 = sphi 0, %s535
      %s550 = sphi 0, %s536
      %s554 = sphi 0, %s554
      %s556 = sphi 0, %s554
      %s557 = sphi 0, %s556
      %s571 = sphi 0, %s557
      %s575 = sphi 0, %s575
      %s577 = sphi 0, %s575
      %s578 = sphi 0, %s577
      %s592 = sphi 0, %s578
      %s596 = sphi 0, %s596
      %s598 = sphi 0, %s596
      %s599 = sphi 0, %s598
      %s613 = sphi 0, %s599
      %s617 = sphi 0, %s617
      %s619 = sphi 0, %s617
      %s620 = sphi 0, %s619
      %s634 = sphi 0, %s620
      %s638 = sphi 0, %s638
      %s640 = sphi 0, %s638
      %s641 = sphi 0, %s640
      %s655 = sphi 0, %s641
      %s659 = sphi 0, %s659
      %s661 = sphi 0, %s659
      %s662 = sphi 0, %s661
      %s676 = sphi 0, %s662
      %s680 = sphi 0, %s680
      %s682 = sphi 0, %s680
      %s683 = sphi 0, %s682
      %s697 = sphi 0, %s683
      %s701 = sphi 0, %s701
      %s703 = sphi 0, %s701
      %s704 = sphi 0, %s703
      %s718 = sphi 0, %s704
      %s722 = sphi 0, %s722
      %s724 = sphi 0, %s722
      %s725 = sphi 0, %s724
      %s739 = sphi 0, %s725
      %s743 = sphi 0, %s743
      %s745 = sphi 0, %s743
      %s746 = sphi 0, %s745
      %s760 = sphi 0, %s746
      %s766 = sphi 0, %s768
      %s769 = sphi 0, %s766
      %s770 = sphi 0, %s769
      %s786 = sphi 0, %s770
    $region4: #{tpu_custom_call.1} parent=1 // loop_header_branch
      %77 = sbr.rel (%p75) target = $region8
    $region5: #{tpu_custom_call.1} parent=1 // loop_body
      %s79 = ssub.s32 %s74, 1
      %s80 = ssub.s32 %s74, 2
      %s81 = sadd.s32 %s74, 1
      %s82 = ssub.s32 %s74, %s81
      %p83 = scmp.eq.s32.totalorder %s82, 0
      %s85 = sadd.s32 %s84, 1
      %s86 = scalar_select %p83, %s84, %s85
      %p89 = pneg %p83
      %p90 = scmp.eq.s32.totalorder %s74, 1
      %p91 = por %p89, %p90
      %p92 = scmp.ne.s32.totalorder %s84, %s87
      %p93 = scmp.eq.s32.totalorder %s74, 0
      %p94 = por %p92, %p93
      %p95 = scmp.ne.s32.totalorder %s84, %s87
      %p96 = scmp.eq.s32.totalorder %s79, 1
      %p97 = por %p95, %p96
      %p98 = scmp.ne.s32.totalorder %s87, %s88
      %p99 = scmp.eq.s32.totalorder %s79, 0
      %p100 = por %p98, %p99
      %p101 = scmp.ne.s32.totalorder %s87, %s88
      %p102 = scmp.eq.s32.totalorder %s80, 1
      %p103 = por %p101, %p102
      %p105 = scmp.ne.s32.totalorder %s88, %s104
      %p106 = scmp.eq.s32.totalorder %s80, 0
      %p107 = por %p105, %p106
      %s108 = ssub.s32 %s74, %s81
      %p109 = scmp.eq.s32.totalorder %s108, 0
      %s111 = sadd.s32 %s110, 1
      %s112 = scalar_select %p109, %s110, %s111
      %p115 = pneg %p109
      %p116 = scmp.eq.s32.totalorder %s74, 1
      %p117 = por %p115, %p116
      %p118 = scmp.ne.s32.totalorder %s110, %s113
      %p119 = scmp.eq.s32.totalorder %s74, 0
      %p120 = por %p118, %p119
      %p121 = scmp.ne.s32.totalorder %s110, %s113
      %p122 = scmp.eq.s32.totalorder %s79, 1
      %p123 = por %p121, %p122
      %p124 = scmp.ne.s32.totalorder %s113, %s114
      %p125 = scmp.eq.s32.totalorder %s79, 0
      %p126 = por %p124, %p125
      %p127 = scmp.ne.s32.totalorder %s113, %s114
      %p128 = scmp.eq.s32.totalorder %s80, 1
      %p129 = por %p127, %p128
      %p131 = scmp.ne.s32.totalorder %s114, %s130
      %p132 = scmp.eq.s32.totalorder %s80, 0
      %p133 = por %p131, %p132
      %s135 = sadd.s32 %s134, 1
      %p138 = scmp.eq.s32.totalorder %s74, 1
      %p139 = scmp.ne.s32.totalorder %s134, %s136
      %p140 = scmp.eq.s32.totalorder %s74, 0
      %p141 = por %p139, %p140
      %p142 = scmp.ne.s32.totalorder %s134, %s136
      %p143 = scmp.eq.s32.totalorder %s79, 1
      %p144 = por %p142, %p143
      %p145 = scmp.ne.s32.totalorder %s136, %s137
      %p146 = scmp.eq.s32.totalorder %s79, 0
      %p147 = por %p145, %p146
      %p148 = scmp.ne.s32.totalorder %s136, %s137
      %p149 = scmp.eq.s32.totalorder %s80, 1
      %p150 = por %p148, %p149
      %p152 = scmp.ne.s32.totalorder %s137, %s151
      %p153 = scmp.eq.s32.totalorder %s80, 0
      %p154 = por %p152, %p153
      %s156 = sadd.s32 %s155, 1
      %p159 = scmp.eq.s32.totalorder %s74, 1
      %p160 = scmp.ne.s32.totalorder %s155, %s157
      %p161 = scmp.eq.s32.totalorder %s74, 0
      %p162 = por %p160, %p161
      %p163 = scmp.ne.s32.totalorder %s155, %s157
      %p164 = scmp.eq.s32.totalorder %s79, 1
      %p165 = por %p163, %p164
      %p166 = scmp.ne.s32.totalorder %s157, %s158
      %p167 = scmp.eq.s32.totalorder %s79, 0
      %p168 = por %p166, %p167
      %p169 = scmp.ne.s32.totalorder %s157, %s158
      %p170 = scmp.eq.s32.totalorder %s80, 1
      %p171 = por %p169, %p170
      %p173 = scmp.ne.s32.totalorder %s158, %s172
      %p174 = scmp.eq.s32.totalorder %s80, 0
      %p175 = por %p173, %p174
      %s177 = sadd.s32 %s176, 1
      %p180 = scmp.eq.s32.totalorder %s74, 1
      %p181 = scmp.ne.s32.totalorder %s176, %s178
      %p182 = scmp.eq.s32.totalorder %s74, 0
      %p183 = por %p181, %p182
      %p184 = scmp.ne.s32.totalorder %s176, %s178
      %p185 = scmp.eq.s32.totalorder %s79, 1
      %p186 = por %p184, %p185
      %p187 = scmp.ne.s32.totalorder %s178, %s179
      %p188 = scmp.eq.s32.totalorder %s79, 0
      %p189 = por %p187, %p188
      %p190 = scmp.ne.s32.totalorder %s178, %s179
      %p191 = scmp.eq.s32.totalorder %s80, 1
      %p192 = por %p190, %p191
      %p194 = scmp.ne.s32.totalorder %s179, %s193
      %p195 = scmp.eq.s32.totalorder %s80, 0
      %p196 = por %p194, %p195
      %s198 = sadd.s32 %s197, 1
      %p201 = scmp.eq.s32.totalorder %s74, 1
      %p202 = scmp.ne.s32.totalorder %s197, %s199
      %p203 = scmp.eq.s32.totalorder %s74, 0
      %p204 = por %p202, %p203
      %p205 = scmp.ne.s32.totalorder %s197, %s199
      %p206 = scmp.eq.s32.totalorder %s79, 1
      %p207 = por %p205, %p206
      %p208 = scmp.ne.s32.totalorder %s199, %s200
      %p209 = scmp.eq.s32.totalorder %s79, 0
      %p210 = por %p208, %p209
      %p211 = scmp.ne.s32.totalorder %s199, %s200
      %p212 = scmp.eq.s32.totalorder %s80, 1
      %p213 = por %p211, %p212
      %p215 = scmp.ne.s32.totalorder %s200, %s214
      %p216 = scmp.eq.s32.totalorder %s80, 0
      %p217 = por %p215, %p216
      %s219 = sadd.s32 %s218, 1
      %p222 = scmp.eq.s32.totalorder %s74, 1
      %p223 = scmp.ne.s32.totalorder %s218, %s220
      %p224 = scmp.eq.s32.totalorder %s74, 0
      %p225 = por %p223, %p224
      %p226 = scmp.ne.s32.totalorder %s218, %s220
      %p227 = scmp.eq.s32.totalorder %s79, 1
      %p228 = por %p226, %p227
      %p229 = scmp.ne.s32.totalorder %s220, %s221
      %p230 = scmp.eq.s32.totalorder %s79, 0
      %p231 = por %p229, %p230
      %p232 = scmp.ne.s32.totalorder %s220, %s221
      %p233 = scmp.eq.s32.totalorder %s80, 1
      %p234 = por %p232, %p233
      %p236 = scmp.ne.s32.totalorder %s221, %s235
      %p237 = scmp.eq.s32.totalorder %s80, 0
      %p238 = por %p236, %p237
      %s240 = sadd.s32 %s239, 1
      %p243 = scmp.eq.s32.totalorder %s74, 1
      %p244 = scmp.ne.s32.totalorder %s239, %s241
      %p245 = scmp.eq.s32.totalorder %s74, 0
      %p246 = por %p244, %p245
      %p247 = scmp.ne.s32.totalorder %s239, %s241
      %p248 = scmp.eq.s32.totalorder %s79, 1
      %p249 = por %p247, %p248
      %p250 = scmp.ne.s32.totalorder %s241, %s242
      %p251 = scmp.eq.s32.totalorder %s79, 0
      %p252 = por %p250, %p251
      %p253 = scmp.ne.s32.totalorder %s241, %s242
      %p254 = scmp.eq.s32.totalorder %s80, 1
      %p255 = por %p253, %p254
      %p257 = scmp.ne.s32.totalorder %s242, %s256
      %p258 = scmp.eq.s32.totalorder %s80, 0
      %p259 = por %p257, %p258
      %s261 = sadd.s32 %s260, 1
      %p264 = scmp.eq.s32.totalorder %s74, 1
      %p265 = scmp.ne.s32.totalorder %s260, %s262
      %p266 = scmp.eq.s32.totalorder %s74, 0
      %p267 = por %p265, %p266
      %p268 = scmp.ne.s32.totalorder %s260, %s262
      %p269 = scmp.eq.s32.totalorder %s79, 1
      %p270 = por %p268, %p269
      %p271 = scmp.ne.s32.totalorder %s262, %s263
      %p272 = scmp.eq.s32.totalorder %s79, 0
      %p273 = por %p271, %p272
      %p274 = scmp.ne.s32.totalorder %s262, %s263
      %p275 = scmp.eq.s32.totalorder %s80, 1
      %p276 = por %p274, %p275
      %p278 = scmp.ne.s32.totalorder %s263, %s277
      %p279 = scmp.eq.s32.totalorder %s80, 0
      %p280 = por %p278, %p279
      %s282 = sadd.s32 %s281, 1
      %p285 = scmp.eq.s32.totalorder %s74, 1
      %p286 = scmp.ne.s32.totalorder %s281, %s283
      %p287 = scmp.eq.s32.totalorder %s74, 0
      %p288 = por %p286, %p287
      %p289 = scmp.ne.s32.totalorder %s281, %s283
      %p290 = scmp.eq.s32.totalorder %s79, 1
      %p291 = por %p289, %p290
      %p292 = scmp.ne.s32.totalorder %s283, %s284
      %p293 = scmp.eq.s32.totalorder %s79, 0
      %p294 = por %p292, %p293
      %p295 = scmp.ne.s32.totalorder %s283, %s284
      %p296 = scmp.eq.s32.totalorder %s80, 1
      %p297 = por %p295, %p296
      %p299 = scmp.ne.s32.totalorder %s284, %s298
      %p300 = scmp.eq.s32.totalorder %s80, 0
      %p301 = por %p299, %p300
      %s303 = sadd.s32 %s302, 1
      %p306 = scmp.eq.s32.totalorder %s74, 1
      %p307 = scmp.ne.s32.totalorder %s302, %s304
      %p308 = scmp.eq.s32.totalorder %s74, 0
      %p309 = por %p307, %p308
      %p310 = scmp.ne.s32.totalorder %s302, %s304
      %p311 = scmp.eq.s32.totalorder %s79, 1
      %p312 = por %p310, %p311
      %p313 = scmp.ne.s32.totalorder %s304, %s305
      %p314 = scmp.eq.s32.totalorder %s79, 0
      %p315 = por %p313, %p314
      %p316 = scmp.ne.s32.totalorder %s304, %s305
      %p317 = scmp.eq.s32.totalorder %s80, 1
      %p318 = por %p316, %p317
      %p320 = scmp.ne.s32.totalorder %s305, %s319
      %p321 = scmp.eq.s32.totalorder %s80, 0
      %p322 = por %p320, %p321
      %s324 = sadd.s32 %s323, 1
      %p327 = scmp.eq.s32.totalorder %s74, 1
      %p328 = scmp.ne.s32.totalorder %s323, %s325
      %p329 = scmp.eq.s32.totalorder %s74, 0
      %p330 = por %p328, %p329
      %p331 = scmp.ne.s32.totalorder %s323, %s325
      %p332 = scmp.eq.s32.totalorder %s79, 1
      %p333 = por %p331, %p332
      %p334 = scmp.ne.s32.totalorder %s325, %s326
      %p335 = scmp.eq.s32.totalorder %s79, 0
      %p336 = por %p334, %p335
      %p337 = scmp.ne.s32.totalorder %s325, %s326
      %p338 = scmp.eq.s32.totalorder %s80, 1
      %p339 = por %p337, %p338
      %p341 = scmp.ne.s32.totalorder %s326, %s340
      %p342 = scmp.eq.s32.totalorder %s80, 0
      %p343 = por %p341, %p342
      %s345 = sadd.s32 %s344, 1
      %p348 = scmp.eq.s32.totalorder %s74, 1
      %p349 = scmp.ne.s32.totalorder %s344, %s346
      %p350 = scmp.eq.s32.totalorder %s74, 0
      %p351 = por %p349, %p350
      %p352 = scmp.ne.s32.totalorder %s344, %s346
      %p353 = scmp.eq.s32.totalorder %s79, 1
      %p354 = por %p352, %p353
      %p355 = scmp.ne.s32.totalorder %s346, %s347
      %p356 = scmp.eq.s32.totalorder %s79, 0
      %p357 = por %p355, %p356
      %p358 = scmp.ne.s32.totalorder %s346, %s347
      %p359 = scmp.eq.s32.totalorder %s80, 1
      %p360 = por %p358, %p359
      %p362 = scmp.ne.s32.totalorder %s347, %s361
      %p363 = scmp.eq.s32.totalorder %s80, 0
      %p364 = por %p362, %p363
      %s366 = sadd.s32 %s365, 1
      %p369 = scmp.eq.s32.totalorder %s74, 1
      %p370 = scmp.ne.s32.totalorder %s365, %s367
      %p371 = scmp.eq.s32.totalorder %s74, 0
      %p372 = por %p370, %p371
      %p373 = scmp.ne.s32.totalorder %s365, %s367
      %p374 = scmp.eq.s32.totalorder %s79, 1
      %p375 = por %p373, %p374
      %p376 = scmp.ne.s32.totalorder %s367, %s368
      %p377 = scmp.eq.s32.totalorder %s79, 0
      %p378 = por %p376, %p377
      %p379 = scmp.ne.s32.totalorder %s367, %s368
      %p380 = scmp.eq.s32.totalorder %s80, 1
      %p381 = por %p379, %p380
      %p383 = scmp.ne.s32.totalorder %s368, %s382
      %p384 = scmp.eq.s32.totalorder %s80, 0
      %p385 = por %p383, %p384
      %s387 = sadd.s32 %s386, 1
      %p390 = scmp.eq.s32.totalorder %s74, 1
      %p391 = scmp.ne.s32.totalorder %s386, %s388
      %p392 = scmp.eq.s32.totalorder %s74, 0
      %p393 = por %p391, %p392
      %p394 = scmp.ne.s32.totalorder %s386, %s388
      %p395 = scmp.eq.s32.totalorder %s79, 1
      %p396 = por %p394, %p395
      %p397 = scmp.ne.s32.totalorder %s388, %s389
      %p398 = scmp.eq.s32.totalorder %s79, 0
      %p399 = por %p397, %p398
      %p400 = scmp.ne.s32.totalorder %s388, %s389
      %p401 = scmp.eq.s32.totalorder %s80, 1
      %p402 = por %p400, %p401
      %p404 = scmp.ne.s32.totalorder %s389, %s403
      %p405 = scmp.eq.s32.totalorder %s80, 0
      %p406 = por %p404, %p405
      %s408 = sadd.s32 %s407, 1
      %p411 = scmp.eq.s32.totalorder %s74, 1
      %p412 = scmp.ne.s32.totalorder %s407, %s409
      %p413 = scmp.eq.s32.totalorder %s74, 0
      %p414 = por %p412, %p413
      %p415 = scmp.ne.s32.totalorder %s407, %s409
      %p416 = scmp.eq.s32.totalorder %s79, 1
      %p417 = por %p415, %p416
      %p418 = scmp.ne.s32.totalorder %s409, %s410
      %p419 = scmp.eq.s32.totalorder %s79, 0
      %p420 = por %p418, %p419
      %p421 = scmp.ne.s32.totalorder %s409, %s410
      %p422 = scmp.eq.s32.totalorder %s80, 1
      %p423 = por %p421, %p422
      %p425 = scmp.ne.s32.totalorder %s410, %s424
      %p426 = scmp.eq.s32.totalorder %s80, 0
      %p427 = por %p425, %p426
      %s429 = sadd.s32 %s428, 1
      %p432 = scmp.eq.s32.totalorder %s74, 1
      %p433 = scmp.ne.s32.totalorder %s428, %s430
      %p434 = scmp.eq.s32.totalorder %s74, 0
      %p435 = por %p433, %p434
      %p436 = scmp.ne.s32.totalorder %s428, %s430
      %p437 = scmp.eq.s32.totalorder %s79, 1
      %p438 = por %p436, %p437
      %p439 = scmp.ne.s32.totalorder %s430, %s431
      %p440 = scmp.eq.s32.totalorder %s79, 0
      %p441 = por %p439, %p440
      %p442 = scmp.ne.s32.totalorder %s430, %s431
      %p443 = scmp.eq.s32.totalorder %s80, 1
      %p444 = por %p442, %p443
      %p446 = scmp.ne.s32.totalorder %s431, %s445
      %p447 = scmp.eq.s32.totalorder %s80, 0
      %p448 = por %p446, %p447
      %s450 = sadd.s32 %s449, 1
      %p453 = scmp.eq.s32.totalorder %s74, 1
      %p454 = scmp.ne.s32.totalorder %s449, %s451
      %p455 = scmp.eq.s32.totalorder %s74, 0
      %p456 = por %p454, %p455
      %p457 = scmp.ne.s32.totalorder %s449, %s451
      %p458 = scmp.eq.s32.totalorder %s79, 1
      %p459 = por %p457, %p458
      %p460 = scmp.ne.s32.totalorder %s451, %s452
      %p461 = scmp.eq.s32.totalorder %s79, 0
      %p462 = por %p460, %p461
      %p463 = scmp.ne.s32.totalorder %s451, %s452
      %p464 = scmp.eq.s32.totalorder %s80, 1
      %p465 = por %p463, %p464
      %p467 = scmp.ne.s32.totalorder %s452, %s466
      %p468 = scmp.eq.s32.totalorder %s80, 0
      %p469 = por %p467, %p468
      %s471 = sadd.s32 %s470, 1
      %p474 = scmp.eq.s32.totalorder %s74, 1
      %p475 = scmp.ne.s32.totalorder %s470, %s472
      %p476 = scmp.eq.s32.totalorder %s74, 0
      %p477 = por %p475, %p476
      %p478 = scmp.ne.s32.totalorder %s470, %s472
      %p479 = scmp.eq.s32.totalorder %s79, 1
      %p480 = por %p478, %p479
      %p481 = scmp.ne.s32.totalorder %s472, %s473
      %p482 = scmp.eq.s32.totalorder %s79, 0
      %p483 = por %p481, %p482
      %p484 = scmp.ne.s32.totalorder %s472, %s473
      %p485 = scmp.eq.s32.totalorder %s80, 1
      %p486 = por %p484, %p485
      %p488 = scmp.ne.s32.totalorder %s473, %s487
      %p489 = scmp.eq.s32.totalorder %s80, 0
      %p490 = por %p488, %p489
      %s492 = sadd.s32 %s491, 1
      %p495 = scmp.eq.s32.totalorder %s74, 1
      %p496 = scmp.ne.s32.totalorder %s491, %s493
      %p497 = scmp.eq.s32.totalorder %s74, 0
      %p498 = por %p496, %p497
      %p499 = scmp.ne.s32.totalorder %s491, %s493
      %p500 = scmp.eq.s32.totalorder %s79, 1
      %p501 = por %p499, %p500
      %p502 = scmp.ne.s32.totalorder %s493, %s494
      %p503 = scmp.eq.s32.totalorder %s79, 0
      %p504 = por %p502, %p503
      %p505 = scmp.ne.s32.totalorder %s493, %s494
      %p506 = scmp.eq.s32.totalorder %s80, 1
      %p507 = por %p505, %p506
      %p509 = scmp.ne.s32.totalorder %s494, %s508
      %p510 = scmp.eq.s32.totalorder %s80, 0
      %p511 = por %p509, %p510
      %s513 = sadd.s32 %s512, 1
      %p516 = scmp.eq.s32.totalorder %s74, 1
      %p517 = scmp.ne.s32.totalorder %s512, %s514
      %p518 = scmp.eq.s32.totalorder %s74, 0
      %p519 = por %p517, %p518
      %p520 = scmp.ne.s32.totalorder %s512, %s514
      %p521 = scmp.eq.s32.totalorder %s79, 1
      %p522 = por %p520, %p521
      %p523 = scmp.ne.s32.totalorder %s514, %s515
      %p524 = scmp.eq.s32.totalorder %s79, 0
      %p525 = por %p523, %p524
      %p526 = scmp.ne.s32.totalorder %s514, %s515
      %p527 = scmp.eq.s32.totalorder %s80, 1
      %p528 = por %p526, %p527
      %p530 = scmp.ne.s32.totalorder %s515, %s529
      %p531 = scmp.eq.s32.totalorder %s80, 0
      %p532 = por %p530, %p531
      %s534 = sadd.s32 %s533, 1
      %p537 = scmp.eq.s32.totalorder %s74, 1
      %p538 = scmp.ne.s32.totalorder %s533, %s535
      %p539 = scmp.eq.s32.totalorder %s74, 0
      %p540 = por %p538, %p539
      %p541 = scmp.ne.s32.totalorder %s533, %s535
      %p542 = scmp.eq.s32.totalorder %s79, 1
      %p543 = por %p541, %p542
      %p544 = scmp.ne.s32.totalorder %s535, %s536
      %p545 = scmp.eq.s32.totalorder %s79, 0
      %p546 = por %p544, %p545
      %p547 = scmp.ne.s32.totalorder %s535, %s536
      %p548 = scmp.eq.s32.totalorder %s80, 1
      %p549 = por %p547, %p548
      %p551 = scmp.ne.s32.totalorder %s536, %s550
      %p552 = scmp.eq.s32.totalorder %s80, 0
      %p553 = por %p551, %p552
      %s555 = sadd.s32 %s554, 1
      %p558 = scmp.eq.s32.totalorder %s74, 1
      %p559 = scmp.ne.s32.totalorder %s554, %s556
      %p560 = scmp.eq.s32.totalorder %s74, 0
      %p561 = por %p559, %p560
      %p562 = scmp.ne.s32.totalorder %s554, %s556
      %p563 = scmp.eq.s32.totalorder %s79, 1
      %p564 = por %p562, %p563
      %p565 = scmp.ne.s32.totalorder %s556, %s557
      %p566 = scmp.eq.s32.totalorder %s79, 0
      %p567 = por %p565, %p566
      %p568 = scmp.ne.s32.totalorder %s556, %s557
      %p569 = scmp.eq.s32.totalorder %s80, 1
      %p570 = por %p568, %p569
      %p572 = scmp.ne.s32.totalorder %s557, %s571
      %p573 = scmp.eq.s32.totalorder %s80, 0
      %p574 = por %p572, %p573
      %s576 = sadd.s32 %s575, 1
      %p579 = scmp.eq.s32.totalorder %s74, 1
      %p580 = scmp.ne.s32.totalorder %s575, %s577
      %p581 = scmp.eq.s32.totalorder %s74, 0
      %p582 = por %p580, %p581
      %p583 = scmp.ne.s32.totalorder %s575, %s577
      %p584 = scmp.eq.s32.totalorder %s79, 1
      %p585 = por %p583, %p584
      %p586 = scmp.ne.s32.totalorder %s577, %s578
      %p587 = scmp.eq.s32.totalorder %s79, 0
      %p588 = por %p586, %p587
      %p589 = scmp.ne.s32.totalorder %s577, %s578
      %p590 = scmp.eq.s32.totalorder %s80, 1
      %p591 = por %p589, %p590
      %p593 = scmp.ne.s32.totalorder %s578, %s592
      %p594 = scmp.eq.s32.totalorder %s80, 0
      %p595 = por %p593, %p594
      %s597 = sadd.s32 %s596, 1
      %p600 = scmp.eq.s32.totalorder %s74, 1
      %p601 = scmp.ne.s32.totalorder %s596, %s598
      %p602 = scmp.eq.s32.totalorder %s74, 0
      %p603 = por %p601, %p602
      %p604 = scmp.ne.s32.totalorder %s596, %s598
      %p605 = scmp.eq.s32.totalorder %s79, 1
      %p606 = por %p604, %p605
      %p607 = scmp.ne.s32.totalorder %s598, %s599
      %p608 = scmp.eq.s32.totalorder %s79, 0
      %p609 = por %p607, %p608
      %p610 = scmp.ne.s32.totalorder %s598, %s599
      %p611 = scmp.eq.s32.totalorder %s80, 1
      %p612 = por %p610, %p611
      %p614 = scmp.ne.s32.totalorder %s599, %s613
      %p615 = scmp.eq.s32.totalorder %s80, 0
      %p616 = por %p614, %p615
      %s618 = sadd.s32 %s617, 1
      %p621 = scmp.eq.s32.totalorder %s74, 1
      %p622 = scmp.ne.s32.totalorder %s617, %s619
      %p623 = scmp.eq.s32.totalorder %s74, 0
      %p624 = por %p622, %p623
      %p625 = scmp.ne.s32.totalorder %s617, %s619
      %p626 = scmp.eq.s32.totalorder %s79, 1
      %p627 = por %p625, %p626
      %p628 = scmp.ne.s32.totalorder %s619, %s620
      %p629 = scmp.eq.s32.totalorder %s79, 0
      %p630 = por %p628, %p629
      %p631 = scmp.ne.s32.totalorder %s619, %s620
      %p632 = scmp.eq.s32.totalorder %s80, 1
      %p633 = por %p631, %p632
      %p635 = scmp.ne.s32.totalorder %s620, %s634
      %p636 = scmp.eq.s32.totalorder %s80, 0
      %p637 = por %p635, %p636
      %s639 = sadd.s32 %s638, 1
      %p642 = scmp.eq.s32.totalorder %s74, 1
      %p643 = scmp.ne.s32.totalorder %s638, %s640
      %p644 = scmp.eq.s32.totalorder %s74, 0
      %p645 = por %p643, %p644
      %p646 = scmp.ne.s32.totalorder %s638, %s640
      %p647 = scmp.eq.s32.totalorder %s79, 1
      %p648 = por %p646, %p647
      %p649 = scmp.ne.s32.totalorder %s640, %s641
      %p650 = scmp.eq.s32.totalorder %s79, 0
      %p651 = por %p649, %p650
      %p652 = scmp.ne.s32.totalorder %s640, %s641
      %p653 = scmp.eq.s32.totalorder %s80, 1
      %p654 = por %p652, %p653
      %p656 = scmp.ne.s32.totalorder %s641, %s655
      %p657 = scmp.eq.s32.totalorder %s80, 0
      %p658 = por %p656, %p657
      %s660 = sadd.s32 %s659, 1
      %p663 = scmp.eq.s32.totalorder %s74, 1
      %p664 = scmp.ne.s32.totalorder %s659, %s661
      %p665 = scmp.eq.s32.totalorder %s74, 0
      %p666 = por %p664, %p665
      %p667 = scmp.ne.s32.totalorder %s659, %s661
      %p668 = scmp.eq.s32.totalorder %s79, 1
      %p669 = por %p667, %p668
      %p670 = scmp.ne.s32.totalorder %s661, %s662
      %p671 = scmp.eq.s32.totalorder %s79, 0
      %p672 = por %p670, %p671
      %p673 = scmp.ne.s32.totalorder %s661, %s662
      %p674 = scmp.eq.s32.totalorder %s80, 1
      %p675 = por %p673, %p674
      %p677 = scmp.ne.s32.totalorder %s662, %s676
      %p678 = scmp.eq.s32.totalorder %s80, 0
      %p679 = por %p677, %p678
      %s681 = sadd.s32 %s680, 1
      %p684 = scmp.eq.s32.totalorder %s74, 1
      %p685 = scmp.ne.s32.totalorder %s680, %s682
      %p686 = scmp.eq.s32.totalorder %s74, 0
      %p687 = por %p685, %p686
      %p688 = scmp.ne.s32.totalorder %s680, %s682
      %p689 = scmp.eq.s32.totalorder %s79, 1
      %p690 = por %p688, %p689
      %p691 = scmp.ne.s32.totalorder %s682, %s683
      %p692 = scmp.eq.s32.totalorder %s79, 0
      %p693 = por %p691, %p692
      %p694 = scmp.ne.s32.totalorder %s682, %s683
      %p695 = scmp.eq.s32.totalorder %s80, 1
      %p696 = por %p694, %p695
      %p698 = scmp.ne.s32.totalorder %s683, %s697
      %p699 = scmp.eq.s32.totalorder %s80, 0
      %p700 = por %p698, %p699
      %s702 = sadd.s32 %s701, 1
      %p705 = scmp.eq.s32.totalorder %s74, 1
      %p706 = scmp.ne.s32.totalorder %s701, %s703
      %p707 = scmp.eq.s32.totalorder %s74, 0
      %p708 = por %p706, %p707
      %p709 = scmp.ne.s32.totalorder %s701, %s703
      %p710 = scmp.eq.s32.totalorder %s79, 1
      %p711 = por %p709, %p710
      %p712 = scmp.ne.s32.totalorder %s703, %s704
      %p713 = scmp.eq.s32.totalorder %s79, 0
      %p714 = por %p712, %p713
      %p715 = scmp.ne.s32.totalorder %s703, %s704
      %p716 = scmp.eq.s32.totalorder %s80, 1
      %p717 = por %p715, %p716
      %p719 = scmp.ne.s32.totalorder %s704, %s718
      %p720 = scmp.eq.s32.totalorder %s80, 0
      %p721 = por %p719, %p720
      %s723 = sadd.s32 %s722, 1
      %p726 = scmp.eq.s32.totalorder %s74, 1
      %p727 = scmp.ne.s32.totalorder %s722, %s724
      %p728 = scmp.eq.s32.totalorder %s74, 0
      %p729 = por %p727, %p728
      %p730 = scmp.ne.s32.totalorder %s722, %s724
      %p731 = scmp.eq.s32.totalorder %s79, 1
      %p732 = por %p730, %p731
      %p733 = scmp.ne.s32.totalorder %s724, %s725
      %p734 = scmp.eq.s32.totalorder %s79, 0
      %p735 = por %p733, %p734
      %p736 = scmp.ne.s32.totalorder %s724, %s725
      %p737 = scmp.eq.s32.totalorder %s80, 1
      %p738 = por %p736, %p737
      %p740 = scmp.ne.s32.totalorder %s725, %s739
      %p741 = scmp.eq.s32.totalorder %s80, 0
      %p742 = por %p740, %p741
      %s744 = sadd.s32 %s743, 1
      %p747 = scmp.eq.s32.totalorder %s74, 1
      %p748 = scmp.ne.s32.totalorder %s743, %s745
      %p749 = scmp.eq.s32.totalorder %s74, 0
      %p750 = por %p748, %p749
      %p751 = scmp.ne.s32.totalorder %s743, %s745
      %p752 = scmp.eq.s32.totalorder %s79, 1
      %p753 = por %p751, %p752
      %p754 = scmp.ne.s32.totalorder %s745, %s746
      %p755 = scmp.eq.s32.totalorder %s79, 0
      %p756 = por %p754, %p755
      %p757 = scmp.ne.s32.totalorder %s745, %s746
      %p758 = scmp.eq.s32.totalorder %s80, 1
      %p759 = por %p757, %p758
      %p761 = scmp.ne.s32.totalorder %s746, %s760
      %p762 = scmp.eq.s32.totalorder %s80, 0
      %p763 = por %p761, %p762
      %s764 = ssub.s32 %s74, %s81
      %p765 = scmp.eq.s32.totalorder %s764, 0
      %s767 = sadd.s32 %s766, 1
      %s768 = scalar_select %p765, %s766, %s767
      %p771 = pneg %p765
      %p772 = scmp.eq.s32.totalorder %s74, 1
      %p773 = por %p771, %p772
      %p774 = scmp.ne.s32.totalorder %s766, %s769
      %p775 = scmp.eq.s32.totalorder %s74, 0
      %p776 = por %p774, %p775
      %p777 = scmp.ne.s32.totalorder %s766, %s769
      %p778 = scmp.eq.s32.totalorder %s79, 1
      %p779 = por %p777, %p778
      %p780 = scmp.ne.s32.totalorder %s769, %s770
      %p781 = scmp.eq.s32.totalorder %s79, 0
      %p782 = por %p780, %p781
      %p783 = scmp.ne.s32.totalorder %s769, %s770
      %p784 = scmp.eq.s32.totalorder %s80, 1
      %p785 = por %p783, %p784
      %p787 = scmp.ne.s32.totalorder %s770, %s786
      %p788 = scmp.eq.s32.totalorder %s80, 0
      %p789 = por %p787, %p788
      %p790 = scmp.le.s32.totalorder 1, %s74
      %p791 = scmp.lt.s32.totalorder %s74, 3
      %p792 = pnand %p790, %p791
      %p793 = pneg %p792
      // Predicated region
      $region9: #{tpu_custom_call.1} parent=5 // pred_check
        _
      $region10: #{tpu_custom_call.1} parent=5 // pred_check_branch
        %795 = sbr.rel (%p792) target = $region12
      $region11: #{tpu_custom_call.1} parent=5 // pred_region
        %s796 = ssub.s32 %s74, 1
        // Predicated region
        $region13: #{tpu_custom_call.1} parent=11 // pred_check
          %p797 = pneg %p147
        $region14: #{tpu_custom_call.1} parent=11 // pred_check_branch
          %799 = sbr.rel (%p797) target = $region16
        $region15: #{tpu_custom_call.1} parent=11 // pred_region
          _
        $region16: #{tpu_custom_call.1} parent=11 // pred_fallthru
          _
        // Predicated region
        $region17: #{tpu_custom_call.1} parent=11 // pred_check
          %p800 = pneg %p168
        $region18: #{tpu_custom_call.1} parent=11 // pred_check_branch
          %802 = sbr.rel (%p800) target = $region20
        $region19: #{tpu_custom_call.1} parent=11 // pred_region
          _
        $region20: #{tpu_custom_call.1} parent=11 // pred_fallthru
          _
        // Predicated region
        $region21: #{tpu_custom_call.1} parent=11 // pred_check
          %p803 = pneg %p189
        $region22: #{tpu_custom_call.1} parent=11 // pred_check_branch
          %805 = sbr.rel (%p803) target = $region24
        $region23: #{tpu_custom_call.1} parent=11 // pred_region
          _
        $region24: #{tpu_custom_call.1} parent=11 // pred_fallthru
          _
        // Predicated region
        $region25: #{tpu_custom_call.1} parent=11 // pred_check
          %p806 = pneg %p210
        $region26: #{tpu_custom_call.1} parent=11 // pred_check_branch
          %808 = sbr.rel (%p806) target = $region28
        $region27: #{tpu_custom_call.1} parent=11 // pred_region
          _
        $region28: #{tpu_custom_call.1} parent=11 // pred_fallthru
          _
        // Predicated region
        $region29: #{tpu_custom_call.1} parent=11 // pred_check
          %p809 = pneg %p231
        $region30: #{tpu_custom_call.1} parent=11 // pred_check_branch
          %811 = sbr.rel (%p809) target = $region32
        $region31: #{tpu_custom_call.1} parent=11 // pred_region
          _
        $region32: #{tpu_custom_call.1} parent=11 // pred_fallthru
          _
        // Predicated region
        $region33: #{tpu_custom_call.1} parent=11 // pred_check
          %p812 = pneg %p252
        $region34: #{tpu_custom_call.1} parent=11 // pred_check_branch
          %814 = sbr.rel (%p812) target = $region36
        $region35: #{tpu_custom_call.1} parent=11 // pred_region
          _
        $region36: #{tpu_custom_call.1} parent=11 // pred_fallthru
          _
        // Predicated region
        $region37: #{tpu_custom_call.1} parent=11 // pred_check
          %p815 = pneg %p273
        $region38: #{tpu_custom_call.1} parent=11 // pred_check_branch
          %817 = sbr.rel (%p815) target = $region40
        $region39: #{tpu_custom_call.1} parent=11 // pred_region
          _
        $region40: #{tpu_custom_call.1} parent=11 // pred_fallthru
          _
        // Predicated region
        $region41: #{tpu_custom_call.1} parent=11 // pred_check
          %p818 = pneg %p294
        $region42: #{tpu_custom_call.1} parent=11 // pred_check_branch
          %820 = sbr.rel (%p818) target = $region44
        $region43: #{tpu_custom_call.1} parent=11 // pred_region
          _
        $region44: #{tpu_custom_call.1} parent=11 // pred_fallthru
          _
        // Predicated region
        $region45: #{tpu_custom_call.1} parent=11 // pred_check
          %p821 = pneg %p315
        $region46: #{tpu_custom_call.1} parent=11 // pred_check_branch
          %823 = sbr.rel (%p821) target = $region48
        $region47: #{tpu_custom_call.1} parent=11 // pred_region
          _
        $region48: #{tpu_custom_call.1} parent=11 // pred_fallthru
          _
        // Predicated region
        $region49: #{tpu_custom_call.1} parent=11 // pred_check
          %p824 = pneg %p336
        $region50: #{tpu_custom_call.1} parent=11 // pred_check_branch
          %826 = sbr.rel (%p824) target = $region52
        $region51: #{tpu_custom_call.1} parent=11 // pred_region
          _
        $region52: #{tpu_custom_call.1} parent=11 // pred_fallthru
          _
        // Predicated region
        $region53: #{tpu_custom_call.1} parent=11 // pred_check
          %p827 = pneg %p357
        $region54: #{tpu_custom_call.1} parent=11 // pred_check_branch
          %829 = sbr.rel (%p827) target = $region56
        $region55: #{tpu_custom_call.1} parent=11 // pred_region
          _
        $region56: #{tpu_custom_call.1} parent=11 // pred_fallthru
          _
        // Predicated region
        $region57: #{tpu_custom_call.1} parent=11 // pred_check
          %p830 = pneg %p378
        $region58: #{tpu_custom_call.1} parent=11 // pred_check_branch
          %832 = sbr.rel (%p830) target = $region60
        $region59: #{tpu_custom_call.1} parent=11 // pred_region
          _
        $region60: #{tpu_custom_call.1} parent=11 // pred_fallthru
          _
        // Predicated region
        $region61: #{tpu_custom_call.1} parent=11 // pred_check
          %p833 = pneg %p399
        $region62: #{tpu_custom_call.1} parent=11 // pred_check_branch
          %835 = sbr.rel (%p833) target = $region64
        $region63: #{tpu_custom_call.1} parent=11 // pred_region
          _
        $region64: #{tpu_custom_call.1} parent=11 // pred_fallthru
          _
        // Predicated region
        $region65: #{tpu_custom_call.1} parent=11 // pred_check
          %p836 = pneg %p420
        $region66: #{tpu_custom_call.1} parent=11 // pred_check_branch
          %838 = sbr.rel (%p836) target = $region68
        $region67: #{tpu_custom_call.1} parent=11 // pred_region
          _
        $region68: #{tpu_custom_call.1} parent=11 // pred_fallthru
          _
        // Predicated region
        $region69: #{tpu_custom_call.1} parent=11 // pred_check
          %p839 = pneg %p441
        $region70: #{tpu_custom_call.1} parent=11 // pred_check_branch
          %841 = sbr.rel (%p839) target = $region72
        $region71: #{tpu_custom_call.1} parent=11 // pred_region
          _
        $region72: #{tpu_custom_call.1} parent=11 // pred_fallthru
          _
        // Predicated region
        $region73: #{tpu_custom_call.1} parent=11 // pred_check
          %p842 = pneg %p462
        $region74: #{tpu_custom_call.1} parent=11 // pred_check_branch
          %844 = sbr.rel (%p842) target = $region76
        $region75: #{tpu_custom_call.1} parent=11 // pred_region
          _
        $region76: #{tpu_custom_call.1} parent=11 // pred_fallthru
          _
        // Predicated region
        $region77: #{tpu_custom_call.1} parent=11 // pred_check
          %p845 = pneg %p483
        $region78: #{tpu_custom_call.1} parent=11 // pred_check_branch
          %847 = sbr.rel (%p845) target = $region80
        $region79: #{tpu_custom_call.1} parent=11 // pred_region
          _
        $region80: #{tpu_custom_call.1} parent=11 // pred_fallthru
          _
        // Predicated region
        $region81: #{tpu_custom_call.1} parent=11 // pred_check
          %p848 = pneg %p504
        $region82: #{tpu_custom_call.1} parent=11 // pred_check_branch
          %850 = sbr.rel (%p848) target = $region84
        $region83: #{tpu_custom_call.1} parent=11 // pred_region
          _
        $region84: #{tpu_custom_call.1} parent=11 // pred_fallthru
          _
        // Predicated region
        $region85: #{tpu_custom_call.1} parent=11 // pred_check
          %p851 = pneg %p525
        $region86: #{tpu_custom_call.1} parent=11 // pred_check_branch
          %853 = sbr.rel (%p851) target = $region88
        $region87: #{tpu_custom_call.1} parent=11 // pred_region
          _
        $region88: #{tpu_custom_call.1} parent=11 // pred_fallthru
          _
        // Predicated region
        $region89: #{tpu_custom_call.1} parent=11 // pred_check
          %p854 = pneg %p546
        $region90: #{tpu_custom_call.1} parent=11 // pred_check_branch
          %856 = sbr.rel (%p854) target = $region92
        $region91: #{tpu_custom_call.1} parent=11 // pred_region
          _
        $region92: #{tpu_custom_call.1} parent=11 // pred_fallthru
          _
        // Predicated region
        $region93: #{tpu_custom_call.1} parent=11 // pred_check
          %p857 = pneg %p567
        $region94: #{tpu_custom_call.1} parent=11 // pred_check_branch
          %859 = sbr.rel (%p857) target = $region96
        $region95: #{tpu_custom_call.1} parent=11 // pred_region
          _
        $region96: #{tpu_custom_call.1} parent=11 // pred_fallthru
          _
        // Predicated region
        $region97: #{tpu_custom_call.1} parent=11 // pred_check
          %p860 = pneg %p588
        $region98: #{tpu_custom_call.1} parent=11 // pred_check_branch
          %862 = sbr.rel (%p860) target = $region100
        $region99: #{tpu_custom_call.1} parent=11 // pred_region
          _
        $region100: #{tpu_custom_call.1} parent=11 // pred_fallthru
          _
        // Predicated region
        $region101: #{tpu_custom_call.1} parent=11 // pred_check
          %p863 = pneg %p609
        $region102: #{tpu_custom_call.1} parent=11 // pred_check_branch
          %865 = sbr.rel (%p863) target = $region104
        $region103: #{tpu_custom_call.1} parent=11 // pred_region
          _
        $region104: #{tpu_custom_call.1} parent=11 // pred_fallthru
          _
        // Predicated region
        $region105: #{tpu_custom_call.1} parent=11 // pred_check
          %p866 = pneg %p630
        $region106: #{tpu_custom_call.1} parent=11 // pred_check_branch
          %868 = sbr.rel (%p866) target = $region108
        $region107: #{tpu_custom_call.1} parent=11 // pred_region
          _
        $region108: #{tpu_custom_call.1} parent=11 // pred_fallthru
          _
        // Predicated region
        $region109: #{tpu_custom_call.1} parent=11 // pred_check
          %p869 = pneg %p651
        $region110: #{tpu_custom_call.1} parent=11 // pred_check_branch
          %871 = sbr.rel (%p869) target = $region112
        $region111: #{tpu_custom_call.1} parent=11 // pred_region
          _
        $region112: #{tpu_custom_call.1} parent=11 // pred_fallthru
          _
        // Predicated region
        $region113: #{tpu_custom_call.1} parent=11 // pred_check
          %p872 = pneg %p672
        $region114: #{tpu_custom_call.1} parent=11 // pred_check_branch
          %874 = sbr.rel (%p872) target = $region116
        $region115: #{tpu_custom_call.1} parent=11 // pred_region
          _
        $region116: #{tpu_custom_call.1} parent=11 // pred_fallthru
          _
        // Predicated region
        $region117: #{tpu_custom_call.1} parent=11 // pred_check
          %p875 = pneg %p693
        $region118: #{tpu_custom_call.1} parent=11 // pred_check_branch
          %877 = sbr.rel (%p875) target = $region120
        $region119: #{tpu_custom_call.1} parent=11 // pred_region
          _
        $region120: #{tpu_custom_call.1} parent=11 // pred_fallthru
          _
        // Predicated region
        $region121: #{tpu_custom_call.1} parent=11 // pred_check
          %p878 = pneg %p714
        $region122: #{tpu_custom_call.1} parent=11 // pred_check_branch
          %880 = sbr.rel (%p878) target = $region124
        $region123: #{tpu_custom_call.1} parent=11 // pred_region
          _
        $region124: #{tpu_custom_call.1} parent=11 // pred_fallthru
          _
        // Predicated region
        $region125: #{tpu_custom_call.1} parent=11 // pred_check
          %p881 = pneg %p735
        $region126: #{tpu_custom_call.1} parent=11 // pred_check_branch
          %883 = sbr.rel (%p881) target = $region128
        $region127: #{tpu_custom_call.1} parent=11 // pred_region
          _
        $region128: #{tpu_custom_call.1} parent=11 // pred_fallthru
          _
        // Predicated region
        $region129: #{tpu_custom_call.1} parent=11 // pred_check
          %p884 = pneg %p756
        $region130: #{tpu_custom_call.1} parent=11 // pred_check_branch
          %886 = sbr.rel (%p884) target = $region132
        $region131: #{tpu_custom_call.1} parent=11 // pred_region
          _
        $region132: #{tpu_custom_call.1} parent=11 // pred_fallthru
          _
      $region12: #{tpu_custom_call.1} parent=5 // pred_fallthru
        _
      %p887 = scmp.lt.s32.totalorder %s74, 2
      // Predicated region
      $region133: #{tpu_custom_call.1} parent=5 // pred_check
        %p888 = pneg %p887
      $region134: #{tpu_custom_call.1} parent=5 // pred_check_branch
        %890 = sbr.rel (%p888) target = $region136
      $region135: #{tpu_custom_call.1} parent=5 // pred_region
        // Predicated region
        $region137: #{tpu_custom_call.1} parent=135 // pred_check
          %p891 = pneg %p94
        $region138: #{tpu_custom_call.1} parent=135 // pred_check_branch
          %893 = sbr.rel (%p891) target = $region140
        $region139: #{tpu_custom_call.1} parent=135 // pred_region
          %p894 = scmp.lt.s32.totalorder %s74, 1
          %s895 = scalar_select %p894, %s74, 1
          %s896 = smul.addr %s895, 16
          %s897 = smul.addr %s896, 8
          %s898 = scalar_lea.vmem %s1, %s897
        $region140: #{tpu_custom_call.1} parent=135 // pred_fallthru
          _
        // Predicated region
        $region141: #{tpu_custom_call.1} parent=135 // pred_check
          %p899 = pneg %p120
        $region142: #{tpu_custom_call.1} parent=135 // pred_check_branch
          %901 = sbr.rel (%p899) target = $region144
        $region143: #{tpu_custom_call.1} parent=135 // pred_region
          %p902 = scmp.lt.s32.totalorder %s74, 1
          %s903 = scalar_select %p902, %s74, 1
          %s904 = smul.addr %s903, 8
          %s905 = scalar_lea.vmem %s3, %s904
        $region144: #{tpu_custom_call.1} parent=135 // pred_fallthru
          _
      $region136: #{tpu_custom_call.1} parent=5 // pred_fallthru
        _
      %p906 = scmp.le.s32.totalorder 1, %s74
      %p907 = scmp.lt.s32.totalorder %s74, 3
      %p908 = pnand %p906, %p907
      %p909 = pneg %p908
      // Predicated region
      $region145: #{tpu_custom_call.1} parent=5 // pred_check
        _
      $region146: #{tpu_custom_call.1} parent=5 // pred_check_branch
        %911 = sbr.rel (%p908) target = $region148
      $region147: #{tpu_custom_call.1} parent=5 // pred_region
        %s912 = ssub.s32 %s74, 1
        %p913 = scmp.lt.s32.totalorder %s79, 1
        %s914 = scalar_select %p913, %s79, 1
        %s915 = smul.addr %s914, 16
        %s916 = smul.addr %s915, 8
        %s917 = scalar_lea.vmem %s1, %s916
        %p918 = pneg %p100
        %p919 = pneg %p97
        %p920 = scmp.lt.s32.totalorder %s79, 1
        %s921 = scalar_select %p920, %s79, 1
        %s922 = smul.addr %s921, 8
        %s923 = scalar_lea.vmem %s3, %s922
        %p924 = pneg %p126
        %p925 = pneg %p123
        %p926 = pneg %p147
        %p927 = pneg %p144
        %p928 = pneg %p168
        %p929 = pneg %p165
        %p930 = pneg %p189
        %p931 = pneg %p186
        %p932 = pneg %p210
        %p933 = pneg %p207
        %p934 = pneg %p231
        %p935 = pneg %p228
        %p936 = pneg %p252
        %p937 = pneg %p249
        %p938 = pneg %p273
        %p939 = pneg %p270
        %p940 = pneg %p294
        %p941 = pneg %p291
        %p942 = pneg %p315
        %p943 = pneg %p312
        %p944 = pneg %p336
        %p945 = pneg %p333
        %p946 = pneg %p357
        %p947 = pneg %p354
        %p948 = pneg %p378
        %p949 = pneg %p375
        %p950 = pneg %p399
        %p951 = pneg %p396
        %p952 = pneg %p420
        %p953 = pneg %p417
        %p954 = pneg %p441
        %p955 = pneg %p438
        %p956 = pneg %p462
        %p957 = pneg %p459
        %p958 = pneg %p483
        %p959 = pneg %p480
        %p960 = pneg %p504
        %p961 = pneg %p501
        %p962 = pneg %p525
        %p963 = pneg %p522
        %p964 = pneg %p546
        %p965 = pneg %p543
        %p966 = pneg %p567
        %p967 = pneg %p564
        %p968 = pneg %p588
        %p969 = pneg %p585
        %p970 = pneg %p609
        %p971 = pneg %p606
        %p972 = pneg %p630
        %p973 = pneg %p627
        %p974 = pneg %p651
        %p975 = pneg %p648
        %p976 = pneg %p672
        %p977 = pneg %p669
        %p978 = pneg %p693
        %p979 = pneg %p690
        %p980 = pneg %p714
        %p981 = pneg %p711
        %p982 = pneg %p735
        %p983 = pneg %p732
        %p984 = pneg %p756
        %p985 = pneg %p753
        %p986 = pneg %p782
        %p987 = pneg %p779
        %s988 = sand.u32 %s769, 1
        %s989 = scalar_lea.sflag [#allocation7], %s988
        %s990 = sand.u32 %s769, 1
        %s991 = scalar_lea.vmem [#allocation6], %s990
        %p992 = scmp.lt.s32.totalorder %s79, 1
        %s993 = scalar_select %p992, %s79, 1
        %s994 = smul.addr %s993, 16
        %s995 = smul.addr %s994, 8
        %s996 = scalar_lea.vmem %s1, %s995
        %p997 = scmp.lt.s32.totalorder %s79, 1
        %s998 = scalar_select %p997, %s79, 1
        %s999 = smul.addr %s998, 8
        %s1000 = scalar_lea.vmem %s3, %s999
        %v1002 = vld [vmem:[%s996] sm:$0xff]
        %v1003 = vld [vmem:[%s996 + $0x8] sm:$0xff]
        %v1004 = vld [vmem:[%s996 + $0x10] sm:$0xff]
        %v1005 = vld [vmem:[%s996 + $0x18] sm:$0xff]
        %v1006 = vld [vmem:[%s996 + $0x20] sm:$0xff]
        %v1007 = vld [vmem:[%s996 + $0x28] sm:$0xff]
        %v1008 = vld [vmem:[%s996 + $0x30] sm:$0xff]
        %v1009 = vld [vmem:[%s996 + $0x38] sm:$0xff]
        %v1010 = vld [vmem:[%s996 + $0x40] sm:$0xff]
        %v1011 = vld [vmem:[%s996 + $0x48] sm:$0xff]
        %v1012 = vld [vmem:[%s996 + $0x50] sm:$0xff]
        %v1013 = vld [vmem:[%s996 + $0x58] sm:$0xff]
        %v1014 = vld [vmem:[%s996 + $0x60] sm:$0xff]
        %v1015 = vld [vmem:[%s996 + $0x68] sm:$0xff]
        %v1016 = vld [vmem:[%s996 + $0x70] sm:$0xff]
        %v1017 = vld [vmem:[%s996 + $0x78] sm:$0xff]
        %v1018 = vpack.c.bf16 %v1003, %v1002
        %v1019 = vpack.c.bf16 %v1005, %v1004
        %v1020 = vpack.c.bf16 %v1007, %v1006
        %v1021 = vpack.c.bf16 %v1009, %v1008
        %v1022 = vpack.c.bf16 %v1011, %v1010
        %v1023 = vpack.c.bf16 %v1013, %v1012
        %v1024 = vpack.c.bf16 %v1015, %v1014
        %v1025 = vpack.c.bf16 %v1017, %v1016
        %v1026 = vld [vmem:[%s5] sm:$0x7]
        %v1027 = vld [vmem:[%s7] sm:$0x1]
        %v1029 = vperm.slane %v1027, 0
        %vm1031 = vcmask 48128
        %v1033 = vsel %vm1031, %v1018, 0
        %v1036 = vsel %vm1031, %v1019, 0
        %v1039 = vsel %vm1031, %v1020, 0
        %v1042 = vsel %vm1031, %v1021, 0
        %v1045 = vsel %vm1031, %v1022, 0
        %v1048 = vsel %vm1031, %v1023, 0
        %v1051 = vsel %vm1031, %v1024, 0
        %v1054 = vsel %vm1031, %v1025, 0
        %vm1056 = vcmask 1042432
        %v1058 = vsel %vm1056, %v1026, 0
        %1060 = vmatpush.bf16.msra.mxu0 0
        %1061 = vmatpush.bf16.msra.mxu0 0
        %1062 = vmatpush.bf16.msra.mxu0 0
        %1063 = vmatpush.bf16.msra.mxu0 0
        %1064 = vmatpush.bf16.msra.mxu0 0
        %1065 = vmatpush.bf16.msra.mxu0 0
        %1066 = vmatpush.bf16.msra.mxu0 0
        %1067 = vmatpush.bf16.msra.mxu0 %v1058
        %1068 = vmatmul.bf16.gmra.mxu0 %v1033
        %v1069 = vpop.f32.mrf.mxu0
        %v1070 = vadd.f32 %v1029, %v1069
        %v1071 = vpop.f32.mrf.mxu0
        %v1072 = vadd.f32 %v1029, %v1071
        %1073 = vmatmul.bf16.gmra.mxu0 %v1036
        %v1074 = vpop.f32.mrf.mxu0
        %v1075 = vadd.f32 %v1029, %v1074
        %v1076 = vpop.f32.mrf.mxu0
        %v1077 = vadd.f32 %v1029, %v1076
        %1078 = vmatmul.bf16.gmra.mxu0 %v1039
        %v1079 = vpop.f32.mrf.mxu0
        %v1080 = vadd.f32 %v1029, %v1079
        %v1081 = vpop.f32.mrf.mxu0
        %v1082 = vadd.f32 %v1029, %v1081
        %1083 = vmatmul.bf16.gmra.mxu0 %v1042
        %v1084 = vpop.f32.mrf.mxu0
        %v1085 = vadd.f32 %v1029, %v1084
        %v1086 = vpop.f32.mrf.mxu0
        %v1087 = vadd.f32 %v1029, %v1086
        %1088 = vmatmul.bf16.gmra.mxu0 %v1045
        %v1089 = vpop.f32.mrf.mxu0
        %v1090 = vadd.f32 %v1029, %v1089
        %v1091 = vpop.f32.mrf.mxu0
        %v1092 = vadd.f32 %v1029, %v1091
        %1093 = vmatmul.bf16.gmra.mxu0 %v1048
        %v1094 = vpop.f32.mrf.mxu0
        %v1095 = vadd.f32 %v1029, %v1094
        %v1096 = vpop.f32.mrf.mxu0
        %v1097 = vadd.f32 %v1029, %v1096
        %1098 = vmatmul.bf16.gmra.mxu0 %v1051
        %v1099 = vpop.f32.mrf.mxu0
        %v1100 = vadd.f32 %v1029, %v1099
        %v1101 = vpop.f32.mrf.mxu0
        %v1102 = vadd.f32 %v1029, %v1101
        %1103 = vmatmul.bf16.gmra.mxu0 %v1054
        %v1104 = vpop.f32.mrf.mxu0
        %v1105 = vadd.f32 %v1029, %v1104
        %v1106 = vpop.f32.mrf.mxu0
        %v1107 = vadd.f32 %v1029, %v1106
        %1108 = vdwg.mxu0
        %v1109 = vmax.f32 %v1070, 0.0
        %v1110 = vmax.f32 %v1072, 0.0
        %v1111 = vmax.f32 %v1075, 0.0
        %v1112 = vmax.f32 %v1077, 0.0
        %v1113 = vmax.f32 %v1080, 0.0
        %v1114 = vmax.f32 %v1082, 0.0
        %v1115 = vmax.f32 %v1085, 0.0
        %v1116 = vmax.f32 %v1087, 0.0
        %v1117 = vmax.f32 %v1090, 0.0
        %v1118 = vmax.f32 %v1092, 0.0
        %v1119 = vmax.f32 %v1095, 0.0
        %v1120 = vmax.f32 %v1097, 0.0
        %v1121 = vmax.f32 %v1100, 0.0
        %v1122 = vmax.f32 %v1102, 0.0
        %v1123 = vmax.f32 %v1105, 0.0
        %v1124 = vmax.f32 %v1107, 0.0
        %v1125 = vpack.c.bf16 %v1110, %v1109
        %v1126 = vpack.c.bf16 %v1112, %v1111
        %v1127 = vpack.c.bf16 %v1114, %v1113
        %v1128 = vpack.c.bf16 %v1116, %v1115
        %v1129 = vpack.c.bf16 %v1118, %v1117
        %v1130 = vpack.c.bf16 %v1120, %v1119
        %v1131 = vpack.c.bf16 %v1122, %v1121
        %v1132 = vpack.c.bf16 %v1124, %v1123
        %v1133 = vld [vmem:[%s9] sm:$0xf]
        %v1134 = vld [vmem:[%s9 + $0x4] sm:$0xf]
        %v1135 = vld [vmem:[%s9 + $0x8] sm:$0xf]
        %v1136 = vld [vmem:[%s9 + $0xc] sm:$0xf]
        %v1137 = vld [vmem:[%s11] sm:$0x1]
        %v1139 = vperm.slane %v1137, 0
        %v1145 = vunpack.c.l.b16 %v1133
        %v1146 = vunpack.c.l.b16 %v1134
        %v1147 = vunpack.c.l.b16 %v1135
        %v1148 = vunpack.c.l.b16 %v1136
        %v1149 = vpack.c.b16 %v1146, %v1145
        %v1150 = vpack.c.b16 %v1148, %v1147
        %vm1153 = vcmask 261120
        %v1155 = vsel %vm1153, %v1125, 0
        %v1158 = vsel %vm1153, %v1126, 0
        %v1161 = vsel %vm1153, %v1127, 0
        %v1164 = vsel %vm1153, %v1128, 0
        %v1167 = vsel %vm1153, %v1129, 0
        %v1170 = vsel %vm1153, %v1130, 0
        %v1173 = vsel %vm1153, %v1131, 0
        %v1176 = vsel %vm1153, %v1132, 0
        %1178 = vmatpush.bf16.msra.mxu0 0
        %1179 = vmatpush.bf16.msra.mxu0 0
        %1180 = vmatpush.bf16.msra.mxu0 0
        %1181 = vmatpush.bf16.msra.mxu0 0
        %1182 = vmatpush.bf16.msra.mxu0 0
        %1183 = vmatpush.bf16.msra.mxu0 0
        %1184 = vmatpush.bf16.msra.mxu0 %v1150
        %1185 = vmatpush.bf16.msra.mxu0 %v1149
        %1186 = vmatmul.bf16.gmra.mxu0 %v1155
        %v1187 = vpop.f32.mrf.mxu0
        %v1188 = vadd.f32 %v1139, %v1187
        %v1189 = vpop.f32.mrf.mxu0
        %v1190 = vadd.f32 %v1139, %v1189
        %1191 = vmatmul.bf16.gmra.mxu0 %v1158
        %v1192 = vpop.f32.mrf.mxu0
        %v1193 = vadd.f32 %v1139, %v1192
        %v1194 = vpop.f32.mrf.mxu0
        %v1195 = vadd.f32 %v1139, %v1194
        %1196 = vmatmul.bf16.gmra.mxu0 %v1161
        %v1197 = vpop.f32.mrf.mxu0
        %v1198 = vadd.f32 %v1139, %v1197
        %v1199 = vpop.f32.mrf.mxu0
        %v1200 = vadd.f32 %v1139, %v1199
        %1201 = vmatmul.bf16.gmra.mxu0 %v1164
        %v1202 = vpop.f32.mrf.mxu0
        %v1203 = vadd.f32 %v1139, %v1202
        %v1204 = vpop.f32.mrf.mxu0
        %v1205 = vadd.f32 %v1139, %v1204
        %1206 = vmatmul.bf16.gmra.mxu0 %v1167
        %v1207 = vpop.f32.mrf.mxu0
        %v1208 = vadd.f32 %v1139, %v1207
        %v1209 = vpop.f32.mrf.mxu0
        %v1210 = vadd.f32 %v1139, %v1209
        %1211 = vmatmul.bf16.gmra.mxu0 %v1170
        %v1212 = vpop.f32.mrf.mxu0
        %v1213 = vadd.f32 %v1139, %v1212
        %v1214 = vpop.f32.mrf.mxu0
        %v1215 = vadd.f32 %v1139, %v1214
        %1216 = vmatmul.bf16.gmra.mxu0 %v1173
        %v1217 = vpop.f32.mrf.mxu0
        %v1218 = vadd.f32 %v1139, %v1217
        %v1219 = vpop.f32.mrf.mxu0
        %v1220 = vadd.f32 %v1139, %v1219
        %1221 = vmatmul.bf16.gmra.mxu0 %v1176
        %v1222 = vpop.f32.mrf.mxu0
        %v1223 = vadd.f32 %v1139, %v1222
        %v1224 = vpop.f32.mrf.mxu0
        %v1225 = vadd.f32 %v1139, %v1224
        %1226 = vdwg.mxu0
        %vm1227 = vcmask 523264
        %v1228 = vsel %vm1227, %v1188, -inf
        %v1229 = vsel %vm1227, %v1190, -inf
        %v1230 = vmax.f32 %v1228, %v1229
        %v1231 = vrot.slane %v1230, 4
        %v1232 = vmax.f32 %v1230, %v1231
        %v1233 = vrot.slane %v1232, 2
        %v1234 = vmax.f32 %v1232, %v1233
        %v1235 = vrot.slane %v1234, 1
        %v1236 = vmax.f32 %v1234, %v1235
        %v1237 = vsel %vm1227, %v1193, -inf
        %v1238 = vsel %vm1227, %v1195, -inf
        %v1239 = vmax.f32 %v1237, %v1238
        %v1240 = vrot.slane %v1239, 4
        %v1241 = vmax.f32 %v1239, %v1240
        %v1242 = vrot.slane %v1241, 2
        %v1243 = vmax.f32 %v1241, %v1242
        %v1244 = vrot.slane %v1243, 1
        %v1245 = vmax.f32 %v1243, %v1244
        %v1246 = vsel %vm1227, %v1198, -inf
        %v1247 = vsel %vm1227, %v1200, -inf
        %v1248 = vmax.f32 %v1246, %v1247
        %v1249 = vrot.slane %v1248, 4
        %v1250 = vmax.f32 %v1248, %v1249
        %v1251 = vrot.slane %v1250, 2
        %v1252 = vmax.f32 %v1250, %v1251
        %v1253 = vrot.slane %v1252, 1
        %v1254 = vmax.f32 %v1252, %v1253
        %v1255 = vsel %vm1227, %v1203, -inf
        %v1256 = vsel %vm1227, %v1205, -inf
        %v1257 = vmax.f32 %v1255, %v1256
        %v1258 = vrot.slane %v1257, 4
        %v1259 = vmax.f32 %v1257, %v1258
        %v1260 = vrot.slane %v1259, 2
        %v1261 = vmax.f32 %v1259, %v1260
        %v1262 = vrot.slane %v1261, 1
        %v1263 = vmax.f32 %v1261, %v1262
        %v1264 = vsel %vm1227, %v1208, -inf
        %v1265 = vsel %vm1227, %v1210, -inf
        %v1266 = vmax.f32 %v1264, %v1265
        %v1267 = vrot.slane %v1266, 4
        %v1268 = vmax.f32 %v1266, %v1267
        %v1269 = vrot.slane %v1268, 2
        %v1270 = vmax.f32 %v1268, %v1269
        %v1271 = vrot.slane %v1270, 1
        %v1272 = vmax.f32 %v1270, %v1271
        %v1273 = vsel %vm1227, %v1213, -inf
        %v1274 = vsel %vm1227, %v1215, -inf
        %v1275 = vmax.f32 %v1273, %v1274
        %v1276 = vrot.slane %v1275, 4
        %v1277 = vmax.f32 %v1275, %v1276
        %v1278 = vrot.slane %v1277, 2
        %v1279 = vmax.f32 %v1277, %v1278
        %v1280 = vrot.slane %v1279, 1
        %v1281 = vmax.f32 %v1279, %v1280
        %v1282 = vsel %vm1227, %v1218, -inf
        %v1283 = vsel %vm1227, %v1220, -inf
        %v1284 = vmax.f32 %v1282, %v1283
        %v1285 = vrot.slane %v1284, 4
        %v1286 = vmax.f32 %v1284, %v1285
        %v1287 = vrot.slane %v1286, 2
        %v1288 = vmax.f32 %v1286, %v1287
        %v1289 = vrot.slane %v1288, 1
        %v1290 = vmax.f32 %v1288, %v1289
        %v1291 = vsel %vm1227, %v1223, -inf
        %v1292 = vsel %vm1227, %v1225, -inf
        %v1293 = vmax.f32 %v1291, %v1292
        %v1294 = vrot.slane %v1293, 4
        %v1295 = vmax.f32 %v1293, %v1294
        %v1296 = vrot.slane %v1295, 2
        %v1297 = vmax.f32 %v1295, %v1296
        %v1298 = vrot.slane %v1297, 1
        %v1299 = vmax.f32 %v1297, %v1298
        %v1300 = vpack.c.bf16 %v1236, %v1236
        %v1301 = vpack.c.bf16 %v1245, %v1245
        %v1302 = vpack.c.bf16 %v1254, %v1254
        %v1303 = vpack.c.bf16 %v1263, %v1263
        %v1304 = vpack.c.bf16 %v1272, %v1272
        %v1305 = vpack.c.bf16 %v1281, %v1281
        %v1306 = vpack.c.bf16 %v1290, %v1290
        %v1307 = vpack.c.bf16 %v1299, %v1299
        %v1308 = vld [vmem:[%s13] sm:$0xf]
        %v1309 = vld [vmem:[%s13 + $0x4] sm:$0xf]
        %v1310 = vld [vmem:[%s13 + $0x8] sm:$0xf]
        %v1311 = vld [vmem:[%s13 + $0xc] sm:$0xf]
        %v1312 = vld [vmem:[%s13 + $0x10] sm:$0xf]
        %v1313 = vld [vmem:[%s13 + $0x14] sm:$0xf]
        %v1314 = vld [vmem:[%s13 + $0x18] sm:$0xf]
        %v1315 = vld [vmem:[%s13 + $0x1c] sm:$0xf]
        %v1324 = vunpack.c.l.b16 %v1300
        %v1325 = vunpack.c.l.b16 %v1301
        %v1326 = vunpack.c.l.b16 %v1302
        %v1327 = vunpack.c.l.b16 %v1303
        %v1328 = vunpack.c.l.b16 %v1304
        %v1329 = vunpack.c.l.b16 %v1305
        %v1330 = vunpack.c.l.b16 %v1306
        %v1331 = vunpack.c.l.b16 %v1307
        %vm1332 = vcmask 1041409
        %v1333 = vsel %vm1332, %v1325, %v1324
        %vm1334 = vcmask 1042434
        %v1335 = vsel %vm1334, %v1326, %v1333
        %vm1336 = vcmask 1043459
        %v1337 = vsel %vm1336, %v1327, %v1335
        %vm1338 = vcmask 1044484
        %v1339 = vsel %vm1338, %v1328, %v1337
        %vm1340 = vcmask 1045509
        %v1341 = vsel %vm1340, %v1329, %v1339
        %vm1342 = vcmask 1046534
        %v1343 = vsel %vm1342, %v1330, %v1341
        %vm1344 = vcmask 1047559
        %v1345 = vsel %vm1344, %v1331, %v1343
        %v1346 = vpack.c.b16 %v1345, %v1345
        %v1355 = vunpack.c.l.b16 %v1308
        %v1356 = vunpack.c.l.b16 %v1309
        %v1357 = vunpack.c.l.b16 %v1310
        %v1358 = vunpack.c.l.b16 %v1311
        %v1359 = vunpack.c.l.b16 %v1312
        %v1360 = vunpack.c.l.b16 %v1313
        %v1361 = vunpack.c.l.b16 %v1314
        %v1362 = vunpack.c.l.b16 %v1315
        %v1363 = vpack.c.b16 %v1356, %v1355
        %v1364 = vpack.c.b16 %v1358, %v1357
        %v1365 = vpack.c.b16 %v1360, %v1359
        %v1366 = vpack.c.b16 %v1362, %v1361
        %v1372 = vsel %vm1227, %v1346, 0
        %1374 = vmatpush.bf16.msra.mxu0 0
        %1375 = vmatpush.bf16.msra.mxu0 0
        %1376 = vmatpush.bf16.msra.mxu0 0
        %1377 = vmatpush.bf16.msra.mxu0 0
        %1378 = vmatpush.bf16.msra.mxu0 %v1366
        %1379 = vmatpush.bf16.msra.mxu0 %v1365
        %1380 = vmatpush.bf16.msra.mxu0 %v1364
        %1381 = vmatpush.bf16.msra.mxu0 %v1363
        %1382 = vmatmul.bf16.gmra.mxu0 %v1372
        %v1383 = vpop.f32.mrf.mxu0
        %v1384 = vadd.f32 0.0, %v1383
        %v1385 = vpop.f32.mrf.mxu0
        %1386 = vdwg.mxu0
        %v1387 = vpack.c.bf16 %v1190, %v1188
        %v1388 = vpack.c.bf16 %v1195, %v1193
        %v1389 = vpack.c.bf16 %v1200, %v1198
        %v1390 = vpack.c.bf16 %v1205, %v1203
        %v1391 = vpack.c.bf16 %v1210, %v1208
        %v1392 = vpack.c.bf16 %v1215, %v1213
        %v1393 = vpack.c.bf16 %v1220, %v1218
        %v1394 = vpack.c.bf16 %v1225, %v1223
        %v1395 = vld [vmem:[%s15] sm:$0xf]
        %v1396 = vld [vmem:[%s15 + $0x4] sm:$0xf]
        %v1397 = vld [vmem:[%s15 + $0x8] sm:$0xf]
        %v1398 = vld [vmem:[%s15 + $0xc] sm:$0xf]
        %v1399 = vld [vmem:[%s15 + $0x10] sm:$0xf]
        %v1400 = vld [vmem:[%s15 + $0x14] sm:$0xf]
        %v1401 = vld [vmem:[%s15 + $0x18] sm:$0xf]
        %v1402 = vld [vmem:[%s15 + $0x1c] sm:$0xf]
        %v1411 = vunpack.c.l.b16 %v1395
        %v1412 = vunpack.c.l.b16 %v1396
        %v1413 = vunpack.c.l.b16 %v1397
        %v1414 = vunpack.c.l.b16 %v1398
        %v1415 = vunpack.c.l.b16 %v1399
        %v1416 = vunpack.c.l.b16 %v1400
        %v1417 = vunpack.c.l.b16 %v1401
        %v1418 = vunpack.c.l.b16 %v1402
        %v1419 = vpack.c.b16 %v1412, %v1411
        %v1420 = vpack.c.b16 %v1414, %v1413
        %v1421 = vpack.c.b16 %v1416, %v1415
        %v1422 = vpack.c.b16 %v1418, %v1417
        %v1428 = vsel %vm1227, %v1387, 0
        %v1431 = vsel %vm1227, %v1388, 0
        %v1434 = vsel %vm1227, %v1389, 0
        %v1437 = vsel %vm1227, %v1390, 0
        %v1440 = vsel %vm1227, %v1391, 0
        %v1443 = vsel %vm1227, %v1392, 0
        %v1446 = vsel %vm1227, %v1393, 0
        %v1449 = vsel %vm1227, %v1394, 0
        %1451 = vmatpush.bf16.msra.mxu0 0
        %1452 = vmatpush.bf16.msra.mxu0 0
        %1453 = vmatpush.bf16.msra.mxu0 0
        %1454 = vmatpush.bf16.msra.mxu0 0
        %1455 = vmatpush.bf16.msra.mxu0 %v1422
        %1456 = vmatpush.bf16.msra.mxu0 %v1421
        %1457 = vmatpush.bf16.msra.mxu0 %v1420
        %1458 = vmatpush.bf16.msra.mxu0 %v1419
        %1459 = vmatmul.bf16.gmra.mxu0 %v1428
        %v1460 = vpop.f32.mrf.mxu0
        %v1461 = vadd.f32 0.0, %v1460
        %v1462 = vpop.f32.mrf.mxu0
        %v1463 = vadd.f32 0.0, %v1462
        %1464 = vmatmul.bf16.gmra.mxu0 %v1431
        %v1465 = vpop.f32.mrf.mxu0
        %v1466 = vadd.f32 0.0, %v1465
        %v1467 = vpop.f32.mrf.mxu0
        %v1468 = vadd.f32 0.0, %v1467
        %1469 = vmatmul.bf16.gmra.mxu0 %v1434
        %v1470 = vpop.f32.mrf.mxu0
        %v1471 = vadd.f32 0.0, %v1470
        %v1472 = vpop.f32.mrf.mxu0
        %v1473 = vadd.f32 0.0, %v1472
        %1474 = vmatmul.bf16.gmra.mxu0 %v1437
        %v1475 = vpop.f32.mrf.mxu0
        %v1476 = vadd.f32 0.0, %v1475
        %v1477 = vpop.f32.mrf.mxu0
        %v1478 = vadd.f32 0.0, %v1477
        %1479 = vmatmul.bf16.gmra.mxu0 %v1440
        %v1480 = vpop.f32.mrf.mxu0
        %v1481 = vadd.f32 0.0, %v1480
        %v1482 = vpop.f32.mrf.mxu0
        %v1483 = vadd.f32 0.0, %v1482
        %1484 = vmatmul.bf16.gmra.mxu0 %v1443
        %v1485 = vpop.f32.mrf.mxu0
        %v1486 = vadd.f32 0.0, %v1485
        %v1487 = vpop.f32.mrf.mxu0
        %v1488 = vadd.f32 0.0, %v1487
        %1489 = vmatmul.bf16.gmra.mxu0 %v1446
        %v1490 = vpop.f32.mrf.mxu0
        %v1491 = vadd.f32 0.0, %v1490
        %v1492 = vpop.f32.mrf.mxu0
        %v1493 = vadd.f32 0.0, %v1492
        %1494 = vmatmul.bf16.gmra.mxu0 %v1449
        %v1495 = vpop.f32.mrf.mxu0
        %v1496 = vadd.f32 0.0, %v1495
        %v1497 = vpop.f32.mrf.mxu0
        %v1498 = vadd.f32 0.0, %v1497
        %1499 = vdwg.mxu0
        %v1501 = vrot.slane %v1384, 1
        %v1502 = vrot.slane %v1384, 2
        %v1503 = vrot.slane %v1384, 3
        %v1504 = vrot.slane %v1384, 4
        %v1505 = vrot.slane %v1384, 5
        %v1506 = vrot.slane %v1384, 6
        %v1507 = vrot.slane %v1384, 7
        %v1508 = vperm.slane %v1384, 0
        %v1509 = vperm.slane %v1501, 0
        %v1510 = vperm.slane %v1502, 0
        %v1511 = vperm.slane %v1503, 0
        %v1512 = vperm.slane %v1504, 0
        %v1513 = vperm.slane %v1505, 0
        %v1514 = vperm.slane %v1506, 0
        %v1515 = vperm.slane %v1507, 0
        %v1524 = vadd.f32 %v1508, %v1461
        %v1525 = vadd.f32 %v1508, %v1463
        %v1526 = vadd.f32 %v1509, %v1466
        %v1527 = vadd.f32 %v1509, %v1468
        %v1528 = vadd.f32 %v1510, %v1471
        %v1529 = vadd.f32 %v1510, %v1473
        %v1530 = vadd.f32 %v1511, %v1476
        %v1531 = vadd.f32 %v1511, %v1478
        %v1532 = vadd.f32 %v1512, %v1481
        %v1533 = vadd.f32 %v1512, %v1483
        %v1534 = vadd.f32 %v1513, %v1486
        %v1535 = vadd.f32 %v1513, %v1488
        %v1536 = vadd.f32 %v1514, %v1491
        %v1537 = vadd.f32 %v1514, %v1493
        %v1538 = vadd.f32 %v1515, %v1496
        %v1539 = vadd.f32 %v1515, %v1498
        %v1540 = vld [vmem:[%s17] sm:$0x1]
        %v1542 = vperm.slane %v1540, 0
        %v1544 = vadd.f32 %v1524, %v1542
        %v1545 = vadd.f32 %v1525, %v1542
        %v1546 = vadd.f32 %v1526, %v1542
        %v1547 = vadd.f32 %v1527, %v1542
        %v1548 = vadd.f32 %v1528, %v1542
        %v1549 = vadd.f32 %v1529, %v1542
        %v1550 = vadd.f32 %v1530, %v1542
        %v1551 = vadd.f32 %v1531, %v1542
        %v1552 = vadd.f32 %v1532, %v1542
        %v1553 = vadd.f32 %v1533, %v1542
        %v1554 = vadd.f32 %v1534, %v1542
        %v1555 = vadd.f32 %v1535, %v1542
        %v1556 = vadd.f32 %v1536, %v1542
        %v1557 = vadd.f32 %v1537, %v1542
        %v1558 = vadd.f32 %v1538, %v1542
        %v1559 = vadd.f32 %v1539, %v1542
        %v1560 = vmax.f32 %v1544, 0.0
        %v1561 = vmax.f32 %v1545, 0.0
        %v1562 = vmax.f32 %v1546, 0.0
        %v1563 = vmax.f32 %v1547, 0.0
        %v1564 = vmax.f32 %v1548, 0.0
        %v1565 = vmax.f32 %v1549, 0.0
        %v1566 = vmax.f32 %v1550, 0.0
        %v1567 = vmax.f32 %v1551, 0.0
        %v1568 = vmax.f32 %v1552, 0.0
        %v1569 = vmax.f32 %v1553, 0.0
        %v1570 = vmax.f32 %v1554, 0.0
        %v1571 = vmax.f32 %v1555, 0.0
        %v1572 = vmax.f32 %v1556, 0.0
        %v1573 = vmax.f32 %v1557, 0.0
        %v1574 = vmax.f32 %v1558, 0.0
        %v1575 = vmax.f32 %v1559, 0.0
        %v1576 = vpack.c.bf16 %v1561, %v1560
        %v1577 = vpack.c.bf16 %v1563, %v1562
        %v1578 = vpack.c.bf16 %v1565, %v1564
        %v1579 = vpack.c.bf16 %v1567, %v1566
        %v1580 = vpack.c.bf16 %v1569, %v1568
        %v1581 = vpack.c.bf16 %v1571, %v1570
        %v1582 = vpack.c.bf16 %v1573, %v1572
        %v1583 = vpack.c.bf16 %v1575, %v1574
        %v1584 = vld [vmem:[%s19] sm:$0xf]
        %v1585 = vld [vmem:[%s19 + $0x4] sm:$0xf]
        %v1586 = vld [vmem:[%s19 + $0x8] sm:$0xf]
        %v1587 = vld [vmem:[%s19 + $0xc] sm:$0xf]
        %v1588 = vld [vmem:[%s19 + $0x10] sm:$0xf]
        %v1589 = vld [vmem:[%s19 + $0x14] sm:$0xf]
        %v1590 = vld [vmem:[%s19 + $0x18] sm:$0xf]
        %v1591 = vld [vmem:[%s19 + $0x1c] sm:$0xf]
        %v1592 = vld [vmem:[%s19 + $0x20] sm:$0xf]
        %v1593 = vld [vmem:[%s19 + $0x24] sm:$0xf]
        %v1594 = vld [vmem:[%s19 + $0x28] sm:$0xf]
        %v1595 = vld [vmem:[%s19 + $0x2c] sm:$0xf]
        %v1596 = vld [vmem:[%s19 + $0x30] sm:$0xf]
        %v1597 = vld [vmem:[%s19 + $0x34] sm:$0xf]
        %v1598 = vld [vmem:[%s19 + $0x38] sm:$0xf]
        %v1599 = vld [vmem:[%s19 + $0x3c] sm:$0xf]
        %v1600 = vld [vmem:[%s21] sm:$0x1]
        %v1602 = vperm.slane %v1600, 0
        %v1620 = vunpack.c.l.b16 %v1584
        %v1621 = vunpack.c.l.b16 %v1585
        %v1622 = vunpack.c.l.b16 %v1586
        %v1623 = vunpack.c.l.b16 %v1587
        %v1624 = vunpack.c.l.b16 %v1588
        %v1625 = vunpack.c.l.b16 %v1589
        %v1626 = vunpack.c.l.b16 %v1590
        %v1627 = vunpack.c.l.b16 %v1591
        %v1628 = vunpack.c.l.b16 %v1592
        %v1629 = vunpack.c.l.b16 %v1593
        %v1630 = vunpack.c.l.b16 %v1594
        %v1631 = vunpack.c.l.b16 %v1595
        %v1632 = vunpack.c.l.b16 %v1596
        %v1633 = vunpack.c.l.b16 %v1597
        %v1634 = vunpack.c.l.b16 %v1598
        %v1635 = vunpack.c.l.b16 %v1599
        %v1636 = vpack.c.b16 %v1621, %v1620
        %v1637 = vpack.c.b16 %v1623, %v1622
        %v1638 = vpack.c.b16 %v1625, %v1624
        %v1639 = vpack.c.b16 %v1627, %v1626
        %v1640 = vpack.c.b16 %v1629, %v1628
        %v1641 = vpack.c.b16 %v1631, %v1630
        %v1642 = vpack.c.b16 %v1633, %v1632
        %v1643 = vpack.c.b16 %v1635, %v1634
        %1652 = vmatpush.bf16.msra.mxu0 %v1643
        %1653 = vmatpush.bf16.msra.mxu0 %v1642
        %1654 = vmatpush.bf16.msra.mxu0 %v1641
        %1655 = vmatpush.bf16.msra.mxu0 %v1640
        %1656 = vmatpush.bf16.msra.mxu0 %v1639
        %1657 = vmatpush.bf16.msra.mxu0 %v1638
        %1658 = vmatpush.bf16.msra.mxu0 %v1637
        %1659 = vmatpush.bf16.msra.mxu0 %v1636
        %1660 = vmatmul.bf16.gmra.mxu0 %v1576
        %v1661 = vpop.f32.mrf.mxu0
        %v1662 = vadd.f32 %v1602, %v1661
        %v1663 = vpop.f32.mrf.mxu0
        %v1664 = vadd.f32 %v1602, %v1663
        %1665 = vmatmul.bf16.gmra.mxu0 %v1577
        %v1666 = vpop.f32.mrf.mxu0
        %v1667 = vadd.f32 %v1602, %v1666
        %v1668 = vpop.f32.mrf.mxu0
        %v1669 = vadd.f32 %v1602, %v1668
        %1670 = vmatmul.bf16.gmra.mxu0 %v1578
        %v1671 = vpop.f32.mrf.mxu0
        %v1672 = vadd.f32 %v1602, %v1671
        %v1673 = vpop.f32.mrf.mxu0
        %v1674 = vadd.f32 %v1602, %v1673
        %1675 = vmatmul.bf16.gmra.mxu0 %v1579
        %v1676 = vpop.f32.mrf.mxu0
        %v1677 = vadd.f32 %v1602, %v1676
        %v1678 = vpop.f32.mrf.mxu0
        %v1679 = vadd.f32 %v1602, %v1678
        %1680 = vmatmul.bf16.gmra.mxu0 %v1580
        %v1681 = vpop.f32.mrf.mxu0
        %v1682 = vadd.f32 %v1602, %v1681
        %v1683 = vpop.f32.mrf.mxu0
        %v1684 = vadd.f32 %v1602, %v1683
        %1685 = vmatmul.bf16.gmra.mxu0 %v1581
        %v1686 = vpop.f32.mrf.mxu0
        %v1687 = vadd.f32 %v1602, %v1686
        %v1688 = vpop.f32.mrf.mxu0
        %v1689 = vadd.f32 %v1602, %v1688
        %1690 = vmatmul.bf16.gmra.mxu0 %v1582
        %v1691 = vpop.f32.mrf.mxu0
        %v1692 = vadd.f32 %v1602, %v1691
        %v1693 = vpop.f32.mrf.mxu0
        %v1694 = vadd.f32 %v1602, %v1693
        %1695 = vmatmul.bf16.gmra.mxu0 %v1583
        %v1696 = vpop.f32.mrf.mxu0
        %v1697 = vadd.f32 %v1602, %v1696
        %v1698 = vpop.f32.mrf.mxu0
        %v1699 = vadd.f32 %v1602, %v1698
        %1700 = vdwg.mxu0
        %v1701 = vsel %vm1227, %v1662, -inf
        %v1702 = vsel %vm1227, %v1664, -inf
        %v1703 = vmax.f32 %v1701, %v1702
        %v1704 = vrot.slane %v1703, 4
        %v1705 = vmax.f32 %v1703, %v1704
        %v1706 = vrot.slane %v1705, 2
        %v1707 = vmax.f32 %v1705, %v1706
        %v1708 = vrot.slane %v1707, 1
        %v1709 = vmax.f32 %v1707, %v1708
        %v1710 = vsel %vm1227, %v1667, -inf
        %v1711 = vsel %vm1227, %v1669, -inf
        %v1712 = vmax.f32 %v1710, %v1711
        %v1713 = vrot.slane %v1712, 4
        %v1714 = vmax.f32 %v1712, %v1713
        %v1715 = vrot.slane %v1714, 2
        %v1716 = vmax.f32 %v1714, %v1715
        %v1717 = vrot.slane %v1716, 1
        %v1718 = vmax.f32 %v1716, %v1717
        %v1719 = vsel %vm1227, %v1672, -inf
        %v1720 = vsel %vm1227, %v1674, -inf
        %v1721 = vmax.f32 %v1719, %v1720
        %v1722 = vrot.slane %v1721, 4
        %v1723 = vmax.f32 %v1721, %v1722
        %v1724 = vrot.slane %v1723, 2
        %v1725 = vmax.f32 %v1723, %v1724
        %v1726 = vrot.slane %v1725, 1
        %v1727 = vmax.f32 %v1725, %v1726
        %v1728 = vsel %vm1227, %v1677, -inf
        %v1729 = vsel %vm1227, %v1679, -inf
        %v1730 = vmax.f32 %v1728, %v1729
        %v1731 = vrot.slane %v1730, 4
        %v1732 = vmax.f32 %v1730, %v1731
        %v1733 = vrot.slane %v1732, 2
        %v1734 = vmax.f32 %v1732, %v1733
        %v1735 = vrot.slane %v1734, 1
        %v1736 = vmax.f32 %v1734, %v1735
        %v1737 = vsel %vm1227, %v1682, -inf
        %v1738 = vsel %vm1227, %v1684, -inf
        %v1739 = vmax.f32 %v1737, %v1738
        %v1740 = vrot.slane %v1739, 4
        %v1741 = vmax.f32 %v1739, %v1740
        %v1742 = vrot.slane %v1741, 2
        %v1743 = vmax.f32 %v1741, %v1742
        %v1744 = vrot.slane %v1743, 1
        %v1745 = vmax.f32 %v1743, %v1744
        %v1746 = vsel %vm1227, %v1687, -inf
        %v1747 = vsel %vm1227, %v1689, -inf
        %v1748 = vmax.f32 %v1746, %v1747
        %v1749 = vrot.slane %v1748, 4
        %v1750 = vmax.f32 %v1748, %v1749
        %v1751 = vrot.slane %v1750, 2
        %v1752 = vmax.f32 %v1750, %v1751
        %v1753 = vrot.slane %v1752, 1
        %v1754 = vmax.f32 %v1752, %v1753
        %v1755 = vsel %vm1227, %v1692, -inf
        %v1756 = vsel %vm1227, %v1694, -inf
        %v1757 = vmax.f32 %v1755, %v1756
        %v1758 = vrot.slane %v1757, 4
        %v1759 = vmax.f32 %v1757, %v1758
        %v1760 = vrot.slane %v1759, 2
        %v1761 = vmax.f32 %v1759, %v1760
        %v1762 = vrot.slane %v1761, 1
        %v1763 = vmax.f32 %v1761, %v1762
        %v1764 = vsel %vm1227, %v1697, -inf
        %v1765 = vsel %vm1227, %v1699, -inf
        %v1766 = vmax.f32 %v1764, %v1765
        %v1767 = vrot.slane %v1766, 4
        %v1768 = vmax.f32 %v1766, %v1767
        %v1769 = vrot.slane %v1768, 2
        %v1770 = vmax.f32 %v1768, %v1769
        %v1771 = vrot.slane %v1770, 1
        %v1772 = vmax.f32 %v1770, %v1771
        %v1773 = vpack.c.bf16 %v1709, %v1709
        %v1774 = vpack.c.bf16 %v1718, %v1718
        %v1775 = vpack.c.bf16 %v1727, %v1727
        %v1776 = vpack.c.bf16 %v1736, %v1736
        %v1777 = vpack.c.bf16 %v1745, %v1745
        %v1778 = vpack.c.bf16 %v1754, %v1754
        %v1779 = vpack.c.bf16 %v1763, %v1763
        %v1780 = vpack.c.bf16 %v1772, %v1772
        %v1781 = vld [vmem:[%s23] sm:$0xf]
        %v1782 = vld [vmem:[%s23 + $0x4] sm:$0xf]
        %v1783 = vld [vmem:[%s23 + $0x8] sm:$0xf]
        %v1784 = vld [vmem:[%s23 + $0xc] sm:$0xf]
        %v1785 = vld [vmem:[%s23 + $0x10] sm:$0xf]
        %v1786 = vld [vmem:[%s23 + $0x14] sm:$0xf]
        %v1787 = vld [vmem:[%s23 + $0x18] sm:$0xf]
        %v1788 = vld [vmem:[%s23 + $0x1c] sm:$0xf]
        %v1789 = vld [vmem:[%s25] sm:$0x1]
        %v1791 = vperm.slane %v1789, 0
        %v1801 = vunpack.c.l.b16 %v1773
        %v1802 = vunpack.c.l.b16 %v1774
        %v1803 = vunpack.c.l.b16 %v1775
        %v1804 = vunpack.c.l.b16 %v1776
        %v1805 = vunpack.c.l.b16 %v1777
        %v1806 = vunpack.c.l.b16 %v1778
        %v1807 = vunpack.c.l.b16 %v1779
        %v1808 = vunpack.c.l.b16 %v1780
        %v1809 = vsel %vm1332, %v1802, %v1801
        %v1810 = vsel %vm1334, %v1803, %v1809
        %v1811 = vsel %vm1336, %v1804, %v1810
        %v1812 = vsel %vm1338, %v1805, %v1811
        %v1813 = vsel %vm1340, %v1806, %v1812
        %v1814 = vsel %vm1342, %v1807, %v1813
        %v1815 = vsel %vm1344, %v1808, %v1814
        %v1816 = vpack.c.b16 %v1815, %v1815
        %v1825 = vunpack.c.l.b16 %v1781
        %v1826 = vunpack.c.l.b16 %v1782
        %v1827 = vunpack.c.l.b16 %v1783
        %v1828 = vunpack.c.l.b16 %v1784
        %v1829 = vunpack.c.l.b16 %v1785
        %v1830 = vunpack.c.l.b16 %v1786
        %v1831 = vunpack.c.l.b16 %v1787
        %v1832 = vunpack.c.l.b16 %v1788
        %v1833 = vpack.c.b16 %v1826, %v1825
        %v1834 = vpack.c.b16 %v1828, %v1827
        %v1835 = vpack.c.b16 %v1830, %v1829
        %v1836 = vpack.c.b16 %v1832, %v1831
        %v1842 = vsel %vm1227, %v1816, 0
        %1844 = vmatpush.bf16.msra.mxu0 0
        %1845 = vmatpush.bf16.msra.mxu0 0
        %1846 = vmatpush.bf16.msra.mxu0 0
        %1847 = vmatpush.bf16.msra.mxu0 0
        %1848 = vmatpush.bf16.msra.mxu0 %v1836
        %1849 = vmatpush.bf16.msra.mxu0 %v1835
        %1850 = vmatpush.bf16.msra.mxu0 %v1834
        %1851 = vmatpush.bf16.msra.mxu0 %v1833
        %1852 = vmatmul.bf16.gmra.mxu0 %v1842
        %v1853 = vpop.f32.mrf.mxu0
        %v1854 = vadd.f32 %v1791, %v1853
        %v1855 = vpop.f32.mrf.mxu0
        %1856 = vdwg.mxu0
        %v1857 = vld [vmem:[%s27] sm:$0x1]
        %vm1858 = vcmask 253952
        %1859 = vst.msk [vmem:[#allocation2] sm:$0x1] %vm1858, %v1857
        %1860 = vst.msk [vmem:[#allocation2 + $0x1] sm:$0xff] %vm1153, %v1854
        %v1861 = vld [vmem:[%s1000] sm:$0xff]
        %v1862 = vpack.c.bf16 %v1861, %v1861
        %v1863 = vld [vmem:[%s31] sm:$0x3]
        %v1864 = vld [vmem:[%s33] sm:$0x1]
        %v1866 = vperm.slane %v1864, 0
        %vm1868 = vcmask 23552
        %v1870 = vsel %vm1868, %v1862, 0
        %vm1872 = vcmask 1040384
        %vm1873 = vcmask 1041408
        %v1874 = vsel %vm1872, 4294967295, 65535
        %v1875 = vsel %vm1873, %v1874, 0
        %v1877 = vand.u32 %v1863, %v1875
        %1879 = vmatpush.bf16.msra.mxu0 0
        %1880 = vmatpush.bf16.msra.mxu0 0
        %1881 = vmatpush.bf16.msra.mxu0 0
        %1882 = vmatpush.bf16.msra.mxu0 0
        %1883 = vmatpush.bf16.msra.mxu0 0
        %1884 = vmatpush.bf16.msra.mxu0 0
        %1885 = vmatpush.bf16.msra.mxu0 0
        %1886 = vmatpush.bf16.msra.mxu0 %v1877
        %1887 = vmatmul.bf16.gmra.mxu0 %v1870
        %v1888 = vpop.f32.mrf.mxu0
        %v1889 = vadd.f32 %v1866, %v1888
        %v1890 = vpop.f32.mrf.mxu0
        %1891 = vdwg.mxu0
        %v1892 = vmul.f32 %v1889, 0.5
        %v1893 = vmul.f32 %v1889, 0.044715
        %v1894 = vmul.f32 %v1893, %v1889
        %v1895 = vmul.f32 %v1894, %v1889
        %v1896 = vadd.f32 %v1889, %v1895
        %v1897 = vmul.f32 %v1896, 0.7978846
        %v1898 = vtanh.pop %v1897
        %v1899 = vadd.f32 %v1898, 1.0
        %v1900 = vmul.f32 %v1892, %v1899
        %v1901 = vpack.c.bf16 %v1900, %v1900
        %v1902 = vld [vmem:[%s35] sm:$0xf]
        %v1903 = vld [vmem:[%s35 + $0x4] sm:$0xf]
        %v1904 = vld [vmem:[%s35 + $0x8] sm:$0xf]
        %v1905 = vld [vmem:[%s35 + $0xc] sm:$0xf]
        %v1906 = vld [vmem:[%s35 + $0x10] sm:$0xf]
        %v1907 = vld [vmem:[%s35 + $0x14] sm:$0xf]
        %v1908 = vld [vmem:[%s35 + $0x18] sm:$0xf]
        %v1909 = vld [vmem:[%s35 + $0x1c] sm:$0xf]
        %v1910 = vld [vmem:[%s35 + $0x20] sm:$0xf]
        %v1911 = vld [vmem:[%s35 + $0x24] sm:$0xf]
        %v1912 = vld [vmem:[%s35 + $0x28] sm:$0xf]
        %v1913 = vld [vmem:[%s35 + $0x2c] sm:$0xf]
        %v1914 = vld [vmem:[%s35 + $0x30] sm:$0xf]
        %v1915 = vld [vmem:[%s35 + $0x34] sm:$0xf]
        %v1916 = vld [vmem:[%s35 + $0x38] sm:$0xf]
        %v1917 = vld [vmem:[%s35 + $0x3c] sm:$0xf]
        %v1918 = vld [vmem:[%s37] sm:$0x1]
        %v1920 = vperm.slane %v1918, 0
        %v1938 = vunpack.c.l.b16 %v1902
        %v1939 = vunpack.c.l.b16 %v1903
        %v1940 = vunpack.c.l.b16 %v1904
        %v1941 = vunpack.c.l.b16 %v1905
        %v1942 = vunpack.c.l.b16 %v1906
        %v1943 = vunpack.c.l.b16 %v1907
        %v1944 = vunpack.c.l.b16 %v1908
        %v1945 = vunpack.c.l.b16 %v1909
        %v1946 = vunpack.c.l.b16 %v1910
        %v1947 = vunpack.c.l.b16 %v1911
        %v1948 = vunpack.c.l.b16 %v1912
        %v1949 = vunpack.c.l.b16 %v1913
        %v1950 = vunpack.c.l.b16 %v1914
        %v1951 = vunpack.c.l.b16 %v1915
        %v1952 = vunpack.c.l.b16 %v1916
        %v1953 = vunpack.c.l.b16 %v1917
        %v1954 = vpack.c.b16 %v1939, %v1938
        %v1955 = vpack.c.b16 %v1941, %v1940
        %v1956 = vpack.c.b16 %v1943, %v1942
        %v1957 = vpack.c.b16 %v1945, %v1944
        %v1958 = vpack.c.b16 %v1947, %v1946
        %v1959 = vpack.c.b16 %v1949, %v1948
        %v1960 = vpack.c.b16 %v1951, %v1950
        %v1961 = vpack.c.b16 %v1953, %v1952
        %1970 = vmatpush.bf16.msra.mxu0 %v1961
        %1971 = vmatpush.bf16.msra.mxu0 %v1960
        %1972 = vmatpush.bf16.msra.mxu0 %v1959
        %1973 = vmatpush.bf16.msra.mxu0 %v1958
        %1974 = vmatpush.bf16.msra.mxu0 %v1957
        %1975 = vmatpush.bf16.msra.mxu0 %v1956
        %1976 = vmatpush.bf16.msra.mxu0 %v1955
        %1977 = vmatpush.bf16.msra.mxu0 %v1954
        %1978 = vmatmul.bf16.gmra.mxu0 %v1901
        %v1979 = vpop.f32.mrf.mxu0
        %v1980 = vadd.f32 %v1920, %v1979
        %v1981 = vpop.f32.mrf.mxu0
        %1982 = vdwg.mxu0
        %v1983 = vld [vmem:[%s29] sm:$0x1]
        %1984 = vst.msk [vmem:[#allocation3] sm:$0x1] %vm1858, %v1983
        %1985 = vst.msk [vmem:[#allocation3 + $0x1] sm:$0xff] %vm1153, %v1980
        %v1986 = vld [vmem:[#allocation2] sm:$0xff]
        %v1987 = vld [vmem:[#allocation2 + $0x8] sm:$0x1]
        %v1988 = vld [vmem:[#allocation3] sm:$0xff]
        %v1989 = vld [vmem:[#allocation3 + $0x8] sm:$0x1]
        %v1990 = vadd.f32 %v1986, %v1988
        %v1991 = vadd.f32 %v1987, %v1989
        %v1992 = vld [vmem:[%s39] sm:$0x1]
        %v1993 = vld [vmem:[%s41] sm:$0x1]
        %v1994 = vsel %vm1153, %v1990, 0.0
        %1995 = vadd.xlane.f32.xlu0 %v1994
        %v1996 = vpop.xlane.xlu0 %1995
        %v1997 = vsel %vm1858, %v1991, 0.0
        %1998 = vadd.xlane.f32.xlu0 %v1997
        %v1999 = vpop.xlane.xlu0 %1998
        %v2000 = vrcp.pop 32.0
        %v2001 = vmul.f32 32.0, %v2000
        %v2002 = vsub.f32 1.0, %v2001
        %v2003 = vmul.f32 %v2000, %v2002
        %v2004 = vadd.f32 %v2000, %v2003
        %vm2005 = vweird.f32 %v2000
        %v2006 = vsel %vm2005, %v2000, %v2004
        %v2007 = vmul.f32 %v1996, %v2006
        %v2008 = vmul.f32 %v1999, %v2006
        %v2009 = vsub.f32 %v1990, %v2007
        %v2010 = vsub.f32 %v1991, %v2008
        %v2011 = vmul.f32 %v2009, %v2009
        %v2012 = vmul.f32 %v2010, %v2010
        %v2013 = vsel %vm1153, %v2011, 0.0
        %2014 = vadd.xlane.f32.xlu0 %v2013
        %v2015 = vpop.xlane.xlu0 %2014
        %v2016 = vsel %vm1858, %v2012, 0.0
        %2017 = vadd.xlane.f32.xlu0 %v2016
        %v2018 = vpop.xlane.xlu0 %2017
        %v2019 = vmul.f32 %v2015, %v2006
        %v2020 = vmul.f32 %v2018, %v2006
        %v2021 = vadd.f32 %v2019, 1e-05
        %v2022 = vadd.f32 %v2020, 1e-05
        %v2023 = vrsqrt.pop %v2021
        %v2024 = vmul.f32 %v2023, %v2021
        %v2025 = vmul.f32 %v2024, %v2023
        %v2026 = vmul.f32 0.5, %v2025
        %v2027 = vsub.f32 1.5, %v2026
        %v2028 = vmul.f32 %v2023, %v2027
        %vm2029 = vweird.f32 %v2021
        %vm2030 = vweird.f32 %v2023
        %vm2031 = vmor %vm2029, %vm2030
        %v2032 = vsel %vm2031, %v2023, %v2028
        %v2033 = vrsqrt.pop %v2022
        %v2034 = vmul.f32 %v2033, %v2022
        %v2035 = vmul.f32 %v2034, %v2033
        %v2036 = vmul.f32 0.5, %v2035
        %v2037 = vsub.f32 1.5, %v2036
        %v2038 = vmul.f32 %v2033, %v2037
        %vm2039 = vweird.f32 %v2022
        %vm2040 = vweird.f32 %v2033
        %vm2041 = vmor %vm2039, %vm2040
        %v2042 = vsel %vm2041, %v2033, %v2038
        %v2043 = vmul.f32 %v2009, %v2032
        %v2044 = vmul.f32 %v2010, %v2042
        %v2045 = vperm.slane %v1992, 0
        %v2046 = vmul.f32 %v2043, %v2045
        %v2047 = vmul.f32 %v2044, %v2045
        %v2048 = vperm.slane %v1993, 0
        %v2049 = vadd.f32 %v2046, %v2048
        %v2050 = vadd.f32 %v2047, %v2048
        %v2051 = vpack.c.bf16 %v2050, %v2049
        %v2052 = vld [vmem:[%s43] sm:$0xf]
        %v2053 = vld [vmem:[%s43 + $0x4] sm:$0xf]
        %v2054 = vld [vmem:[%s43 + $0x8] sm:$0xf]
        %v2055 = vld [vmem:[%s43 + $0xc] sm:$0xf]
        %v2060 = vunpack.c.l.b16 %v2052
        %v2061 = vunpack.c.l.b16 %v2053
        %v2062 = vunpack.c.l.b16 %v2054
        %v2063 = vunpack.c.l.b16 %v2055
        %v2064 = vpack.c.b16 %v2061, %v2060
        %v2065 = vpack.c.b16 %v2063, %v2062
        %v2069 = vsel %vm1153, %v2051, 0
        %2071 = vmatpush.bf16.msra.mxu0 0
        %2072 = vmatpush.bf16.msra.mxu0 0
        %2073 = vmatpush.bf16.msra.mxu0 0
        %2074 = vmatpush.bf16.msra.mxu0 0
        %2075 = vmatpush.bf16.msra.mxu0 0
        %2076 = vmatpush.bf16.msra.mxu0 0
        %2077 = vmatpush.bf16.msra.mxu0 %v2065
        %2078 = vmatpush.bf16.msra.mxu0 %v2064
        %2079 = vmatmul.bf16.gmra.mxu0 %v2069
        %v2080 = vpop.f32.mrf.mxu0
        %v2081 = vadd.f32 0.0, %v2080
        %v2082 = vpop.f32.mrf.mxu0
        %v2083 = vadd.f32 0.0, %v2082
        %2084 = vdwg.mxu0
        %vm2085 = vcmask 785408
        %2086 = vst.msk [vmem:[#allocation4] sm:$0xff] %vm2085, %v2081
        %vm2087 = vcmask 778240
        %2088 = vst.msk [vmem:[#allocation4 + $0x8] sm:$0x1] %vm2087, %v2083
        %v2089 = vld [vmem:[#allocation4] sm:$0xff]
        %v2090 = vld [vmem:[#allocation4 + $0x8] sm:$0x1]
        %v2091 = vpack.c.bf16 %v2090, %v2089
        %2093 = vrot.lane.b32.xlu0 %v2091, 96
        %v2094 = vpop.permute.xlu0 %2093
        %vm2095 = vcmask 64512
        %v2097 = vsel %vm2095, %v2091, 0
        %v2100 = vsel %vm2095, %v2094, 0
        %2102 = vmatpush.bf16.xpose.msra.mxu0 0
        %2103 = vmatpush.bf16.xpose.msra.mxu0 0
        %2104 = vmatpush.bf16.xpose.msra.mxu0 0
        %2105 = vmatpush.bf16.xpose.msra.mxu0 0
        %2106 = vmatpush.bf16.xpose.msra.mxu0 0
        %2107 = vmatpush.bf16.xpose.msra.mxu0 0
        %2108 = vmatpush.bf16.xpose.msra.mxu0 0
        %2109 = vmatpush.bf16.xpose.msra.mxu0 %v2100
        %2110 = vmatmul.bf16.gmra.mxu0 %v2097
        %v2111 = vpop.f32.mrf.mxu0
        %v2112 = vadd.f32 0.0, %v2111
        %v2113 = vpop.f32.mrf.mxu0
        %v2114 = vadd.f32 0.0, %v2113
        %2115 = vdwg.mxu0
        %v2116 = vmul.f32 %v2112, 0.35355338
        %v2117 = vmul.f32 %v2114, 0.35355338
        %vm2118 = vcmask 72704
        %v2119 = vsel %vm2118, %v2116, -inf
        %2120 = vmax.xlane.f32.xlu0 %v2119
        %v2121 = vpop.xlane.xlu0 %2120
        %vm2122 = vcmask 65536
        %v2123 = vsel %vm2122, %v2117, -inf
        %2124 = vmax.xlane.f32.xlu0 %v2123
        %v2125 = vpop.xlane.xlu0 %2124
        %v2126 = vsub.f32 %v2116, %v2121
        %v2127 = vsub.f32 %v2117, %v2125
        %v2128 = vmul.f32 %v2126, 1.442695
        %v2129 = vpow.pop %v2128
        %v2130 = vmul.f32 %v2127, 1.442695
        %v2131 = vpow.pop %v2130
        %v2132 = vsel %vm2118, %v2129, 0.0
        %2133 = vadd.xlane.f32.xlu0 %v2132
        %v2134 = vpop.xlane.xlu0 %2133
        %v2135 = vsel %vm2122, %v2131, 0.0
        %2136 = vadd.xlane.f32.xlu0 %v2135
        %v2137 = vpop.xlane.xlu0 %2136
        %v2138 = vrcp.pop %v2134
        %v2139 = vrcp.pop %v2137
        %v2140 = vmul.f32 %v2129, %v2138
        %v2141 = vmul.f32 %v2131, %v2139
        %v2142 = vpack.c.bf16 %v2141, %v2140
        %2143 = vrot.lane.b32.xlu0 %v2091, 64
        %v2144 = vpop.permute.xlu0 %2143
        %v2146 = vsel %vm2118, %v2142, 0
        %vm2148 = vcmask 1043456
        %vm2149 = vcmask 1044480
        %v2150 = vsel %vm2148, 4294967295, 65535
        %v2151 = vsel %vm2149, %v2150, 0
        %v2153 = vand.u32 %v2144, %v2151
        %2155 = vmatpush.bf16.msra.mxu0 0
        %2156 = vmatpush.bf16.msra.mxu0 0
        %2157 = vmatpush.bf16.msra.mxu0 0
        %2158 = vmatpush.bf16.msra.mxu0 0
        %2159 = vmatpush.bf16.msra.mxu0 0
        %2160 = vmatpush.bf16.msra.mxu0 0
        %2161 = vmatpush.bf16.msra.mxu0 0
        %2162 = vmatpush.bf16.msra.mxu0 %v2153
        %2163 = vmatmul.bf16.gmra.mxu0 %v2146
        %v2164 = vpop.f32.mrf.mxu0
        %v2165 = vadd.f32 0.0, %v2164
        %v2166 = vpop.f32.mrf.mxu0
        %v2167 = vadd.f32 0.0, %v2166
        %2168 = vdwg.mxu0
        %2169 = vst.msk [vmem:[#allocation5] sm:$0xff] %vm2095, %v2165
        %vm2170 = vcmask 57344
        %2171 = vst.msk [vmem:[#allocation5 + $0x8] sm:$0x1] %vm2170, %v2167
        %v2172 = vld [vmem:[#allocation4] sm:$0xff]
        %v2173 = vld [vmem:[#allocation4 + $0x8] sm:$0x1]
        %v2174 = vpack.c.bf16 %v2173, %v2172
        %2176 = vrot.lane.b32.xlu0 %v2174, 120
        %v2177 = vpop.permute.xlu0 %2176
        %2178 = vrot.lane.b32.xlu0 %v2174, 88
        %v2179 = vpop.permute.xlu0 %2178
        %v2181 = vsel %vm2095, %v2177, 0
        %v2184 = vsel %vm2095, %v2179, 0
        %2186 = vmatpush.bf16.xpose.msra.mxu0 0
        %2187 = vmatpush.bf16.xpose.msra.mxu0 0
        %2188 = vmatpush.bf16.xpose.msra.mxu0 0
        %2189 = vmatpush.bf16.xpose.msra.mxu0 0
        %2190 = vmatpush.bf16.xpose.msra.mxu0 0
        %2191 = vmatpush.bf16.xpose.msra.mxu0 0
        %2192 = vmatpush.bf16.xpose.msra.mxu0 0
        %2193 = vmatpush.bf16.xpose.msra.mxu0 %v2184
        %2194 = vmatmul.bf16.gmra.mxu0 %v2181
        %v2195 = vpop.f32.mrf.mxu0
        %v2196 = vadd.f32 0.0, %v2195
        %v2197 = vpop.f32.mrf.mxu0
        %v2198 = vadd.f32 0.0, %v2197
        %2199 = vdwg.mxu0
        %v2200 = vmul.f32 %v2196, 0.35355338
        %v2201 = vmul.f32 %v2198, 0.35355338
        %v2202 = vsel %vm2118, %v2200, -inf
        %2203 = vmax.xlane.f32.xlu0 %v2202
        %v2204 = vpop.xlane.xlu0 %2203
        %v2205 = vsel %vm2122, %v2201, -inf
        %2206 = vmax.xlane.f32.xlu0 %v2205
        %v2207 = vpop.xlane.xlu0 %2206
        %v2208 = vsub.f32 %v2200, %v2204
        %v2209 = vsub.f32 %v2201, %v2207
        %v2210 = vmul.f32 %v2208, 1.442695
        %v2211 = vpow.pop %v2210
        %v2212 = vmul.f32 %v2209, 1.442695
        %v2213 = vpow.pop %v2212
        %v2214 = vsel %vm2118, %v2211, 0.0
        %2215 = vadd.xlane.f32.xlu0 %v2214
        %v2216 = vpop.xlane.xlu0 %2215
        %v2217 = vsel %vm2122, %v2213, 0.0
        %2218 = vadd.xlane.f32.xlu0 %v2217
        %v2219 = vpop.xlane.xlu0 %2218
        %v2220 = vrcp.pop %v2216
        %v2221 = vrcp.pop %v2219
        %v2222 = vmul.f32 %v2211, %v2220
        %v2223 = vmul.f32 %v2213, %v2221
        %v2224 = vpack.c.bf16 %v2223, %v2222
        %2225 = vrot.lane.b32.xlu0 %v2174, 56
        %v2226 = vpop.permute.xlu0 %2225
        %v2228 = vsel %vm2118, %v2224, 0
        %v2231 = vand.u32 %v2226, %v2151
        %2233 = vmatpush.bf16.msra.mxu0 0
        %2234 = vmatpush.bf16.msra.mxu0 0
        %2235 = vmatpush.bf16.msra.mxu0 0
        %2236 = vmatpush.bf16.msra.mxu0 0
        %2237 = vmatpush.bf16.msra.mxu0 0
        %2238 = vmatpush.bf16.msra.mxu0 0
        %2239 = vmatpush.bf16.msra.mxu0 0
        %2240 = vmatpush.bf16.msra.mxu0 %v2231
        %2241 = vmatmul.bf16.gmra.mxu0 %v2228
        %v2242 = vpop.f32.mrf.mxu0
        %v2243 = vadd.f32 0.0, %v2242
        %v2244 = vpop.f32.mrf.mxu0
        %v2245 = vadd.f32 0.0, %v2244
        %2246 = vdwg.mxu0
        %2249 = vrot.lane.b32.xlu0 %v2243, 8
        %v2250 = vpop.permute.xlu0 %2249
        %2251 = vrot.lane.b32.xlu0 %v2245, 8
        %v2252 = vpop.permute.xlu0 %2251
        %vm2255 = vcmask 130112
        %2256 = vst.msk [vmem:[#allocation5] sm:$0xff] %vm2255, %v2250
        %vm2257 = vcmask 122944
        %2258 = vst.msk [vmem:[#allocation5 + $0x8] sm:$0x1] %vm2257, %v2252
        %v2259 = vld [vmem:[#allocation4] sm:$0xff]
        %v2260 = vld [vmem:[#allocation4 + $0x8] sm:$0x1]
        %v2261 = vpack.c.bf16 %v2260, %v2259
        %2263 = vrot.lane.b32.xlu0 %v2261, 112
        %v2264 = vpop.permute.xlu0 %2263
        %2265 = vrot.lane.b32.xlu0 %v2261, 80
        %v2266 = vpop.permute.xlu0 %2265
        %v2268 = vsel %vm2095, %v2264, 0
        %v2271 = vsel %vm2095, %v2266, 0
        %2273 = vmatpush.bf16.xpose.msra.mxu0 0
        %2274 = vmatpush.bf16.xpose.msra.mxu0 0
        %2275 = vmatpush.bf16.xpose.msra.mxu0 0
        %2276 = vmatpush.bf16.xpose.msra.mxu0 0
        %2277 = vmatpush.bf16.xpose.msra.mxu0 0
        %2278 = vmatpush.bf16.xpose.msra.mxu0 0
        %2279 = vmatpush.bf16.xpose.msra.mxu0 0
        %2280 = vmatpush.bf16.xpose.msra.mxu0 %v2271
        %2281 = vmatmul.bf16.gmra.mxu0 %v2268
        %v2282 = vpop.f32.mrf.mxu0
        %v2283 = vadd.f32 0.0, %v2282
        %v2284 = vpop.f32.mrf.mxu0
        %v2285 = vadd.f32 0.0, %v2284
        %2286 = vdwg.mxu0
        %v2287 = vmul.f32 %v2283, 0.35355338
        %v2288 = vmul.f32 %v2285, 0.35355338
        %v2289 = vsel %vm2118, %v2287, -inf
        %2290 = vmax.xlane.f32.xlu0 %v2289
        %v2291 = vpop.xlane.xlu0 %2290
        %v2292 = vsel %vm2122, %v2288, -inf
        %2293 = vmax.xlane.f32.xlu0 %v2292
        %v2294 = vpop.xlane.xlu0 %2293
        %v2295 = vsub.f32 %v2287, %v2291
        %v2296 = vsub.f32 %v2288, %v2294
        %v2297 = vmul.f32 %v2295, 1.442695
        %v2298 = vpow.pop %v2297
        %v2299 = vmul.f32 %v2296, 1.442695
        %v2300 = vpow.pop %v2299
        %v2301 = vsel %vm2118, %v2298, 0.0
        %2302 = vadd.xlane.f32.xlu0 %v2301
        %v2303 = vpop.xlane.xlu0 %2302
        %v2304 = vsel %vm2122, %v2300, 0.0
        %2305 = vadd.xlane.f32.xlu0 %v2304
        %v2306 = vpop.xlane.xlu0 %2305
        %v2307 = vrcp.pop %v2303
        %v2308 = vrcp.pop %v2306
        %v2309 = vmul.f32 %v2298, %v2307
        %v2310 = vmul.f32 %v2300, %v2308
        %v2311 = vpack.c.bf16 %v2310, %v2309
        %2312 = vrot.lane.b32.xlu0 %v2261, 48
        %v2313 = vpop.permute.xlu0 %2312
        %v2315 = vsel %vm2118, %v2311, 0
        %v2318 = vand.u32 %v2313, %v2151
        %2320 = vmatpush.bf16.msra.mxu0 0
        %2321 = vmatpush.bf16.msra.mxu0 0
        %2322 = vmatpush.bf16.msra.mxu0 0
        %2323 = vmatpush.bf16.msra.mxu0 0
        %2324 = vmatpush.bf16.msra.mxu0 0
        %2325 = vmatpush.bf16.msra.mxu0 0
        %2326 = vmatpush.bf16.msra.mxu0 0
        %2327 = vmatpush.bf16.msra.mxu0 %v2318
        %2328 = vmatmul.bf16.gmra.mxu0 %v2315
        %v2329 = vpop.f32.mrf.mxu0
        %v2330 = vadd.f32 0.0, %v2329
        %v2331 = vpop.f32.mrf.mxu0
        %v2332 = vadd.f32 0.0, %v2331
        %2333 = vdwg.mxu0
        %2336 = vrot.lane.b32.xlu0 %v2330, 16
        %v2337 = vpop.permute.xlu0 %2336
        %2338 = vrot.lane.b32.xlu0 %v2332, 16
        %v2339 = vpop.permute.xlu0 %2338
        %vm2342 = vcmask 195712
        %2343 = vst.msk [vmem:[#allocation5] sm:$0xff] %vm2342, %v2337
        %vm2344 = vcmask 188544
        %2345 = vst.msk [vmem:[#allocation5 + $0x8] sm:$0x1] %vm2344, %v2339
        %v2346 = vld [vmem:[#allocation4] sm:$0xff]
        %v2347 = vld [vmem:[#allocation4 + $0x8] sm:$0x1]
        %v2348 = vpack.c.bf16 %v2347, %v2346
        %2350 = vrot.lane.b32.xlu0 %v2348, 104
        %v2351 = vpop.permute.xlu0 %2350
        %2352 = vrot.lane.b32.xlu0 %v2348, 72
        %v2353 = vpop.permute.xlu0 %2352
        %v2355 = vsel %vm2095, %v2351, 0
        %v2358 = vsel %vm2095, %v2353, 0
        %2360 = vmatpush.bf16.xpose.msra.mxu0 0
        %2361 = vmatpush.bf16.xpose.msra.mxu0 0
        %2362 = vmatpush.bf16.xpose.msra.mxu0 0
        %2363 = vmatpush.bf16.xpose.msra.mxu0 0
        %2364 = vmatpush.bf16.xpose.msra.mxu0 0
        %2365 = vmatpush.bf16.xpose.msra.mxu0 0
        %2366 = vmatpush.bf16.xpose.msra.mxu0 0
        %2367 = vmatpush.bf16.xpose.msra.mxu0 %v2358
        %2368 = vmatmul.bf16.gmra.mxu0 %v2355
        %v2369 = vpop.f32.mrf.mxu0
        %v2370 = vadd.f32 0.0, %v2369
        %v2371 = vpop.f32.mrf.mxu0
        %v2372 = vadd.f32 0.0, %v2371
        %2373 = vdwg.mxu0
        %v2374 = vmul.f32 %v2370, 0.35355338
        %v2375 = vmul.f32 %v2372, 0.35355338
        %v2376 = vsel %vm2118, %v2374, -inf
        %2377 = vmax.xlane.f32.xlu0 %v2376
        %v2378 = vpop.xlane.xlu0 %2377
        %v2379 = vsel %vm2122, %v2375, -inf
        %2380 = vmax.xlane.f32.xlu0 %v2379
        %v2381 = vpop.xlane.xlu0 %2380
        %v2382 = vsub.f32 %v2374, %v2378
        %v2383 = vsub.f32 %v2375, %v2381
        %v2384 = vmul.f32 %v2382, 1.442695
        %v2385 = vpow.pop %v2384
        %v2386 = vmul.f32 %v2383, 1.442695
        %v2387 = vpow.pop %v2386
        %v2388 = vsel %vm2118, %v2385, 0.0
        %2389 = vadd.xlane.f32.xlu0 %v2388
        %v2390 = vpop.xlane.xlu0 %2389
        %v2391 = vsel %vm2122, %v2387, 0.0
        %2392 = vadd.xlane.f32.xlu0 %v2391
        %v2393 = vpop.xlane.xlu0 %2392
        %v2394 = vrcp.pop %v2390
        %v2395 = vrcp.pop %v2393
        %v2396 = vmul.f32 %v2385, %v2394
        %v2397 = vmul.f32 %v2387, %v2395
        %v2398 = vpack.c.bf16 %v2397, %v2396
        %2399 = vrot.lane.b32.xlu0 %v2348, 40
        %v2400 = vpop.permute.xlu0 %2399
        %v2402 = vsel %vm2118, %v2398, 0
        %v2405 = vand.u32 %v2400, %v2151
        %2407 = vmatpush.bf16.msra.mxu0 0
        %2408 = vmatpush.bf16.msra.mxu0 0
        %2409 = vmatpush.bf16.msra.mxu0 0
        %2410 = vmatpush.bf16.msra.mxu0 0
        %2411 = vmatpush.bf16.msra.mxu0 0
        %2412 = vmatpush.bf16.msra.mxu0 0
        %2413 = vmatpush.bf16.msra.mxu0 0
        %2414 = vmatpush.bf16.msra.mxu0 %v2405
        %2415 = vmatmul.bf16.gmra.mxu0 %v2402
        %v2416 = vpop.f32.mrf.mxu0
        %v2417 = vadd.f32 0.0, %v2416
        %v2418 = vpop.f32.mrf.mxu0
        %v2419 = vadd.f32 0.0, %v2418
        %2420 = vdwg.mxu0
        %2423 = vrot.lane.b32.xlu0 %v2417, 24
        %v2424 = vpop.permute.xlu0 %2423
        %2425 = vrot.lane.b32.xlu0 %v2419, 24
        %v2426 = vpop.permute.xlu0 %2425
        %vm2429 = vcmask 261312
        %2430 = vst.msk [vmem:[#allocation5] sm:$0xff] %vm2429, %v2424
        %vm2431 = vcmask 254144
        %2432 = vst.msk [vmem:[#allocation5 + $0x8] sm:$0x1] %vm2431, %v2426
        %v2433 = vld [vmem:[#allocation5] sm:$0xff]
        %v2434 = vld [vmem:[#allocation5 + $0x8] sm:$0x1]
        %v2435 = vpack.c.bf16 %v2434, %v2433
        %v2436 = vld [vmem:[%s45] sm:$0xf]
        %v2437 = vld [vmem:[%s45 + $0x4] sm:$0xf]
        %v2438 = vld [vmem:[%s45 + $0x8] sm:$0xf]
        %v2439 = vld [vmem:[%s45 + $0xc] sm:$0xf]
        %v2444 = vunpack.c.l.b16 %v2436
        %v2445 = vunpack.c.l.b16 %v2437
        %v2446 = vunpack.c.l.b16 %v2438
        %v2447 = vunpack.c.l.b16 %v2439
        %v2448 = vpack.c.b16 %v2445, %v2444
        %v2449 = vpack.c.b16 %v2447, %v2446
        %v2453 = vsel %vm1153, %v2435, 0
        %2455 = vmatpush.bf16.msra.mxu0 0
        %2456 = vmatpush.bf16.msra.mxu0 0
        %2457 = vmatpush.bf16.msra.mxu0 0
        %2458 = vmatpush.bf16.msra.mxu0 0
        %2459 = vmatpush.bf16.msra.mxu0 0
        %2460 = vmatpush.bf16.msra.mxu0 0
        %2461 = vmatpush.bf16.msra.mxu0 %v2449
        %2462 = vmatpush.bf16.msra.mxu0 %v2448
        %2463 = vmatmul.bf16.gmra.mxu0 %v2453
        %v2464 = vpop.f32.mrf.mxu0
        %v2465 = vadd.f32 0.0, %v2464
        %v2466 = vpop.f32.mrf.mxu0
        %v2467 = vadd.f32 0.0, %v2466
        %2468 = vdwg.mxu0
        %v2469 = vadd.f32 %v1990, %v2465
        %v2470 = vadd.f32 %v1991, %v2467
        %v2471 = vld [vmem:[%s47] sm:$0x1]
        %v2472 = vperm.slane %v2471, 0
        %v2473 = vadd.f32 %v2469, %v2472
        %v2474 = vadd.f32 %v2470, %v2472
        %v2475 = vld [vmem:[%s49] sm:$0x1]
        %v2476 = vld [vmem:[%s51] sm:$0x1]
        %v2477 = vsel %vm1153, %v2473, 0.0
        %2478 = vadd.xlane.f32.xlu0 %v2477
        %v2479 = vpop.xlane.xlu0 %2478
        %v2480 = vsel %vm1858, %v2474, 0.0
        %2481 = vadd.xlane.f32.xlu0 %v2480
        %v2482 = vpop.xlane.xlu0 %2481
        %v2483 = vmul.f32 %v2479, %v2006
        %v2484 = vmul.f32 %v2482, %v2006
        %v2485 = vsub.f32 %v2473, %v2483
        %v2486 = vsub.f32 %v2474, %v2484
        %v2487 = vmul.f32 %v2485, %v2485
        %v2488 = vmul.f32 %v2486, %v2486
        %v2489 = vsel %vm1153, %v2487, 0.0
        %2490 = vadd.xlane.f32.xlu0 %v2489
        %v2491 = vpop.xlane.xlu0 %2490
        %v2492 = vsel %vm1858, %v2488, 0.0
        %2493 = vadd.xlane.f32.xlu0 %v2492
        %v2494 = vpop.xlane.xlu0 %2493
        %v2495 = vmul.f32 %v2491, %v2006
        %v2496 = vmul.f32 %v2494, %v2006
        %v2497 = vadd.f32 %v2495, 1e-05
        %v2498 = vadd.f32 %v2496, 1e-05
        %v2499 = vrsqrt.pop %v2497
        %v2500 = vmul.f32 %v2499, %v2497
        %v2501 = vmul.f32 %v2500, %v2499
        %v2502 = vmul.f32 0.5, %v2501
        %v2503 = vsub.f32 1.5, %v2502
        %v2504 = vmul.f32 %v2499, %v2503
        %vm2505 = vweird.f32 %v2497
        %vm2506 = vweird.f32 %v2499
        %vm2507 = vmor %vm2505, %vm2506
        %v2508 = vsel %vm2507, %v2499, %v2504
        %v2509 = vrsqrt.pop %v2498
        %v2510 = vmul.f32 %v2509, %v2498
        %v2511 = vmul.f32 %v2510, %v2509
        %v2512 = vmul.f32 0.5, %v2511
        %v2513 = vsub.f32 1.5, %v2512
        %v2514 = vmul.f32 %v2509, %v2513
        %vm2515 = vweird.f32 %v2498
        %vm2516 = vweird.f32 %v2509
        %vm2517 = vmor %vm2515, %vm2516
        %v2518 = vsel %vm2517, %v2509, %v2514
        %v2519 = vmul.f32 %v2485, %v2508
        %v2520 = vmul.f32 %v2486, %v2518
        %v2521 = vperm.slane %v2475, 0
        %v2522 = vmul.f32 %v2519, %v2521
        %v2523 = vmul.f32 %v2520, %v2521
        %v2524 = vperm.slane %v2476, 0
        %v2525 = vadd.f32 %v2522, %v2524
        %v2526 = vadd.f32 %v2523, %v2524
        %v2527 = vpack.c.bf16 %v2526, %v2525
        %v2528 = vld [vmem:[%s53] sm:$0xf]
        %v2529 = vld [vmem:[%s53 + $0x4] sm:$0xf]
        %v2530 = vld [vmem:[%s53 + $0x8] sm:$0xf]
        %v2531 = vld [vmem:[%s53 + $0xc] sm:$0xf]
        %v2532 = vld [vmem:[%s55] sm:$0x1]
        %v2533 = vperm.slane %v2532, 0
        %v2538 = vunpack.c.l.b16 %v2528
        %v2539 = vunpack.c.l.b16 %v2529
        %v2540 = vunpack.c.l.b16 %v2530
        %v2541 = vunpack.c.l.b16 %v2531
        %v2542 = vpack.c.b16 %v2539, %v2538
        %v2543 = vpack.c.b16 %v2541, %v2540
        %v2547 = vsel %vm1153, %v2527, 0
        %2549 = vmatpush.bf16.msra.mxu0 0
        %2550 = vmatpush.bf16.msra.mxu0 0
        %2551 = vmatpush.bf16.msra.mxu0 0
        %2552 = vmatpush.bf16.msra.mxu0 0
        %2553 = vmatpush.bf16.msra.mxu0 0
        %2554 = vmatpush.bf16.msra.mxu0 0
        %2555 = vmatpush.bf16.msra.mxu0 %v2543
        %2556 = vmatpush.bf16.msra.mxu0 %v2542
        %2557 = vmatmul.bf16.gmra.mxu0 %v2547
        %v2558 = vpop.f32.mrf.mxu0
        %v2559 = vadd.f32 %v2533, %v2558
        %v2560 = vpop.f32.mrf.mxu0
        %v2561 = vadd.f32 %v2533, %v2560
        %2562 = vdwg.mxu0
        %v2563 = vmul.f32 %v2559, 0.5
        %v2564 = vmul.f32 %v2561, 0.5
        %v2565 = vmul.f32 %v2559, 0.044715
        %v2566 = vmul.f32 %v2561, 0.044715
        %v2567 = vmul.f32 %v2565, %v2559
        %v2568 = vmul.f32 %v2566, %v2561
        %v2569 = vmul.f32 %v2567, %v2559
        %v2570 = vmul.f32 %v2568, %v2561
        %v2571 = vadd.f32 %v2559, %v2569
        %v2572 = vadd.f32 %v2561, %v2570
        %v2573 = vmul.f32 %v2571, 0.7978846
        %v2574 = vmul.f32 %v2572, 0.7978846
        %v2575 = vtanh.pop %v2573
        %v2576 = vtanh.pop %v2574
        %v2577 = vadd.f32 %v2575, 1.0
        %v2578 = vadd.f32 %v2576, 1.0
        %v2579 = vmul.f32 %v2563, %v2577
        %v2580 = vmul.f32 %v2564, %v2578
        %v2581 = vpack.c.bf16 %v2580, %v2579
        %v2582 = vld [vmem:[%s57] sm:$0xf]
        %v2583 = vld [vmem:[%s57 + $0x4] sm:$0xf]
        %v2584 = vld [vmem:[%s57 + $0x8] sm:$0xf]
        %v2585 = vld [vmem:[%s57 + $0xc] sm:$0xf]
        %v2586 = vld [vmem:[%s57 + $0x10] sm:$0xf]
        %v2587 = vld [vmem:[%s57 + $0x14] sm:$0xf]
        %v2588 = vld [vmem:[%s57 + $0x18] sm:$0xf]
        %v2589 = vld [vmem:[%s57 + $0x1c] sm:$0xf]
        %v2590 = vld [vmem:[%s57 + $0x20] sm:$0xf]
        %v2591 = vld [vmem:[%s57 + $0x24] sm:$0xf]
        %v2592 = vld [vmem:[%s57 + $0x28] sm:$0xf]
        %v2593 = vld [vmem:[%s57 + $0x2c] sm:$0xf]
        %v2594 = vld [vmem:[%s57 + $0x30] sm:$0xf]
        %v2595 = vld [vmem:[%s57 + $0x34] sm:$0xf]
        %v2596 = vld [vmem:[%s57 + $0x38] sm:$0xf]
        %v2597 = vld [vmem:[%s57 + $0x3c] sm:$0xf]
        %v2598 = vld [vmem:[%s59] sm:$0x1]
        %v2599 = vperm.slane %v2598, 0
        %v2616 = vunpack.c.l.b16 %v2582
        %v2617 = vunpack.c.l.b16 %v2583
        %v2618 = vunpack.c.l.b16 %v2584
        %v2619 = vunpack.c.l.b16 %v2585
        %v2620 = vunpack.c.l.b16 %v2586
        %v2621 = vunpack.c.l.b16 %v2587
        %v2622 = vunpack.c.l.b16 %v2588
        %v2623 = vunpack.c.l.b16 %v2589
        %v2624 = vunpack.c.l.b16 %v2590
        %v2625 = vunpack.c.l.b16 %v2591
        %v2626 = vunpack.c.l.b16 %v2592
        %v2627 = vunpack.c.l.b16 %v2593
        %v2628 = vunpack.c.l.b16 %v2594
        %v2629 = vunpack.c.l.b16 %v2595
        %v2630 = vunpack.c.l.b16 %v2596
        %v2631 = vunpack.c.l.b16 %v2597
        %v2632 = vpack.c.b16 %v2617, %v2616
        %v2633 = vpack.c.b16 %v2619, %v2618
        %v2634 = vpack.c.b16 %v2621, %v2620
        %v2635 = vpack.c.b16 %v2623, %v2622
        %v2636 = vpack.c.b16 %v2625, %v2624
        %v2637 = vpack.c.b16 %v2627, %v2626
        %v2638 = vpack.c.b16 %v2629, %v2628
        %v2639 = vpack.c.b16 %v2631, %v2630
        %2648 = vmatpush.bf16.msra.mxu0 %v2639
        %2649 = vmatpush.bf16.msra.mxu0 %v2638
        %2650 = vmatpush.bf16.msra.mxu0 %v2637
        %2651 = vmatpush.bf16.msra.mxu0 %v2636
        %2652 = vmatpush.bf16.msra.mxu0 %v2635
        %2653 = vmatpush.bf16.msra.mxu0 %v2634
        %2654 = vmatpush.bf16.msra.mxu0 %v2633
        %2655 = vmatpush.bf16.msra.mxu0 %v2632
        %2656 = vmatmul.bf16.gmra.mxu0 %v2581
        %v2657 = vpop.f32.mrf.mxu0
        %v2658 = vadd.f32 %v2599, %v2657
        %v2659 = vpop.f32.mrf.mxu0
        %v2660 = vadd.f32 %v2599, %v2659
        %2661 = vdwg.mxu0
        %v2662 = vadd.f32 %v2473, %v2658
        %v2663 = vadd.f32 %v2474, %v2660
        %v2664 = vadd.f32 %v2662, %v1988
        %v2665 = vadd.f32 %v2663, %v1989
        %v2666 = vld [vmem:[%s39 + $0x1] sm:$0x1]
        %v2667 = vld [vmem:[%s41 + $0x1] sm:$0x1]
        %v2668 = vsel %vm1153, %v2664, 0.0
        %2669 = vadd.xlane.f32.xlu0 %v2668
        %v2670 = vpop.xlane.xlu0 %2669
        %v2671 = vsel %vm1858, %v2665, 0.0
        %2672 = vadd.xlane.f32.xlu0 %v2671
        %v2673 = vpop.xlane.xlu0 %2672
        %v2674 = vmul.f32 %v2670, %v2006
        %v2675 = vmul.f32 %v2673, %v2006
        %v2676 = vsub.f32 %v2664, %v2674
        %v2677 = vsub.f32 %v2665, %v2675
        %v2678 = vmul.f32 %v2676, %v2676
        %v2679 = vmul.f32 %v2677, %v2677
        %v2680 = vsel %vm1153, %v2678, 0.0
        %2681 = vadd.xlane.f32.xlu0 %v2680
        %v2682 = vpop.xlane.xlu0 %2681
        %v2683 = vsel %vm1858, %v2679, 0.0
        %2684 = vadd.xlane.f32.xlu0 %v2683
        %v2685 = vpop.xlane.xlu0 %2684
        %v2686 = vmul.f32 %v2682, %v2006
        %v2687 = vmul.f32 %v2685, %v2006
        %v2688 = vadd.f32 %v2686, 1e-05
        %v2689 = vadd.f32 %v2687, 1e-05
        %v2690 = vrsqrt.pop %v2688
        %v2691 = vmul.f32 %v2690, %v2688
        %v2692 = vmul.f32 %v2691, %v2690
        %v2693 = vmul.f32 0.5, %v2692
        %v2694 = vsub.f32 1.5, %v2693
        %v2695 = vmul.f32 %v2690, %v2694
        %vm2696 = vweird.f32 %v2688
        %vm2697 = vweird.f32 %v2690
        %vm2698 = vmor %vm2696, %vm2697
        %v2699 = vsel %vm2698, %v2690, %v2695
        %v2700 = vrsqrt.pop %v2689
        %v2701 = vmul.f32 %v2700, %v2689
        %v2702 = vmul.f32 %v2701, %v2700
        %v2703 = vmul.f32 0.5, %v2702
        %v2704 = vsub.f32 1.5, %v2703
        %v2705 = vmul.f32 %v2700, %v2704
        %vm2706 = vweird.f32 %v2689
        %vm2707 = vweird.f32 %v2700
        %vm2708 = vmor %vm2706, %vm2707
        %v2709 = vsel %vm2708, %v2700, %v2705
        %v2710 = vmul.f32 %v2676, %v2699
        %v2711 = vmul.f32 %v2677, %v2709
        %v2712 = vperm.slane %v2666, 0
        %v2713 = vmul.f32 %v2710, %v2712
        %v2714 = vmul.f32 %v2711, %v2712
        %v2715 = vperm.slane %v2667, 0
        %v2716 = vadd.f32 %v2713, %v2715
        %v2717 = vadd.f32 %v2714, %v2715
        %v2718 = vpack.c.bf16 %v2717, %v2716
        %s2719 = scalar_lea.vmem %s43, 16
        %v2720 = vld [vmem:[%s2719] sm:$0xf]
        %v2721 = vld [vmem:[%s2719 + $0x4] sm:$0xf]
        %v2722 = vld [vmem:[%s2719 + $0x8] sm:$0xf]
        %v2723 = vld [vmem:[%s2719 + $0xc] sm:$0xf]
        %v2728 = vunpack.c.l.b16 %v2720
        %v2729 = vunpack.c.l.b16 %v2721
        %v2730 = vunpack.c.l.b16 %v2722
        %v2731 = vunpack.c.l.b16 %v2723
        %v2732 = vpack.c.b16 %v2729, %v2728
        %v2733 = vpack.c.b16 %v2731, %v2730
        %v2737 = vsel %vm1153, %v2718, 0
        %2739 = vmatpush.bf16.msra.mxu0 0
        %2740 = vmatpush.bf16.msra.mxu0 0
        %2741 = vmatpush.bf16.msra.mxu0 0
        %2742 = vmatpush.bf16.msra.mxu0 0
        %2743 = vmatpush.bf16.msra.mxu0 0
        %2744 = vmatpush.bf16.msra.mxu0 0
        %2745 = vmatpush.bf16.msra.mxu0 %v2733
        %2746 = vmatpush.bf16.msra.mxu0 %v2732
        %2747 = vmatmul.bf16.gmra.mxu0 %v2737
        %v2748 = vpop.f32.mrf.mxu0
        %v2749 = vadd.f32 0.0, %v2748
        %v2750 = vpop.f32.mrf.mxu0
        %v2751 = vadd.f32 0.0, %v2750
        %2752 = vdwg.mxu0
        %2753 = vst.msk [vmem:[#allocation4] sm:$0xff] %vm2085, %v2749
        %2754 = vst.msk [vmem:[#allocation4 + $0x8] sm:$0x1] %vm2087, %v2751
        %v2755 = vld [vmem:[#allocation4] sm:$0xff]
        %v2756 = vld [vmem:[#allocation4 + $0x8] sm:$0x1]
        %v2757 = vpack.c.bf16 %v2756, %v2755
        %2759 = vrot.lane.b32.xlu0 %v2757, 96
        %v2760 = vpop.permute.xlu0 %2759
        %v2762 = vsel %vm2095, %v2757, 0
        %v2765 = vsel %vm2095, %v2760, 0
        %2767 = vmatpush.bf16.xpose.msra.mxu0 0
        %2768 = vmatpush.bf16.xpose.msra.mxu0 0
        %2769 = vmatpush.bf16.xpose.msra.mxu0 0
        %2770 = vmatpush.bf16.xpose.msra.mxu0 0
        %2771 = vmatpush.bf16.xpose.msra.mxu0 0
        %2772 = vmatpush.bf16.xpose.msra.mxu0 0
        %2773 = vmatpush.bf16.xpose.msra.mxu0 0
        %2774 = vmatpush.bf16.xpose.msra.mxu0 %v2765
        %2775 = vmatmul.bf16.gmra.mxu0 %v2762
        %v2776 = vpop.f32.mrf.mxu0
        %v2777 = vadd.f32 0.0, %v2776
        %v2778 = vpop.f32.mrf.mxu0
        %v2779 = vadd.f32 0.0, %v2778
        %2780 = vdwg.mxu0
        %v2781 = vmul.f32 %v2777, 0.35355338
        %v2782 = vmul.f32 %v2779, 0.35355338
        %v2783 = vsel %vm2118, %v2781, -inf
        %2784 = vmax.xlane.f32.xlu0 %v2783
        %v2785 = vpop.xlane.xlu0 %2784
        %v2786 = vsel %vm2122, %v2782, -inf
        %2787 = vmax.xlane.f32.xlu0 %v2786
        %v2788 = vpop.xlane.xlu0 %2787
        %v2789 = vsub.f32 %v2781, %v2785
        %v2790 = vsub.f32 %v2782, %v2788
        %v2791 = vmul.f32 %v2789, 1.442695
        %v2792 = vpow.pop %v2791
        %v2793 = vmul.f32 %v2790, 1.442695
        %v2794 = vpow.pop %v2793
        %v2795 = vsel %vm2118, %v2792, 0.0
        %2796 = vadd.xlane.f32.xlu0 %v2795
        %v2797 = vpop.xlane.xlu0 %2796
        %v2798 = vsel %vm2122, %v2794, 0.0
        %2799 = vadd.xlane.f32.xlu0 %v2798
        %v2800 = vpop.xlane.xlu0 %2799
        %v2801 = vrcp.pop %v2797
        %v2802 = vrcp.pop %v2800
        %v2803 = vmul.f32 %v2792, %v2801
        %v2804 = vmul.f32 %v2794, %v2802
        %v2805 = vpack.c.bf16 %v2804, %v2803
        %2806 = vrot.lane.b32.xlu0 %v2757, 64
        %v2807 = vpop.permute.xlu0 %2806
        %v2809 = vsel %vm2118, %v2805, 0
        %v2812 = vand.u32 %v2807, %v2151
        %2814 = vmatpush.bf16.msra.mxu0 0
        %2815 = vmatpush.bf16.msra.mxu0 0
        %2816 = vmatpush.bf16.msra.mxu0 0
        %2817 = vmatpush.bf16.msra.mxu0 0
        %2818 = vmatpush.bf16.msra.mxu0 0
        %2819 = vmatpush.bf16.msra.mxu0 0
        %2820 = vmatpush.bf16.msra.mxu0 0
        %2821 = vmatpush.bf16.msra.mxu0 %v2812
        %2822 = vmatmul.bf16.gmra.mxu0 %v2809
        %v2823 = vpop.f32.mrf.mxu0
        %v2824 = vadd.f32 0.0, %v2823
        %v2825 = vpop.f32.mrf.mxu0
        %v2826 = vadd.f32 0.0, %v2825
        %2827 = vdwg.mxu0
        %2828 = vst.msk [vmem:[#allocation5] sm:$0xff] %vm2095, %v2824
        %2829 = vst.msk [vmem:[#allocation5 + $0x8] sm:$0x1] %vm2170, %v2826
        %v2830 = vld [vmem:[#allocation4] sm:$0xff]
        %v2831 = vld [vmem:[#allocation4 + $0x8] sm:$0x1]
        %v2832 = vpack.c.bf16 %v2831, %v2830
        %2834 = vrot.lane.b32.xlu0 %v2832, 120
        %v2835 = vpop.permute.xlu0 %2834
        %2836 = vrot.lane.b32.xlu0 %v2832, 88
        %v2837 = vpop.permute.xlu0 %2836
        %v2839 = vsel %vm2095, %v2835, 0
        %v2842 = vsel %vm2095, %v2837, 0
        %2844 = vmatpush.bf16.xpose.msra.mxu0 0
        %2845 = vmatpush.bf16.xpose.msra.mxu0 0
        %2846 = vmatpush.bf16.xpose.msra.mxu0 0
        %2847 = vmatpush.bf16.xpose.msra.mxu0 0
        %2848 = vmatpush.bf16.xpose.msra.mxu0 0
        %2849 = vmatpush.bf16.xpose.msra.mxu0 0
        %2850 = vmatpush.bf16.xpose.msra.mxu0 0
        %2851 = vmatpush.bf16.xpose.msra.mxu0 %v2842
        %2852 = vmatmul.bf16.gmra.mxu0 %v2839
        %v2853 = vpop.f32.mrf.mxu0
        %v2854 = vadd.f32 0.0, %v2853
        %v2855 = vpop.f32.mrf.mxu0
        %v2856 = vadd.f32 0.0, %v2855
        %2857 = vdwg.mxu0
        %v2858 = vmul.f32 %v2854, 0.35355338
        %v2859 = vmul.f32 %v2856, 0.35355338
        %v2860 = vsel %vm2118, %v2858, -inf
        %2861 = vmax.xlane.f32.xlu0 %v2860
        %v2862 = vpop.xlane.xlu0 %2861
        %v2863 = vsel %vm2122, %v2859, -inf
        %2864 = vmax.xlane.f32.xlu0 %v2863
        %v2865 = vpop.xlane.xlu0 %2864
        %v2866 = vsub.f32 %v2858, %v2862
        %v2867 = vsub.f32 %v2859, %v2865
        %v2868 = vmul.f32 %v2866, 1.442695
        %v2869 = vpow.pop %v2868
        %v2870 = vmul.f32 %v2867, 1.442695
        %v2871 = vpow.pop %v2870
        %v2872 = vsel %vm2118, %v2869, 0.0
        %2873 = vadd.xlane.f32.xlu0 %v2872
        %v2874 = vpop.xlane.xlu0 %2873
        %v2875 = vsel %vm2122, %v2871, 0.0
        %2876 = vadd.xlane.f32.xlu0 %v2875
        %v2877 = vpop.xlane.xlu0 %2876
        %v2878 = vrcp.pop %v2874
        %v2879 = vrcp.pop %v2877
        %v2880 = vmul.f32 %v2869, %v2878
        %v2881 = vmul.f32 %v2871, %v2879
        %v2882 = vpack.c.bf16 %v2881, %v2880
        %2883 = vrot.lane.b32.xlu0 %v2832, 56
        %v2884 = vpop.permute.xlu0 %2883
        %v2886 = vsel %vm2118, %v2882, 0
        %v2889 = vand.u32 %v2884, %v2151
        %2891 = vmatpush.bf16.msra.mxu0 0
        %2892 = vmatpush.bf16.msra.mxu0 0
        %2893 = vmatpush.bf16.msra.mxu0 0
        %2894 = vmatpush.bf16.msra.mxu0 0
        %2895 = vmatpush.bf16.msra.mxu0 0
        %2896 = vmatpush.bf16.msra.mxu0 0
        %2897 = vmatpush.bf16.msra.mxu0 0
        %2898 = vmatpush.bf16.msra.mxu0 %v2889
        %2899 = vmatmul.bf16.gmra.mxu0 %v2886
        %v2900 = vpop.f32.mrf.mxu0
        %v2901 = vadd.f32 0.0, %v2900
        %v2902 = vpop.f32.mrf.mxu0
        %v2903 = vadd.f32 0.0, %v2902
        %2904 = vdwg.mxu0
        %2907 = vrot.lane.b32.xlu0 %v2901, 8
        %v2908 = vpop.permute.xlu0 %2907
        %2909 = vrot.lane.b32.xlu0 %v2903, 8
        %v2910 = vpop.permute.xlu0 %2909
        %2913 = vst.msk [vmem:[#allocation5] sm:$0xff] %vm2255, %v2908
        %2914 = vst.msk [vmem:[#allocation5 + $0x8] sm:$0x1] %vm2257, %v2910
        %v2915 = vld [vmem:[#allocation4] sm:$0xff]
        %v2916 = vld [vmem:[#allocation4 + $0x8] sm:$0x1]
        %v2917 = vpack.c.bf16 %v2916, %v2915
        %2919 = vrot.lane.b32.xlu0 %v2917, 112
        %v2920 = vpop.permute.xlu0 %2919
        %2921 = vrot.lane.b32.xlu0 %v2917, 80
        %v2922 = vpop.permute.xlu0 %2921
        %v2924 = vsel %vm2095, %v2920, 0
        %v2927 = vsel %vm2095, %v2922, 0
        %2929 = vmatpush.bf16.xpose.msra.mxu0 0
        %2930 = vmatpush.bf16.xpose.msra.mxu0 0
        %2931 = vmatpush.bf16.xpose.msra.mxu0 0
        %2932 = vmatpush.bf16.xpose.msra.mxu0 0
        %2933 = vmatpush.bf16.xpose.msra.mxu0 0
        %2934 = vmatpush.bf16.xpose.msra.mxu0 0
        %2935 = vmatpush.bf16.xpose.msra.mxu0 0
        %2936 = vmatpush.bf16.xpose.msra.mxu0 %v2927
        %2937 = vmatmul.bf16.gmra.mxu0 %v2924
        %v2938 = vpop.f32.mrf.mxu0
        %v2939 = vadd.f32 0.0, %v2938
        %v2940 = vpop.f32.mrf.mxu0
        %v2941 = vadd.f32 0.0, %v2940
        %2942 = vdwg.mxu0
        %v2943 = vmul.f32 %v2939, 0.35355338
        %v2944 = vmul.f32 %v2941, 0.35355338
        %v2945 = vsel %vm2118, %v2943, -inf
        %2946 = vmax.xlane.f32.xlu0 %v2945
        %v2947 = vpop.xlane.xlu0 %2946
        %v2948 = vsel %vm2122, %v2944, -inf
        %2949 = vmax.xlane.f32.xlu0 %v2948
        %v2950 = vpop.xlane.xlu0 %2949
        %v2951 = vsub.f32 %v2943, %v2947
        %v2952 = vsub.f32 %v2944, %v2950
        %v2953 = vmul.f32 %v2951, 1.442695
        %v2954 = vpow.pop %v2953
        %v2955 = vmul.f32 %v2952, 1.442695
        %v2956 = vpow.pop %v2955
        %v2957 = vsel %vm2118, %v2954, 0.0
        %2958 = vadd.xlane.f32.xlu0 %v2957
        %v2959 = vpop.xlane.xlu0 %2958
        %v2960 = vsel %vm2122, %v2956, 0.0
        %2961 = vadd.xlane.f32.xlu0 %v2960
        %v2962 = vpop.xlane.xlu0 %2961
        %v2963 = vrcp.pop %v2959
        %v2964 = vrcp.pop %v2962
        %v2965 = vmul.f32 %v2954, %v2963
        %v2966 = vmul.f32 %v2956, %v2964
        %v2967 = vpack.c.bf16 %v2966, %v2965
        %2968 = vrot.lane.b32.xlu0 %v2917, 48
        %v2969 = vpop.permute.xlu0 %2968
        %v2971 = vsel %vm2118, %v2967, 0
        %v2974 = vand.u32 %v2969, %v2151
        %2976 = vmatpush.bf16.msra.mxu0 0
        %2977 = vmatpush.bf16.msra.mxu0 0
        %2978 = vmatpush.bf16.msra.mxu0 0
        %2979 = vmatpush.bf16.msra.mxu0 0
        %2980 = vmatpush.bf16.msra.mxu0 0
        %2981 = vmatpush.bf16.msra.mxu0 0
        %2982 = vmatpush.bf16.msra.mxu0 0
        %2983 = vmatpush.bf16.msra.mxu0 %v2974
        %2984 = vmatmul.bf16.gmra.mxu0 %v2971
        %v2985 = vpop.f32.mrf.mxu0
        %v2986 = vadd.f32 0.0, %v2985
        %v2987 = vpop.f32.mrf.mxu0
        %v2988 = vadd.f32 0.0, %v2987
        %2989 = vdwg.mxu0
        %2992 = vrot.lane.b32.xlu0 %v2986, 16
        %v2993 = vpop.permute.xlu0 %2992
        %2994 = vrot.lane.b32.xlu0 %v2988, 16
        %v2995 = vpop.permute.xlu0 %2994
        %2998 = vst.msk [vmem:[#allocation5] sm:$0xff] %vm2342, %v2993
        %2999 = vst.msk [vmem:[#allocation5 + $0x8] sm:$0x1] %vm2344, %v2995
        %v3000 = vld [vmem:[#allocation4] sm:$0xff]
        %v3001 = vld [vmem:[#allocation4 + $0x8] sm:$0x1]
        %v3002 = vpack.c.bf16 %v3001, %v3000
        %3004 = vrot.lane.b32.xlu0 %v3002, 104
        %v3005 = vpop.permute.xlu0 %3004
        %3006 = vrot.lane.b32.xlu0 %v3002, 72
        %v3007 = vpop.permute.xlu0 %3006
        %v3009 = vsel %vm2095, %v3005, 0
        %v3012 = vsel %vm2095, %v3007, 0
        %3014 = vmatpush.bf16.xpose.msra.mxu0 0
        %3015 = vmatpush.bf16.xpose.msra.mxu0 0
        %3016 = vmatpush.bf16.xpose.msra.mxu0 0
        %3017 = vmatpush.bf16.xpose.msra.mxu0 0
        %3018 = vmatpush.bf16.xpose.msra.mxu0 0
        %3019 = vmatpush.bf16.xpose.msra.mxu0 0
        %3020 = vmatpush.bf16.xpose.msra.mxu0 0
        %3021 = vmatpush.bf16.xpose.msra.mxu0 %v3012
        %3022 = vmatmul.bf16.gmra.mxu0 %v3009
        %v3023 = vpop.f32.mrf.mxu0
        %v3024 = vadd.f32 0.0, %v3023
        %v3025 = vpop.f32.mrf.mxu0
        %v3026 = vadd.f32 0.0, %v3025
        %3027 = vdwg.mxu0
        %v3028 = vmul.f32 %v3024, 0.35355338
        %v3029 = vmul.f32 %v3026, 0.35355338
        %v3030 = vsel %vm2118, %v3028, -inf
        %3031 = vmax.xlane.f32.xlu0 %v3030
        %v3032 = vpop.xlane.xlu0 %3031
        %v3033 = vsel %vm2122, %v3029, -inf
        %3034 = vmax.xlane.f32.xlu0 %v3033
        %v3035 = vpop.xlane.xlu0 %3034
        %v3036 = vsub.f32 %v3028, %v3032
        %v3037 = vsub.f32 %v3029, %v3035
        %v3038 = vmul.f32 %v3036, 1.442695
        %v3039 = vpow.pop %v3038
        %v3040 = vmul.f32 %v3037, 1.442695
        %v3041 = vpow.pop %v3040
        %v3042 = vsel %vm2118, %v3039, 0.0
        %3043 = vadd.xlane.f32.xlu0 %v3042
        %v3044 = vpop.xlane.xlu0 %3043
        %v3045 = vsel %vm2122, %v3041, 0.0
        %3046 = vadd.xlane.f32.xlu0 %v3045
        %v3047 = vpop.xlane.xlu0 %3046
        %v3048 = vrcp.pop %v3044
        %v3049 = vrcp.pop %v3047
        %v3050 = vmul.f32 %v3039, %v3048
        %v3051 = vmul.f32 %v3041, %v3049
        %v3052 = vpack.c.bf16 %v3051, %v3050
        %3053 = vrot.lane.b32.xlu0 %v3002, 40
        %v3054 = vpop.permute.xlu0 %3053
        %v3056 = vsel %vm2118, %v3052, 0
        %v3059 = vand.u32 %v3054, %v2151
        %3061 = vmatpush.bf16.msra.mxu0 0
        %3062 = vmatpush.bf16.msra.mxu0 0
        %3063 = vmatpush.bf16.msra.mxu0 0
        %3064 = vmatpush.bf16.msra.mxu0 0
        %3065 = vmatpush.bf16.msra.mxu0 0
        %3066 = vmatpush.bf16.msra.mxu0 0
        %3067 = vmatpush.bf16.msra.mxu0 0
        %3068 = vmatpush.bf16.msra.mxu0 %v3059
        %3069 = vmatmul.bf16.gmra.mxu0 %v3056
        %v3070 = vpop.f32.mrf.mxu0
        %v3071 = vadd.f32 0.0, %v3070
        %v3072 = vpop.f32.mrf.mxu0
        %v3073 = vadd.f32 0.0, %v3072
        %3074 = vdwg.mxu0
        %3077 = vrot.lane.b32.xlu0 %v3071, 24
        %v3078 = vpop.permute.xlu0 %3077
        %3079 = vrot.lane.b32.xlu0 %v3073, 24
        %v3080 = vpop.permute.xlu0 %3079
        %3083 = vst.msk [vmem:[#allocation5] sm:$0xff] %vm2429, %v3078
        %3084 = vst.msk [vmem:[#allocation5 + $0x8] sm:$0x1] %vm2431, %v3080
        %v3085 = vld [vmem:[#allocation5] sm:$0xff]
        %v3086 = vld [vmem:[#allocation5 + $0x8] sm:$0x1]
        %v3087 = vpack.c.bf16 %v3086, %v3085
        %s3088 = scalar_lea.vmem %s45, 16
        %v3089 = vld [vmem:[%s3088] sm:$0xf]
        %v3090 = vld [vmem:[%s3088 + $0x4] sm:$0xf]
        %v3091 = vld [vmem:[%s3088 + $0x8] sm:$0xf]
        %v3092 = vld [vmem:[%s3088 + $0xc] sm:$0xf]
        %v3097 = vunpack.c.l.b16 %v3089
        %v3098 = vunpack.c.l.b16 %v3090
        %v3099 = vunpack.c.l.b16 %v3091
        %v3100 = vunpack.c.l.b16 %v3092
        %v3101 = vpack.c.b16 %v3098, %v3097
        %v3102 = vpack.c.b16 %v3100, %v3099
        %v3106 = vsel %vm1153, %v3087, 0
        %3108 = vmatpush.bf16.msra.mxu0 0
        %3109 = vmatpush.bf16.msra.mxu0 0
        %3110 = vmatpush.bf16.msra.mxu0 0
        %3111 = vmatpush.bf16.msra.mxu0 0
        %3112 = vmatpush.bf16.msra.mxu0 0
        %3113 = vmatpush.bf16.msra.mxu0 0
        %3114 = vmatpush.bf16.msra.mxu0 %v3102
        %3115 = vmatpush.bf16.msra.mxu0 %v3101
        %3116 = vmatmul.bf16.gmra.mxu0 %v3106
        %v3117 = vpop.f32.mrf.mxu0
        %v3118 = vadd.f32 0.0, %v3117
        %v3119 = vpop.f32.mrf.mxu0
        %v3120 = vadd.f32 0.0, %v3119
        %3121 = vdwg.mxu0
        %v3122 = vadd.f32 %v2664, %v3118
        %v3123 = vadd.f32 %v2665, %v3120
        %v3124 = vld [vmem:[%s47 + $0x1] sm:$0x1]
        %v3125 = vperm.slane %v3124, 0
        %v3126 = vadd.f32 %v3122, %v3125
        %v3127 = vadd.f32 %v3123, %v3125
        %v3128 = vld [vmem:[%s49 + $0x1] sm:$0x1]
        %v3129 = vld [vmem:[%s51 + $0x1] sm:$0x1]
        %v3130 = vsel %vm1153, %v3126, 0.0
        %3131 = vadd.xlane.f32.xlu0 %v3130
        %v3132 = vpop.xlane.xlu0 %3131
        %v3133 = vsel %vm1858, %v3127, 0.0
        %3134 = vadd.xlane.f32.xlu0 %v3133
        %v3135 = vpop.xlane.xlu0 %3134
        %v3136 = vmul.f32 %v3132, %v2006
        %v3137 = vmul.f32 %v3135, %v2006
        %v3138 = vsub.f32 %v3126, %v3136
        %v3139 = vsub.f32 %v3127, %v3137
        %v3140 = vmul.f32 %v3138, %v3138
        %v3141 = vmul.f32 %v3139, %v3139
        %v3142 = vsel %vm1153, %v3140, 0.0
        %3143 = vadd.xlane.f32.xlu0 %v3142
        %v3144 = vpop.xlane.xlu0 %3143
        %v3145 = vsel %vm1858, %v3141, 0.0
        %3146 = vadd.xlane.f32.xlu0 %v3145
        %v3147 = vpop.xlane.xlu0 %3146
        %v3148 = vmul.f32 %v3144, %v2006
        %v3149 = vmul.f32 %v3147, %v2006
        %v3150 = vadd.f32 %v3148, 1e-05
        %v3151 = vadd.f32 %v3149, 1e-05
        %v3152 = vrsqrt.pop %v3150
        %v3153 = vmul.f32 %v3152, %v3150
        %v3154 = vmul.f32 %v3153, %v3152
        %v3155 = vmul.f32 0.5, %v3154
        %v3156 = vsub.f32 1.5, %v3155
        %v3157 = vmul.f32 %v3152, %v3156
        %vm3158 = vweird.f32 %v3150
        %vm3159 = vweird.f32 %v3152
        %vm3160 = vmor %vm3158, %vm3159
        %v3161 = vsel %vm3160, %v3152, %v3157
        %v3162 = vrsqrt.pop %v3151
        %v3163 = vmul.f32 %v3162, %v3151
        %v3164 = vmul.f32 %v3163, %v3162
        %v3165 = vmul.f32 0.5, %v3164
        %v3166 = vsub.f32 1.5, %v3165
        %v3167 = vmul.f32 %v3162, %v3166
        %vm3168 = vweird.f32 %v3151
        %vm3169 = vweird.f32 %v3162
        %vm3170 = vmor %vm3168, %vm3169
        %v3171 = vsel %vm3170, %v3162, %v3167
        %v3172 = vmul.f32 %v3138, %v3161
        %v3173 = vmul.f32 %v3139, %v3171
        %v3174 = vperm.slane %v3128, 0
        %v3175 = vmul.f32 %v3172, %v3174
        %v3176 = vmul.f32 %v3173, %v3174
        %v3177 = vperm.slane %v3129, 0
        %v3178 = vadd.f32 %v3175, %v3177
        %v3179 = vadd.f32 %v3176, %v3177
        %v3180 = vpack.c.bf16 %v3179, %v3178
        %s3181 = scalar_lea.vmem %s53, 16
        %v3182 = vld [vmem:[%s3181] sm:$0xf]
        %v3183 = vld [vmem:[%s3181 + $0x4] sm:$0xf]
        %v3184 = vld [vmem:[%s3181 + $0x8] sm:$0xf]
        %v3185 = vld [vmem:[%s3181 + $0xc] sm:$0xf]
        %v3186 = vld [vmem:[%s55 + $0x1] sm:$0x1]
        %v3187 = vperm.slane %v3186, 0
        %v3192 = vunpack.c.l.b16 %v3182
        %v3193 = vunpack.c.l.b16 %v3183
        %v3194 = vunpack.c.l.b16 %v3184
        %v3195 = vunpack.c.l.b16 %v3185
        %v3196 = vpack.c.b16 %v3193, %v3192
        %v3197 = vpack.c.b16 %v3195, %v3194
        %v3201 = vsel %vm1153, %v3180, 0
        %3203 = vmatpush.bf16.msra.mxu0 0
        %3204 = vmatpush.bf16.msra.mxu0 0
        %3205 = vmatpush.bf16.msra.mxu0 0
        %3206 = vmatpush.bf16.msra.mxu0 0
        %3207 = vmatpush.bf16.msra.mxu0 0
        %3208 = vmatpush.bf16.msra.mxu0 0
        %3209 = vmatpush.bf16.msra.mxu0 %v3197
        %3210 = vmatpush.bf16.msra.mxu0 %v3196
        %3211 = vmatmul.bf16.gmra.mxu0 %v3201
        %v3212 = vpop.f32.mrf.mxu0
        %v3213 = vadd.f32 %v3187, %v3212
        %v3214 = vpop.f32.mrf.mxu0
        %v3215 = vadd.f32 %v3187, %v3214
        %3216 = vdwg.mxu0
        %v3217 = vmul.f32 %v3213, 0.5
        %v3218 = vmul.f32 %v3215, 0.5
        %v3219 = vmul.f32 %v3213, 0.044715
        %v3220 = vmul.f32 %v3215, 0.044715
        %v3221 = vmul.f32 %v3219, %v3213
        %v3222 = vmul.f32 %v3220, %v3215
        %v3223 = vmul.f32 %v3221, %v3213
        %v3224 = vmul.f32 %v3222, %v3215
        %v3225 = vadd.f32 %v3213, %v3223
        %v3226 = vadd.f32 %v3215, %v3224
        %v3227 = vmul.f32 %v3225, 0.7978846
        %v3228 = vmul.f32 %v3226, 0.7978846
        %v3229 = vtanh.pop %v3227
        %v3230 = vtanh.pop %v3228
        %v3231 = vadd.f32 %v3229, 1.0
        %v3232 = vadd.f32 %v3230, 1.0
        %v3233 = vmul.f32 %v3217, %v3231
        %v3234 = vmul.f32 %v3218, %v3232
        %v3235 = vpack.c.bf16 %v3234, %v3233
        %s3236 = scalar_lea.vmem %s57, 64
        %v3237 = vld [vmem:[%s3236] sm:$0xf]
        %v3238 = vld [vmem:[%s3236 + $0x4] sm:$0xf]
        %v3239 = vld [vmem:[%s3236 + $0x8] sm:$0xf]
        %v3240 = vld [vmem:[%s3236 + $0xc] sm:$0xf]
        %v3241 = vld [vmem:[%s3236 + $0x10] sm:$0xf]
        %v3242 = vld [vmem:[%s3236 + $0x14] sm:$0xf]
        %v3243 = vld [vmem:[%s3236 + $0x18] sm:$0xf]
        %v3244 = vld [vmem:[%s3236 + $0x1c] sm:$0xf]
        %v3245 = vld [vmem:[%s3236 + $0x20] sm:$0xf]
        %v3246 = vld [vmem:[%s3236 + $0x24] sm:$0xf]
        %v3247 = vld [vmem:[%s3236 + $0x28] sm:$0xf]
        %v3248 = vld [vmem:[%s3236 + $0x2c] sm:$0xf]
        %v3249 = vld [vmem:[%s3236 + $0x30] sm:$0xf]
        %v3250 = vld [vmem:[%s3236 + $0x34] sm:$0xf]
        %v3251 = vld [vmem:[%s3236 + $0x38] sm:$0xf]
        %v3252 = vld [vmem:[%s3236 + $0x3c] sm:$0xf]
        %v3253 = vld [vmem:[%s59 + $0x1] sm:$0x1]
        %v3254 = vperm.slane %v3253, 0
        %v3271 = vunpack.c.l.b16 %v3237
        %v3272 = vunpack.c.l.b16 %v3238
        %v3273 = vunpack.c.l.b16 %v3239
        %v3274 = vunpack.c.l.b16 %v3240
        %v3275 = vunpack.c.l.b16 %v3241
        %v3276 = vunpack.c.l.b16 %v3242
        %v3277 = vunpack.c.l.b16 %v3243
        %v3278 = vunpack.c.l.b16 %v3244
        %v3279 = vunpack.c.l.b16 %v3245
        %v3280 = vunpack.c.l.b16 %v3246
        %v3281 = vunpack.c.l.b16 %v3247
        %v3282 = vunpack.c.l.b16 %v3248
        %v3283 = vunpack.c.l.b16 %v3249
        %v3284 = vunpack.c.l.b16 %v3250
        %v3285 = vunpack.c.l.b16 %v3251
        %v3286 = vunpack.c.l.b16 %v3252
        %v3287 = vpack.c.b16 %v3272, %v3271
        %v3288 = vpack.c.b16 %v3274, %v3273
        %v3289 = vpack.c.b16 %v3276, %v3275
        %v3290 = vpack.c.b16 %v3278, %v3277
        %v3291 = vpack.c.b16 %v3280, %v3279
        %v3292 = vpack.c.b16 %v3282, %v3281
        %v3293 = vpack.c.b16 %v3284, %v3283
        %v3294 = vpack.c.b16 %v3286, %v3285
        %3303 = vmatpush.bf16.msra.mxu0 %v3294
        %3304 = vmatpush.bf16.msra.mxu0 %v3293
        %3305 = vmatpush.bf16.msra.mxu0 %v3292
        %3306 = vmatpush.bf16.msra.mxu0 %v3291
        %3307 = vmatpush.bf16.msra.mxu0 %v3290
        %3308 = vmatpush.bf16.msra.mxu0 %v3289
        %3309 = vmatpush.bf16.msra.mxu0 %v3288
        %3310 = vmatpush.bf16.msra.mxu0 %v3287
        %3311 = vmatmul.bf16.gmra.mxu0 %v3235
        %v3312 = vpop.f32.mrf.mxu0
        %v3313 = vadd.f32 %v3254, %v3312
        %v3314 = vpop.f32.mrf.mxu0
        %v3315 = vadd.f32 %v3254, %v3314
        %3316 = vdwg.mxu0
        %v3317 = vadd.f32 %v3126, %v3313
        %v3318 = vadd.f32 %v3127, %v3315
        %v3319 = vld [vmem:[%s61] sm:$0x1]
        %v3320 = vld [vmem:[%s63] sm:$0x1]
        %v3321 = vsel %vm1153, %v3317, 0.0
        %3322 = vadd.xlane.f32.xlu0 %v3321
        %v3323 = vpop.xlane.xlu0 %3322
        %v3324 = vsel %vm1858, %v3318, 0.0
        %3325 = vadd.xlane.f32.xlu0 %v3324
        %v3326 = vpop.xlane.xlu0 %3325
        %v3327 = vmul.f32 %v3323, %v2006
        %v3328 = vmul.f32 %v3326, %v2006
        %v3329 = vsub.f32 %v3317, %v3327
        %v3330 = vsub.f32 %v3318, %v3328
        %v3331 = vmul.f32 %v3329, %v3329
        %v3332 = vmul.f32 %v3330, %v3330
        %v3333 = vsel %vm1153, %v3331, 0.0
        %3334 = vadd.xlane.f32.xlu0 %v3333
        %v3335 = vpop.xlane.xlu0 %3334
        %v3336 = vsel %vm1858, %v3332, 0.0
        %3337 = vadd.xlane.f32.xlu0 %v3336
        %v3338 = vpop.xlane.xlu0 %3337
        %v3339 = vmul.f32 %v3335, %v2006
        %v3340 = vmul.f32 %v3338, %v2006
        %v3341 = vadd.f32 %v3339, 1e-05
        %v3342 = vadd.f32 %v3340, 1e-05
        %v3343 = vrsqrt.pop %v3341
        %v3344 = vmul.f32 %v3343, %v3341
        %v3345 = vmul.f32 %v3344, %v3343
        %v3346 = vmul.f32 0.5, %v3345
        %v3347 = vsub.f32 1.5, %v3346
        %v3348 = vmul.f32 %v3343, %v3347
        %vm3349 = vweird.f32 %v3341
        %vm3350 = vweird.f32 %v3343
        %vm3351 = vmor %vm3349, %vm3350
        %v3352 = vsel %vm3351, %v3343, %v3348
        %v3353 = vrsqrt.pop %v3342
        %v3354 = vmul.f32 %v3353, %v3342
        %v3355 = vmul.f32 %v3354, %v3353
        %v3356 = vmul.f32 0.5, %v3355
        %v3357 = vsub.f32 1.5, %v3356
        %v3358 = vmul.f32 %v3353, %v3357
        %vm3359 = vweird.f32 %v3342
        %vm3360 = vweird.f32 %v3353
        %vm3361 = vmor %vm3359, %vm3360
        %v3362 = vsel %vm3361, %v3353, %v3358
        %v3363 = vmul.f32 %v3329, %v3352
        %v3364 = vmul.f32 %v3330, %v3362
        %v3366 = vperm.slane %v3319, 0
        %v3368 = vmul.f32 %v3363, %v3366
        %v3369 = vmul.f32 %v3364, %v3366
        %v3371 = vperm.slane %v3320, 0
        %v3373 = vadd.f32 %v3368, %v3371
        %v3374 = vadd.f32 %v3369, %v3371
        %3375 = vst.msk [vmem:[%s991] sm:$0x1] %vm1858, %v3373
        %v3376 = vlaneseq
        %v3377 = vshrl.u32 %v3376, 7
        %v3378 = vadd.s32 %v3377, 8
        %vm3379 = vcmp.eq.s32.totalorder %v3377, 0
        %vm3380 = vcmp.eq.s32.totalorder %v3378, 0
        %v3381 = vsel %vm3379, -inf, %v3373
        %v3382 = vsel %vm3380, -inf, %v3374
        %v3383 = vsel %vm1153, %v3381, -inf
        %v3384 = vsel %vm1858, %v3382, -inf
        %v3385 = vmax.f32 %v3383, %v3384
        %v3386 = vrot.slane %v3385, 4
        %v3387 = vmax.f32 %v3385, %v3386
        %v3388 = vrot.slane %v3387, 2
        %v3389 = vmax.f32 %v3387, %v3388
        %v3390 = vrot.slane %v3389, 1
        %v3391 = vmax.f32 %v3389, %v3390
        %3393 = vrot.lane.b32.xlu0 %v3391, 32
        %v3394 = vpop.permute.xlu0 %3393
        %vm3396 = vcmask 516352
        %3397 = vst.msk [vmem:[%s991] sm:$0x1] %vm3396, %v3394
        %s3398 = sand.u32 %s769, 1
        %s3399 = scalar_lea.sflag [#allocation7], %s3398
        %s3400 = sand.u32 %s769, 1
        %s3401 = scalar_lea.vmem [#allocation6], %s3400
        // Predicated region
        $region149: #{tpu_custom_call.1} parent=147 // pred_check
          %p3402 = pneg %p779
        $region150: #{tpu_custom_call.1} parent=147 // pred_check_branch
          %3404 = sbr.rel (%p3402) target = $region152
        $region151: #{tpu_custom_call.1} parent=147 // pred_region
          %3406 = vsyncadd %s3399, 0
          %s3407 = scalar_lea.hbm %s65, %s79
          %s3409 = sshll.u32 %s3401, 4
          %s3410 = int_to_ptr.vmem [resolvable:$true] %s3409
          %s3411 = sshll.u32 %s3407, 4
          %s3412 = int_to_ptr.hbm [resolvable:$true] %s3411
          %3414 = dma.vmem_to_hbm [thread:$0]  %s3410, 16, %s3412, %s3399
        $region152: #{tpu_custom_call.1} parent=147 // pred_fallthru
          _
      $region148: #{tpu_custom_call.1} parent=5 // pred_fallthru
        _
      %p3415 = scmp.le.s32.totalorder 2, %s74
      // Predicated region
      $region153: #{tpu_custom_call.1} parent=5 // pred_check
        %p3416 = pneg %p3415
      $region154: #{tpu_custom_call.1} parent=5 // pred_check_branch
        %3418 = sbr.rel (%p3416) target = $region156
      $region155: #{tpu_custom_call.1} parent=5 // pred_region
        %s3419 = ssub.s32 %s74, 2
        // Predicated region
        $region157: #{tpu_custom_call.1} parent=155 // pred_check
          %p3420 = pneg %p785
        $region158: #{tpu_custom_call.1} parent=155 // pred_check_branch
          %3422 = sbr.rel (%p3420) target = $region160
        $region159: #{tpu_custom_call.1} parent=155 // pred_region
          %s3423 = sand.u32 %s770, 1
          %s3424 = scalar_lea.sflag [#allocation7], %s3423
          %s3425 = sand.u32 %s770, 1
          %s3426 = scalar_lea.vmem [#allocation6], %s3425
          %3428 = dma.done %s3424, 16
        $region160: #{tpu_custom_call.1} parent=155 // pred_fallthru
          _
      $region156: #{tpu_custom_call.1} parent=5 // pred_fallthru
        _
    $region6: #{tpu_custom_call.1} parent=1 // loop_footer
      %s78 = sadd.s32 1, %s74
    $region7: #{tpu_custom_call.1} parent=1 // loop_footer_branch
      %73 = sbr.rel target = $region3
    $region8: #{tpu_custom_call.1} parent=1 // loop_exit
      _
    %3429 = vsyncpa [#allocation7], 1
    %s3430 = scalar_lea.sflag [#allocation7], 1
    %3431 = vsyncpa %s3430, 1

</llo_original>
